<compile_context>
chip_gen: v7x
topology: tpu7x:2x2x1
jax: 0.10.0
libtpu: 0.0.40
codegen_flags: <defaults>
</compile_context>

<pallas_src>
import functools

import jax
import jax.numpy as jnp
from jax.experimental import pallas as pl
from jax.experimental.pallas import tpu as pltpu


def _round_up(n, m):
    return ((n + m - 1) // m) * m


def _lstm_kernel(x_ref, h0_ref, c0_ref, wih_ref, whh_ref, b_ref,
                 wfc_ref, bfc_ref,
                 out_ref, hn_ref, cn_ref,
                 gx_sc, hall_sc, *, seq_len, batch, hp):
    # ---- Prologue: input projection for ALL timesteps of this batch block in
    # one MXU call.  bf16 operands, f32 accumulate; bias add keeps gates_x f32.
    gx_sc[...] = (
        jnp.dot(x_ref[...].astype(jnp.bfloat16), wih_ref[...],
                preferred_element_type=jnp.float32)
        + b_ref[...])

    whh = whh_ref[...]                                   # (Hp, 4*Hp) bf16, resident
    h0 = h0_ref[...].astype(jnp.float32)                 # (Bb, Hp)
    c0 = c0_ref[...].astype(jnp.float32)                 # (Bb, Hp)

    def _sigmoid(z):
        # Single EUP tanh per vreg (cheaper than exp + full-precision divide).
        return 0.5 * jnp.tanh(0.5 * z) + 0.5

    # ---- Serial recurrence: only the h-dependent (bf16) matmul is on the chain.
    def step(t, carry):
        h_prev, c_prev = carry
        row = pl.multiple_of(t * batch, batch)           # sublane-aligned start

        gates = (gx_sc[pl.ds(row, batch), :]
                 + jnp.dot(h_prev.astype(jnp.bfloat16), whh,
                           preferred_element_type=jnp.float32))

        # Gate blocks are 128-aligned (offsets 0, Hp, 2*Hp, 3*Hp) -> pure views.
        i_g = _sigmoid(gates[:, 0 * hp:1 * hp])
        f_g = _sigmoid(gates[:, 1 * hp:2 * hp])
        g_g = jnp.tanh(gates[:, 2 * hp:3 * hp])
        o_g = _sigmoid(gates[:, 3 * hp:4 * hp])

        c_new = f_g * c_prev + i_g * g_g
        h_new = o_g * jnp.tanh(c_new)

        hall_sc[pl.ds(row, batch), :] = h_new.astype(hall_sc.dtype)  # bf16 stash
        return h_new, c_new

    h_fin, c_fin = jax.lax.fori_loop(0, seq_len, step, (h0, c0),
                                     unroll=min(seq_len, 8))

    # ---- Epilogue: FC head over all timesteps, single lane-dense store. ----
    out_ref[...] = (jnp.dot(hall_sc[...], wfc_ref[...],
                            preferred_element_type=jnp.float32)
                    + bfc_ref[...]).astype(out_ref.dtype)

    # Final states written exactly once.
    hn_ref[...] = h_fin.astype(hn_ref.dtype)
    cn_ref[...] = c_fin.astype(cn_ref.dtype)


def _prep_params(w_ih, w_hh, b_ih, b_hh, w_fc, b_fc, *, hp, op):
    """Pad + re-layout PyTorch-style params for the kernel.

    Gate weights are separated so gate k lives in columns [k*hp, k*hp + H);
    all padding is zeros, which keeps the padded h/c lanes exactly zero
    through the recurrence.  Matmul weights are shipped in bf16 (MXU inputs);
    biases stay f32 (VPU adds).
    """
    four_h, I = w_ih.shape
    H = four_h // 4
    O = w_fc.shape[0]

    # (4H, I) -> (4, H, I) -> pad H -> (4, Hp, I) -> (I, 4, Hp) -> (I, 4*Hp)
    wih = jnp.pad(w_ih.reshape(4, H, I), ((0, 0), (0, hp - H), (0, 0)))
    wih_t = jnp.transpose(wih, (2, 0, 1)).reshape(I, 4 * hp).astype(jnp.bfloat16)

    whh = jnp.pad(w_hh.reshape(4, H, H), ((0, 0), (0, hp - H), (0, hp - H)))
    whh_t = jnp.transpose(whh, (2, 0, 1)).reshape(hp, 4 * hp).astype(jnp.bfloat16)

    bias = jnp.pad((b_ih + b_hh).reshape(4, H), ((0, 0), (0, hp - H)))
    bias = bias.reshape(1, 4 * hp)                                   # f32

    wfc_t = jnp.pad(w_fc.T, ((0, hp - H), (0, op - O))).astype(jnp.bfloat16)
    bfc = jnp.pad(b_fc, (0, op - O)).reshape(1, op)                  # f32
    return wih_t, whh_t, bias, wfc_t, bfc


def _auto_batch_blocks(batch):
    """2 batch blocks on v7x (2 TensorCores/chip); 1 elsewhere (v5e/v6e = 1 TC,
    where splitting would only serialize the time recurrence)."""
    g = 1
    try:
        kind = jax.devices()[0].device_kind.lower()
        if "v7" in kind or "tpu7" in kind:
            g = 2
    except Exception:
        g = 1
    if batch % g != 0 or (batch // g) % 16 != 0:   # keep bf16 sublane alignment
        g = 1
    return g


def simple_lstm_forward(x, h0, c0, params, *, num_batch_blocks=None):
    """x: (B, T, I), h0/c0: (1, B, H).  Returns (out (B,T,O), (hn, cn))."""
    w_ih, w_hh, b_ih, b_hh, w_fc, b_fc = params
    B, T, I = x.shape
    H = w_hh.shape[1]
    O = w_fc.shape[0]

    Hp = _round_up(H, 128)
    Op = _round_up(O, 128)
    G = num_batch_blocks if num_batch_blocks is not None else _auto_batch_blocks(B)
    Bb = B // G

    wih_t, whh_t, bias, wfc_t, bfc = _prep_params(
        w_ih, w_hh, b_ih, b_hh, w_fc, b_fc, hp=Hp, op=Op)

    # Batch-block-major, time-major layout: rows ordered [block g][time t][row j].
    # x's feature dim is NOT lane-padded: last block dim == full array dim is a
    # legal BlockSpec and Mosaic pads K in-vreg for the matmul.
    x_bm = x.reshape(G, Bb, T, I).transpose(0, 2, 1, 3).reshape(G * T * Bb, I)
    h0_p = jnp.pad(h0[0], ((0, 0), (0, Hp - H)))
    c0_p = jnp.pad(c0[0], ((0, 0), (0, Hp - H)))

    kernel = functools.partial(_lstm_kernel, seq_len=T, batch=Bb, hp=Hp)

    out_p, hn_p, cn_p = pl.pallas_call(
        kernel,
        out_shape=(
            jax.ShapeDtypeStruct((G * T * Bb, Op), x.dtype),
            jax.ShapeDtypeStruct((B, Hp), x.dtype),
            jax.ShapeDtypeStruct((B, Hp), x.dtype),
        ),
        grid_spec=pltpu.PrefetchScalarGridSpec(
            num_scalar_prefetch=0,
            grid=(G,),                                   # batch blocks (2 on v7x)
            in_specs=[
                pl.BlockSpec((T * Bb, I), lambda g: (g, 0)),      # x, block/time-major
                pl.BlockSpec((Bb, Hp), lambda g: (g, 0)),         # h0
                pl.BlockSpec((Bb, Hp), lambda g: (g, 0)),         # c0
                pl.BlockSpec((I, 4 * Hp), lambda g: (0, 0)),      # W_ih^T (bf16)
                pl.BlockSpec((Hp, 4 * Hp), lambda g: (0, 0)),     # W_hh^T (bf16)
                pl.BlockSpec((1, 4 * Hp), lambda g: (0, 0)),      # b_ih + b_hh (f32)
                pl.BlockSpec((Hp, Op), lambda g: (0, 0)),         # W_fc^T (bf16)
                pl.BlockSpec((1, Op), lambda g: (0, 0)),          # b_fc (f32)
            ],
            out_specs=[
                pl.BlockSpec((T * Bb, Op), lambda g: (g, 0)),     # out, block/time-major
                pl.BlockSpec((Bb, Hp), lambda g: (g, 0)),         # hn
                pl.BlockSpec((Bb, Hp), lambda g: (g, 0)),         # cn
            ],
            scratch_shapes=[
                pltpu.VMEM((T * Bb, 4 * Hp), jnp.float32),        # gates_x = x@Wih + b
                pltpu.VMEM((T * Bb, Hp), jnp.bfloat16),           # all h_t (bf16)
            ],
        ),
        compiler_params=pltpu.CompilerParams(
            dimension_semantics=("parallel",)),
    )(x_bm, h0_p, c0_p, wih_t, whh_t, bias, wfc_t, bfc)

    out = (out_p[:, :O].reshape(G, T, Bb, O).transpose(0, 2, 1, 3)
           .reshape(B, T, O))
    hn = hn_p[:, :H][None]
    cn = cn_p[:, :H][None]
    return out, (hn, cn)


def _reference_forward(x, h0, c0, params):
    """Pure-JAX f32 reference with PyTorch LSTM semantics (sanity check)."""
    w_ih, w_hh, b_ih, b_hh, w_fc, b_fc = params
    H = w_hh.shape[1]
    bias = b_ih + b_hh

    def step(carry, x_t):
        h, c = carry
        gates = x_t @ w_ih.T + h @ w_hh.T + bias
        i = jax.nn.sigmoid(gates[:, 0 * H:1 * H])
        f = jax.nn.sigmoid(gates[:, 1 * H:2 * H])
        g = jnp.tanh(gates[:, 2 * H:3 * H])
        o = jax.nn.sigmoid(gates[:, 3 * H:4 * H])
        c = f * c + i * g
        h = o * jnp.tanh(c)
        return (h, c), h @ w_fc.T + b_fc

    (hn, cn), out_tm = jax.lax.scan(step, (h0[0], c0[0]),
                                    jnp.transpose(x, (1, 0, 2)))
    return jnp.transpose(out_tm, (1, 0, 2)), (hn[None], cn[None])


if __name__ == "__main__":
    batch_size = 32
    hidden_size = 30
    input_size = 27
    output_size = 27
    seq_len = 8

    key = jax.random.PRNGKey(0)
    kx, k1, k2, k3, k4, k5, k6 = jax.random.split(key, 7)

    # Deterministic parameter init (matches nn.LSTM / nn.Linear shapes).
    scale = 1.0 / jnp.sqrt(hidden_size)
    w_ih = jax.random.uniform(k1, (4 * hidden_size, input_size), jnp.float32, -scale, scale)
    w_hh = jax.random.uniform(k2, (4 * hidden_size, hidden_size), jnp.float32, -scale, scale)
    b_ih = jax.random.uniform(k3, (4 * hidden_size,), jnp.float32, -scale, scale)
    b_hh = jax.random.uniform(k4, (4 * hidden_size,), jnp.float32, -scale, scale)
    w_fc = jax.random.uniform(k5, (output_size, hidden_size), jnp.float32, -scale, scale)
    b_fc = jax.random.uniform(k6, (output_size,), jnp.float32, -scale, scale)

    params = (w_ih, w_hh, b_ih, b_hh, w_fc, b_fc)

    x = jax.random.normal(kx, (batch_size, seq_len, input_size), jnp.float32)
    h0 = jnp.zeros((1, batch_size, hidden_size), jnp.float32)
    c0 = jnp.zeros((1, batch_size, hidden_size), jnp.float32)

    fwd = jax.jit(simple_lstm_forward)
    out, (hn, cn) = fwd(x, h0, c0, params)
    jax.block_until_ready((out, hn, cn))

    ref_out, (ref_hn, ref_cn) = _reference_forward(x, h0, c0, params)
    assert out.shape == (batch_size, seq_len, output_size)
    assert hn.shape == (1, batch_size, hidden_size)
    assert cn.shape == (1, batch_size, hidden_size)
    # bf16 MXU operands (f32 accumulate) vs. pure-f32 reference -> looser tolerance.
    assert jnp.allclose(out, ref_out, atol=3e-2, rtol=3e-2)
    assert jnp.allclose(hn, ref_hn, atol=3e-2, rtol=3e-2)
    assert jnp.allclose(cn, ref_cn, atol=3e-2, rtol=3e-2)

    print("KERNEL_OK")
</pallas_src>

<mosaic_0001>
module attributes {stable_mosaic.version = 11 : i64} {
  func.func @_lstm_kernel(%arg0: i32, %arg1: memref<256x27xf32, #tpu.memory_space<vmem>>, %arg2: memref<32x128xf32, #tpu.memory_space<vmem>>, %arg3: memref<32x128xf32, #tpu.memory_space<vmem>>, %arg4: memref<27x512xbf16, #tpu.memory_space<vmem>>, %arg5: memref<128x512xbf16, #tpu.memory_space<vmem>>, %arg6: memref<1x512xf32, #tpu.memory_space<vmem>>, %arg7: memref<128x128xbf16, #tpu.memory_space<vmem>>, %arg8: memref<1x128xf32, #tpu.memory_space<vmem>>, %arg9: memref<256x128xf32, #tpu.memory_space<vmem>>, %arg10: memref<32x128xf32, #tpu.memory_space<vmem>>, %arg11: memref<32x128xf32, #tpu.memory_space<vmem>>, %arg12: memref<256x512xf32, #tpu.memory_space<vmem>>, %arg13: memref<256x128xbf16, #tpu.memory_space<vmem>>) attributes {dimension_semantics = [#tpu.dimension_semantics<parallel>], iteration_bounds = array<i64: 1>, scalar_prefetch = 0 : i64, scratch_operands = 2 : i64, tpu.core_type = #tpu.core_type<tc>, window_params = [{transform_indices = @transform_0, window_bounds = array<i64: 256, 27>}, {transform_indices = @transform_1, window_bounds = array<i64: 32, 128>}, {transform_indices = @transform_2, window_bounds = array<i64: 32, 128>}, {pipeline_mode = #tpu.pipeline_mode<synchronous>, transform_indices = @transform_3, window_bounds = array<i64: 27, 512>}, {pipeline_mode = #tpu.pipeline_mode<synchronous>, transform_indices = @transform_4, window_bounds = array<i64: 128, 512>}, {pipeline_mode = #tpu.pipeline_mode<synchronous>, transform_indices = @transform_5, window_bounds = array<i64: 1, 512>}, {pipeline_mode = #tpu.pipeline_mode<synchronous>, transform_indices = @transform_6, window_bounds = array<i64: 128, 128>}, {pipeline_mode = #tpu.pipeline_mode<synchronous>, transform_indices = @transform_7, window_bounds = array<i64: 1, 128>}, {transform_indices = @transform_8, window_bounds = array<i64: 256, 128>}, {transform_indices = @transform_9, window_bounds = array<i64: 32, 128>}, {transform_indices = @transform_10, window_bounds = array<i64: 32, 128>}]} {
    %c0 = arith.constant 0 : index
    %c0_0 = arith.constant 0 : index
    %0 = vector.load %arg1[%c0, %c0_0] : memref<256x27xf32, #tpu.memory_space<vmem>>, vector<256x27xf32>
    %1 = arith.truncf %0 : vector<256x27xf32> to vector<256x27xbf16>
    %c0_1 = arith.constant 0 : index
    %c0_2 = arith.constant 0 : index
    %2 = vector.load %arg4[%c0_1, %c0_2] : memref<27x512xbf16, #tpu.memory_space<vmem>>, vector<27x512xbf16>
    %cst = arith.constant dense<0.000000e+00> : vector<256x512xf32>
    %3 = tpu.matmul %1, %2, %cst {dimension_numbers = #tpu.dot_dimension_numbers<[1], [0], [0], [1], [0, 0, 1, 1], [], []>} : vector<256x27xbf16>, vector<27x512xbf16>, vector<256x512xf32> -> vector<256x512xf32>
    %c0_3 = arith.constant 0 : index
    %c0_4 = arith.constant 0 : index
    %4 = vector.load %arg6[%c0_3, %c0_4] : memref<1x512xf32, #tpu.memory_space<vmem>>, vector<1x512xf32>
    %5 = vector.broadcast %4 : vector<1x512xf32> to vector<256x512xf32>
    %6 = arith.addf %3, %5 : vector<256x512xf32>
    %c0_5 = arith.constant 0 : index
    %c0_6 = arith.constant 0 : index
    %7 = vector.load %arg12[%c0_5, %c0_6] : memref<256x512xf32, #tpu.memory_space<vmem>>, vector<256x512xf32>
    tpu.vector_store %arg12[%c0_5, %c0_6], %6 {strides = array<i32>} : memref<256x512xf32, #tpu.memory_space<vmem>>, vector<256x512xf32>,
    %c0_7 = arith.constant 0 : index
    %c0_8 = arith.constant 0 : index
    %8 = vector.load %arg5[%c0_7, %c0_8] : memref<128x512xbf16, #tpu.memory_space<vmem>>, vector<128x512xbf16>
    %c0_9 = arith.constant 0 : index
    %c0_10 = arith.constant 0 : index
    %9 = vector.load %arg2[%c0_9, %c0_10] : memref<32x128xf32, #tpu.memory_space<vmem>>, vector<32x128xf32>
    %c0_11 = arith.constant 0 : index
    %c0_12 = arith.constant 0 : index
    %10 = vector.load %arg3[%c0_11, %c0_12] : memref<32x128xf32, #tpu.memory_space<vmem>>, vector<32x128xf32>
    %c0_i32 = arith.constant 0 : i32
    %c32_i32 = arith.constant 32 : i32
    %11 = arith.muli %c0_i32, %c32_i32 : i32
    %12 = tpu.assume_multiple %11, 32 : i32
    %13 = arith.index_cast %12 : i32 to index
    %c0_13 = arith.constant 0 : index
    %14 = vector.load %arg12[%13, %c0_13] : memref<256x512xf32, #tpu.memory_space<vmem>>, vector<32x512xf32>
    %15 = arith.truncf %9 : vector<32x128xf32> to vector<32x128xbf16>
    %cst_14 = arith.constant dense<0.000000e+00> : vector<32x512xf32>
    %16 = tpu.matmul %15, %8, %cst_14 {dimension_numbers = #tpu.dot_dimension_numbers<[1], [0], [0], [1], [0, 0, 1, 1], [], []>} : vector<32x128xbf16>, vector<128x512xbf16>, vector<32x512xf32> -> vector<32x512xf32>
    %17 = arith.addf %14, %16 : vector<32x512xf32>
    %18 = vector.extract_strided_slice %17 {offsets = [0, 0], sizes = [32, 128], strides = [1, 1]} : vector<32x512xf32> to vector<32x128xf32>
    %cst_15 = arith.constant 5.000000e-01 : f32
    %19 = vector.broadcast %cst_15 : f32 to vector<32x128xf32>
    %20 = arith.mulf %19, %18 : vector<32x128xf32>
    %21 = math.tanh %20 : vector<32x128xf32>
    %cst_16 = arith.constant 5.000000e-01 : f32
    %22 = vector.broadcast %cst_16 : f32 to vector<32x128xf32>
    %23 = arith.mulf %22, %21 : vector<32x128xf32>
    %cst_17 = arith.constant 5.000000e-01 : f32
    %24 = vector.broadcast %cst_17 : f32 to vector<32x128xf32>
    %25 = arith.addf %23, %24 : vector<32x128xf32>
    %26 = vector.extract_strided_slice %17 {offsets = [0, 128], sizes = [32, 128], strides = [1, 1]} : vector<32x512xf32> to vector<32x128xf32>
    %cst_18 = arith.constant 5.000000e-01 : f32
    %27 = vector.broadcast %cst_18 : f32 to vector<32x128xf32>
    %28 = arith.mulf %27, %26 : vector<32x128xf32>
    %29 = math.tanh %28 : vector<32x128xf32>
    %cst_19 = arith.constant 5.000000e-01 : f32
    %30 = vector.broadcast %cst_19 : f32 to vector<32x128xf32>
    %31 = arith.mulf %30, %29 : vector<32x128xf32>
    %cst_20 = arith.constant 5.000000e-01 : f32
    %32 = vector.broadcast %cst_20 : f32 to vector<32x128xf32>
    %33 = arith.addf %31, %32 : vector<32x128xf32>
    %34 = vector.extract_strided_slice %17 {offsets = [0, 256], sizes = [32, 128], strides = [1, 1]} : vector<32x512xf32> to vector<32x128xf32>
    %35 = math.tanh %34 : vector<32x128xf32>
    %36 = vector.extract_strided_slice %17 {offsets = [0, 384], sizes = [32, 128], strides = [1, 1]} : vector<32x512xf32> to vector<32x128xf32>
    %cst_21 = arith.constant 5.000000e-01 : f32
    %37 = vector.broadcast %cst_21 : f32 to vector<32x128xf32>
    %38 = arith.mulf %37, %36 : vector<32x128xf32>
    %39 = math.tanh %38 : vector<32x128xf32>
    %cst_22 = arith.constant 5.000000e-01 : f32
    %40 = vector.broadcast %cst_22 : f32 to vector<32x128xf32>
    %41 = arith.mulf %40, %39 : vector<32x128xf32>
    %cst_23 = arith.constant 5.000000e-01 : f32
    %42 = vector.broadcast %cst_23 : f32 to vector<32x128xf32>
    %43 = arith.addf %41, %42 : vector<32x128xf32>
    %44 = arith.mulf %33, %10 : vector<32x128xf32>
    %45 = arith.mulf %25, %35 : vector<32x128xf32>
    %46 = arith.addf %44, %45 : vector<32x128xf32>
    %47 = math.tanh %46 : vector<32x128xf32>
    %48 = arith.mulf %43, %47 : vector<32x128xf32>
    %49 = arith.truncf %48 : vector<32x128xf32> to vector<32x128xbf16>
    %50 = arith.index_cast %12 : i32 to index
    %c0_24 = arith.constant 0 : index
    %51 = vector.load %arg13[%50, %c0_24] : memref<256x128xbf16, #tpu.memory_space<vmem>>, vector<32x128xbf16>
    tpu.vector_store %arg13[%50, %c0_24], %49 {strides = array<i32>} : memref<256x128xbf16, #tpu.memory_space<vmem>>, vector<32x128xbf16>,
    %c1_i32 = arith.constant 1 : i32
    %c32_i32_25 = arith.constant 32 : i32
    %52 = arith.muli %c1_i32, %c32_i32_25 : i32
    %53 = tpu.assume_multiple %52, 32 : i32
    %54 = arith.index_cast %53 : i32 to index
    %c0_26 = arith.constant 0 : index
    %55 = vector.load %arg12[%54, %c0_26] : memref<256x512xf32, #tpu.memory_space<vmem>>, vector<32x512xf32>
    %56 = arith.truncf %48 : vector<32x128xf32> to vector<32x128xbf16>
    %cst_27 = arith.constant dense<0.000000e+00> : vector<32x512xf32>
    %57 = tpu.matmul %56, %8, %cst_27 {dimension_numbers = #tpu.dot_dimension_numbers<[1], [0], [0], [1], [0, 0, 1, 1], [], []>} : vector<32x128xbf16>, vector<128x512xbf16>, vector<32x512xf32> -> vector<32x512xf32>
    %58 = arith.addf %55, %57 : vector<32x512xf32>
    %59 = vector.extract_strided_slice %58 {offsets = [0, 0], sizes = [32, 128], strides = [1, 1]} : vector<32x512xf32> to vector<32x128xf32>
    %cst_28 = arith.constant 5.000000e-01 : f32
    %60 = vector.broadcast %cst_28 : f32 to vector<32x128xf32>
    %61 = arith.mulf %60, %59 : vector<32x128xf32>
    %62 = math.tanh %61 : vector<32x128xf32>
    %cst_29 = arith.constant 5.000000e-01 : f32
    %63 = vector.broadcast %cst_29 : f32 to vector<32x128xf32>
    %64 = arith.mulf %63, %62 : vector<32x128xf32>
    %cst_30 = arith.constant 5.000000e-01 : f32
    %65 = vector.broadcast %cst_30 : f32 to vector<32x128xf32>
    %66 = arith.addf %64, %65 : vector<32x128xf32>
    %67 = vector.extract_strided_slice %58 {offsets = [0, 128], sizes = [32, 128], strides = [1, 1]} : vector<32x512xf32> to vector<32x128xf32>
    %cst_31 = arith.constant 5.000000e-01 : f32
    %68 = vector.broadcast %cst_31 : f32 to vector<32x128xf32>
    %69 = arith.mulf %68, %67 : vector<32x128xf32>
    %70 = math.tanh %69 : vector<32x128xf32>
    %cst_32 = arith.constant 5.000000e-01 : f32
    %71 = vector.broadcast %cst_32 : f32 to vector<32x128xf32>
    %72 = arith.mulf %71, %70 : vector<32x128xf32>
    %cst_33 = arith.constant 5.000000e-01 : f32
    %73 = vector.broadcast %cst_33 : f32 to vector<32x128xf32>
    %74 = arith.addf %72, %73 : vector<32x128xf32>
    %75 = vector.extract_strided_slice %58 {offsets = [0, 256], sizes = [32, 128], strides = [1, 1]} : vector<32x512xf32> to vector<32x128xf32>
    %76 = math.tanh %75 : vector<32x128xf32>
    %77 = vector.extract_strided_slice %58 {offsets = [0, 384], sizes = [32, 128], strides = [1, 1]} : vector<32x512xf32> to vector<32x128xf32>
    %cst_34 = arith.constant 5.000000e-01 : f32
    %78 = vector.broadcast %cst_34 : f32 to vector<32x128xf32>
    %79 = arith.mulf %78, %77 : vector<32x128xf32>
    %80 = math.tanh %79 : vector<32x128xf32>
    %cst_35 = arith.constant 5.000000e-01 : f32
    %81 = vector.broadcast %cst_35 : f32 to vector<32x128xf32>
    %82 = arith.mulf %81, %80 : vector<32x128xf32>
    %cst_36 = arith.constant 5.000000e-01 : f32
    %83 = vector.broadcast %cst_36 : f32 to vector<32x128xf32>
    %84 = arith.addf %82, %83 : vector<32x128xf32>
    %85 = arith.mulf %74, %46 : vector<32x128xf32>
    %86 = arith.mulf %66, %76 : vector<32x128xf32>
    %87 = arith.addf %85, %86 : vector<32x128xf32>
    %88 = math.tanh %87 : vector<32x128xf32>
    %89 = arith.mulf %84, %88 : vector<32x128xf32>
    %90 = arith.truncf %89 : vector<32x128xf32> to vector<32x128xbf16>
    %91 = arith.index_cast %53 : i32 to index
    %c0_37 = arith.constant 0 : index
    %92 = vector.load %arg13[%91, %c0_37] : memref<256x128xbf16, #tpu.memory_space<vmem>>, vector<32x128xbf16>
    tpu.vector_store %arg13[%91, %c0_37], %90 {strides = array<i32>} : memref<256x128xbf16, #tpu.memory_space<vmem>>, vector<32x128xbf16>,
    %c2_i32 = arith.constant 2 : i32
    %c32_i32_38 = arith.constant 32 : i32
    %93 = arith.muli %c2_i32, %c32_i32_38 : i32
    %94 = tpu.assume_multiple %93, 32 : i32
    %95 = arith.index_cast %94 : i32 to index
    %c0_39 = arith.constant 0 : index
    %96 = vector.load %arg12[%95, %c0_39] : memref<256x512xf32, #tpu.memory_space<vmem>>, vector<32x512xf32>
    %97 = arith.truncf %89 : vector<32x128xf32> to vector<32x128xbf16>
    %cst_40 = arith.constant dense<0.000000e+00> : vector<32x512xf32>
    %98 = tpu.matmul %97, %8, %cst_40 {dimension_numbers = #tpu.dot_dimension_numbers<[1], [0], [0], [1], [0, 0, 1, 1], [], []>} : vector<32x128xbf16>, vector<128x512xbf16>, vector<32x512xf32> -> vector<32x512xf32>
    %99 = arith.addf %96, %98 : vector<32x512xf32>
    %100 = vector.extract_strided_slice %99 {offsets = [0, 0], sizes = [32, 128], strides = [1, 1]} : vector<32x512xf32> to vector<32x128xf32>
    %cst_41 = arith.constant 5.000000e-01 : f32
    %101 = vector.broadcast %cst_41 : f32 to vector<32x128xf32>
    %102 = arith.mulf %101, %100 : vector<32x128xf32>
    %103 = math.tanh %102 : vector<32x128xf32>
    %cst_42 = arith.constant 5.000000e-01 : f32
    %104 = vector.broadcast %cst_42 : f32 to vector<32x128xf32>
    %105 = arith.mulf %104, %103 : vector<32x128xf32>
    %cst_43 = arith.constant 5.000000e-01 : f32
    %106 = vector.broadcast %cst_43 : f32 to vector<32x128xf32>
    %107 = arith.addf %105, %106 : vector<32x128xf32>
    %108 = vector.extract_strided_slice %99 {offsets = [0, 128], sizes = [32, 128], strides = [1, 1]} : vector<32x512xf32> to vector<32x128xf32>
    %cst_44 = arith.constant 5.000000e-01 : f32
    %109 = vector.broadcast %cst_44 : f32 to vector<32x128xf32>
    %110 = arith.mulf %109, %108 : vector<32x128xf32>
    %111 = math.tanh %110 : vector<32x128xf32>
    %cst_45 = arith.constant 5.000000e-01 : f32
    %112 = vector.broadcast %cst_45 : f32 to vector<32x128xf32>
    %113 = arith.mulf %112, %111 : vector<32x128xf32>
    %cst_46 = arith.constant 5.000000e-01 : f32
    %114 = vector.broadcast %cst_46 : f32 to vector<32x128xf32>
    %115 = arith.addf %113, %114 : vector<32x128xf32>
    %116 = vector.extract_strided_slice %99 {offsets = [0, 256], sizes = [32, 128], strides = [1, 1]} : vector<32x512xf32> to vector<32x128xf32>
    %117 = math.tanh %116 : vector<32x128xf32>
    %118 = vector.extract_strided_slice %99 {offsets = [0, 384], sizes = [32, 128], strides = [1, 1]} : vector<32x512xf32> to vector<32x128xf32>
    %cst_47 = arith.constant 5.000000e-01 : f32
    %119 = vector.broadcast %cst_47 : f32 to vector<32x128xf32>
    %120 = arith.mulf %119, %118 : vector<32x128xf32>
    %121 = math.tanh %120 : vector<32x128xf32>
    %cst_48 = arith.constant 5.000000e-01 : f32
    %122 = vector.broadcast %cst_48 : f32 to vector<32x128xf32>
    %123 = arith.mulf %122, %121 : vector<32x128xf32>
    %cst_49 = arith.constant 5.000000e-01 : f32
    %124 = vector.broadcast %cst_49 : f32 to vector<32x128xf32>
    %125 = arith.addf %123, %124 : vector<32x128xf32>
    %126 = arith.mulf %115, %87 : vector<32x128xf32>
    %127 = arith.mulf %107, %117 : vector<32x128xf32>
    %128 = arith.addf %126, %127 : vector<32x128xf32>
    %129 = math.tanh %128 : vector<32x128xf32>
    %130 = arith.mulf %125, %129 : vector<32x128xf32>
    %131 = arith.truncf %130 : vector<32x128xf32> to vector<32x128xbf16>
    %132 = arith.index_cast %94 : i32 to index
    %c0_50 = arith.constant 0 : index
    %133 = vector.load %arg13[%132, %c0_50] : memref<256x128xbf16, #tpu.memory_space<vmem>>, vector<32x128xbf16>
    tpu.vector_store %arg13[%132, %c0_50], %131 {strides = array<i32>} : memref<256x128xbf16, #tpu.memory_space<vmem>>, vector<32x128xbf16>,
    %c3_i32 = arith.constant 3 : i32
    %c32_i32_51 = arith.constant 32 : i32
    %134 = arith.muli %c3_i32, %c32_i32_51 : i32
    %135 = tpu.assume_multiple %134, 32 : i32
    %136 = arith.index_cast %135 : i32 to index
    %c0_52 = arith.constant 0 : index
    %137 = vector.load %arg12[%136, %c0_52] : memref<256x512xf32, #tpu.memory_space<vmem>>, vector<32x512xf32>
    %138 = arith.truncf %130 : vector<32x128xf32> to vector<32x128xbf16>
    %cst_53 = arith.constant dense<0.000000e+00> : vector<32x512xf32>
    %139 = tpu.matmul %138, %8, %cst_53 {dimension_numbers = #tpu.dot_dimension_numbers<[1], [0], [0], [1], [0, 0, 1, 1], [], []>} : vector<32x128xbf16>, vector<128x512xbf16>, vector<32x512xf32> -> vector<32x512xf32>
    %140 = arith.addf %137, %139 : vector<32x512xf32>
    %141 = vector.extract_strided_slice %140 {offsets = [0, 0], sizes = [32, 128], strides = [1, 1]} : vector<32x512xf32> to vector<32x128xf32>
    %cst_54 = arith.constant 5.000000e-01 : f32
    %142 = vector.broadcast %cst_54 : f32 to vector<32x128xf32>
    %143 = arith.mulf %142, %141 : vector<32x128xf32>
    %144 = math.tanh %143 : vector<32x128xf32>
    %cst_55 = arith.constant 5.000000e-01 : f32
    %145 = vector.broadcast %cst_55 : f32 to vector<32x128xf32>
    %146 = arith.mulf %145, %144 : vector<32x128xf32>
    %cst_56 = arith.constant 5.000000e-01 : f32
    %147 = vector.broadcast %cst_56 : f32 to vector<32x128xf32>
    %148 = arith.addf %146, %147 : vector<32x128xf32>
    %149 = vector.extract_strided_slice %140 {offsets = [0, 128], sizes = [32, 128], strides = [1, 1]} : vector<32x512xf32> to vector<32x128xf32>
    %cst_57 = arith.constant 5.000000e-01 : f32
    %150 = vector.broadcast %cst_57 : f32 to vector<32x128xf32>
    %151 = arith.mulf %150, %149 : vector<32x128xf32>
    %152 = math.tanh %151 : vector<32x128xf32>
    %cst_58 = arith.constant 5.000000e-01 : f32
    %153 = vector.broadcast %cst_58 : f32 to vector<32x128xf32>
    %154 = arith.mulf %153, %152 : vector<32x128xf32>
    %cst_59 = arith.constant 5.000000e-01 : f32
    %155 = vector.broadcast %cst_59 : f32 to vector<32x128xf32>
    %156 = arith.addf %154, %155 : vector<32x128xf32>
    %157 = vector.extract_strided_slice %140 {offsets = [0, 256], sizes = [32, 128], strides = [1, 1]} : vector<32x512xf32> to vector<32x128xf32>
    %158 = math.tanh %157 : vector<32x128xf32>
    %159 = vector.extract_strided_slice %140 {offsets = [0, 384], sizes = [32, 128], strides = [1, 1]} : vector<32x512xf32> to vector<32x128xf32>
    %cst_60 = arith.constant 5.000000e-01 : f32
    %160 = vector.broadcast %cst_60 : f32 to vector<32x128xf32>
    %161 = arith.mulf %160, %159 : vector<32x128xf32>
    %162 = math.tanh %161 : vector<32x128xf32>
    %cst_61 = arith.constant 5.000000e-01 : f32
    %163 = vector.broadcast %cst_61 : f32 to vector<32x128xf32>
    %164 = arith.mulf %163, %162 : vector<32x128xf32>
    %cst_62 = arith.constant 5.000000e-01 : f32
    %165 = vector.broadcast %cst_62 : f32 to vector<32x128xf32>
    %166 = arith.addf %164, %165 : vector<32x128xf32>
    %167 = arith.mulf %156, %128 : vector<32x128xf32>
    %168 = arith.mulf %148, %158 : vector<32x128xf32>
    %169 = arith.addf %167, %168 : vector<32x128xf32>
    %170 = math.tanh %169 : vector<32x128xf32>
    %171 = arith.mulf %166, %170 : vector<32x128xf32>
    %172 = arith.truncf %171 : vector<32x128xf32> to vector<32x128xbf16>
    %173 = arith.index_cast %135 : i32 to index
    %c0_63 = arith.constant 0 : index
    %174 = vector.load %arg13[%173, %c0_63] : memref<256x128xbf16, #tpu.memory_space<vmem>>, vector<32x128xbf16>
    tpu.vector_store %arg13[%173, %c0_63], %172 {strides = array<i32>} : memref<256x128xbf16, #tpu.memory_space<vmem>>, vector<32x128xbf16>,
    %c4_i32 = arith.constant 4 : i32
    %c32_i32_64 = arith.constant 32 : i32
    %175 = arith.muli %c4_i32, %c32_i32_64 : i32
    %176 = tpu.assume_multiple %175, 32 : i32
    %177 = arith.index_cast %176 : i32 to index
    %c0_65 = arith.constant 0 : index
    %178 = vector.load %arg12[%177, %c0_65] : memref<256x512xf32, #tpu.memory_space<vmem>>, vector<32x512xf32>
    %179 = arith.truncf %171 : vector<32x128xf32> to vector<32x128xbf16>
    %cst_66 = arith.constant dense<0.000000e+00> : vector<32x512xf32>
    %180 = tpu.matmul %179, %8, %cst_66 {dimension_numbers = #tpu.dot_dimension_numbers<[1], [0], [0], [1], [0, 0, 1, 1], [], []>} : vector<32x128xbf16>, vector<128x512xbf16>, vector<32x512xf32> -> vector<32x512xf32>
    %181 = arith.addf %178, %180 : vector<32x512xf32>
    %182 = vector.extract_strided_slice %181 {offsets = [0, 0], sizes = [32, 128], strides = [1, 1]} : vector<32x512xf32> to vector<32x128xf32>
    %cst_67 = arith.constant 5.000000e-01 : f32
    %183 = vector.broadcast %cst_67 : f32 to vector<32x128xf32>
    %184 = arith.mulf %183, %182 : vector<32x128xf32>
    %185 = math.tanh %184 : vector<32x128xf32>
    %cst_68 = arith.constant 5.000000e-01 : f32
    %186 = vector.broadcast %cst_68 : f32 to vector<32x128xf32>
    %187 = arith.mulf %186, %185 : vector<32x128xf32>
    %cst_69 = arith.constant 5.000000e-01 : f32
    %188 = vector.broadcast %cst_69 : f32 to vector<32x128xf32>
    %189 = arith.addf %187, %188 : vector<32x128xf32>
    %190 = vector.extract_strided_slice %181 {offsets = [0, 128], sizes = [32, 128], strides = [1, 1]} : vector<32x512xf32> to vector<32x128xf32>
    %cst_70 = arith.constant 5.000000e-01 : f32
    %191 = vector.broadcast %cst_70 : f32 to vector<32x128xf32>
    %192 = arith.mulf %191, %190 : vector<32x128xf32>
    %193 = math.tanh %192 : vector<32x128xf32>
    %cst_71 = arith.constant 5.000000e-01 : f32
    %194 = vector.broadcast %cst_71 : f32 to vector<32x128xf32>
    %195 = arith.mulf %194, %193 : vector<32x128xf32>
    %cst_72 = arith.constant 5.000000e-01 : f32
    %196 = vector.broadcast %cst_72 : f32 to vector<32x128xf32>
    %197 = arith.addf %195, %196 : vector<32x128xf32>
    %198 = vector.extract_strided_slice %181 {offsets = [0, 256], sizes = [32, 128], strides = [1, 1]} : vector<32x512xf32> to vector<32x128xf32>
    %199 = math.tanh %198 : vector<32x128xf32>
    %200 = vector.extract_strided_slice %181 {offsets = [0, 384], sizes = [32, 128], strides = [1, 1]} : vector<32x512xf32> to vector<32x128xf32>
    %cst_73 = arith.constant 5.000000e-01 : f32
    %201 = vector.broadcast %cst_73 : f32 to vector<32x128xf32>
    %202 = arith.mulf %201, %200 : vector<32x128xf32>
    %203 = math.tanh %202 : vector<32x128xf32>
    %cst_74 = arith.constant 5.000000e-01 : f32
    %204 = vector.broadcast %cst_74 : f32 to vector<32x128xf32>
    %205 = arith.mulf %204, %203 : vector<32x128xf32>
    %cst_75 = arith.constant 5.000000e-01 : f32
    %206 = vector.broadcast %cst_75 : f32 to vector<32x128xf32>
    %207 = arith.addf %205, %206 : vector<32x128xf32>
    %208 = arith.mulf %197, %169 : vector<32x128xf32>
    %209 = arith.mulf %189, %199 : vector<32x128xf32>
    %210 = arith.addf %208, %209 : vector<32x128xf32>
    %211 = math.tanh %210 : vector<32x128xf32>
    %212 = arith.mulf %207, %211 : vector<32x128xf32>
    %213 = arith.truncf %212 : vector<32x128xf32> to vector<32x128xbf16>
    %214 = arith.index_cast %176 : i32 to index
    %c0_76 = arith.constant 0 : index
    %215 = vector.load %arg13[%214, %c0_76] : memref<256x128xbf16, #tpu.memory_space<vmem>>, vector<32x128xbf16>
    tpu.vector_store %arg13[%214, %c0_76], %213 {strides = array<i32>} : memref<256x128xbf16, #tpu.memory_space<vmem>>, vector<32x128xbf16>,
    %c5_i32 = arith.constant 5 : i32
    %c32_i32_77 = arith.constant 32 : i32
    %216 = arith.muli %c5_i32, %c32_i32_77 : i32
    %217 = tpu.assume_multiple %216, 32 : i32
    %218 = arith.index_cast %217 : i32 to index
    %c0_78 = arith.constant 0 : index
    %219 = vector.load %arg12[%218, %c0_78] : memref<256x512xf32, #tpu.memory_space<vmem>>, vector<32x512xf32>
    %220 = arith.truncf %212 : vector<32x128xf32> to vector<32x128xbf16>
    %cst_79 = arith.constant dense<0.000000e+00> : vector<32x512xf32>
    %221 = tpu.matmul %220, %8, %cst_79 {dimension_numbers = #tpu.dot_dimension_numbers<[1], [0], [0], [1], [0, 0, 1, 1], [], []>} : vector<32x128xbf16>, vector<128x512xbf16>, vector<32x512xf32> -> vector<32x512xf32>
    %222 = arith.addf %219, %221 : vector<32x512xf32>
    %223 = vector.extract_strided_slice %222 {offsets = [0, 0], sizes = [32, 128], strides = [1, 1]} : vector<32x512xf32> to vector<32x128xf32>
    %cst_80 = arith.constant 5.000000e-01 : f32
    %224 = vector.broadcast %cst_80 : f32 to vector<32x128xf32>
    %225 = arith.mulf %224, %223 : vector<32x128xf32>
    %226 = math.tanh %225 : vector<32x128xf32>
    %cst_81 = arith.constant 5.000000e-01 : f32
    %227 = vector.broadcast %cst_81 : f32 to vector<32x128xf32>
    %228 = arith.mulf %227, %226 : vector<32x128xf32>
    %cst_82 = arith.constant 5.000000e-01 : f32
    %229 = vector.broadcast %cst_82 : f32 to vector<32x128xf32>
    %230 = arith.addf %228, %229 : vector<32x128xf32>
    %231 = vector.extract_strided_slice %222 {offsets = [0, 128], sizes = [32, 128], strides = [1, 1]} : vector<32x512xf32> to vector<32x128xf32>
    %cst_83 = arith.constant 5.000000e-01 : f32
    %232 = vector.broadcast %cst_83 : f32 to vector<32x128xf32>
    %233 = arith.mulf %232, %231 : vector<32x128xf32>
    %234 = math.tanh %233 : vector<32x128xf32>
    %cst_84 = arith.constant 5.000000e-01 : f32
    %235 = vector.broadcast %cst_84 : f32 to vector<32x128xf32>
    %236 = arith.mulf %235, %234 : vector<32x128xf32>
    %cst_85 = arith.constant 5.000000e-01 : f32
    %237 = vector.broadcast %cst_85 : f32 to vector<32x128xf32>
    %238 = arith.addf %236, %237 : vector<32x128xf32>
    %239 = vector.extract_strided_slice %222 {offsets = [0, 256], sizes = [32, 128], strides = [1, 1]} : vector<32x512xf32> to vector<32x128xf32>
    %240 = math.tanh %239 : vector<32x128xf32>
    %241 = vector.extract_strided_slice %222 {offsets = [0, 384], sizes = [32, 128], strides = [1, 1]} : vector<32x512xf32> to vector<32x128xf32>
    %cst_86 = arith.constant 5.000000e-01 : f32
    %242 = vector.broadcast %cst_86 : f32 to vector<32x128xf32>
    %243 = arith.mulf %242, %241 : vector<32x128xf32>
    %244 = math.tanh %243 : vector<32x128xf32>
    %cst_87 = arith.constant 5.000000e-01 : f32
    %245 = vector.broadcast %cst_87 : f32 to vector<32x128xf32>
    %246 = arith.mulf %245, %244 : vector<32x128xf32>
    %cst_88 = arith.constant 5.000000e-01 : f32
    %247 = vector.broadcast %cst_88 : f32 to vector<32x128xf32>
    %248 = arith.addf %246, %247 : vector<32x128xf32>
    %249 = arith.mulf %238, %210 : vector<32x128xf32>
    %250 = arith.mulf %230, %240 : vector<32x128xf32>
    %251 = arith.addf %249, %250 : vector<32x128xf32>
    %252 = math.tanh %251 : vector<32x128xf32>
    %253 = arith.mulf %248, %252 : vector<32x128xf32>
    %254 = arith.truncf %253 : vector<32x128xf32> to vector<32x128xbf16>
    %255 = arith.index_cast %217 : i32 to index
    %c0_89 = arith.constant 0 : index
    %256 = vector.load %arg13[%255, %c0_89] : memref<256x128xbf16, #tpu.memory_space<vmem>>, vector<32x128xbf16>
    tpu.vector_store %arg13[%255, %c0_89], %254 {strides = array<i32>} : memref<256x128xbf16, #tpu.memory_space<vmem>>, vector<32x128xbf16>,
    %c6_i32 = arith.constant 6 : i32
    %c32_i32_90 = arith.constant 32 : i32
    %257 = arith.muli %c6_i32, %c32_i32_90 : i32
    %258 = tpu.assume_multiple %257, 32 : i32
    %259 = arith.index_cast %258 : i32 to index
    %c0_91 = arith.constant 0 : index
    %260 = vector.load %arg12[%259, %c0_91] : memref<256x512xf32, #tpu.memory_space<vmem>>, vector<32x512xf32>
    %261 = arith.truncf %253 : vector<32x128xf32> to vector<32x128xbf16>
    %cst_92 = arith.constant dense<0.000000e+00> : vector<32x512xf32>
    %262 = tpu.matmul %261, %8, %cst_92 {dimension_numbers = #tpu.dot_dimension_numbers<[1], [0], [0], [1], [0, 0, 1, 1], [], []>} : vector<32x128xbf16>, vector<128x512xbf16>, vector<32x512xf32> -> vector<32x512xf32>
    %263 = arith.addf %260, %262 : vector<32x512xf32>
    %264 = vector.extract_strided_slice %263 {offsets = [0, 0], sizes = [32, 128], strides = [1, 1]} : vector<32x512xf32> to vector<32x128xf32>
    %cst_93 = arith.constant 5.000000e-01 : f32
    %265 = vector.broadcast %cst_93 : f32 to vector<32x128xf32>
    %266 = arith.mulf %265, %264 : vector<32x128xf32>
    %267 = math.tanh %266 : vector<32x128xf32>
    %cst_94 = arith.constant 5.000000e-01 : f32
    %268 = vector.broadcast %cst_94 : f32 to vector<32x128xf32>
    %269 = arith.mulf %268, %267 : vector<32x128xf32>
    %cst_95 = arith.constant 5.000000e-01 : f32
    %270 = vector.broadcast %cst_95 : f32 to vector<32x128xf32>
    %271 = arith.addf %269, %270 : vector<32x128xf32>
    %272 = vector.extract_strided_slice %263 {offsets = [0, 128], sizes = [32, 128], strides = [1, 1]} : vector<32x512xf32> to vector<32x128xf32>
    %cst_96 = arith.constant 5.000000e-01 : f32
    %273 = vector.broadcast %cst_96 : f32 to vector<32x128xf32>
    %274 = arith.mulf %273, %272 : vector<32x128xf32>
    %275 = math.tanh %274 : vector<32x128xf32>
    %cst_97 = arith.constant 5.000000e-01 : f32
    %276 = vector.broadcast %cst_97 : f32 to vector<32x128xf32>
    %277 = arith.mulf %276, %275 : vector<32x128xf32>
    %cst_98 = arith.constant 5.000000e-01 : f32
    %278 = vector.broadcast %cst_98 : f32 to vector<32x128xf32>
    %279 = arith.addf %277, %278 : vector<32x128xf32>
    %280 = vector.extract_strided_slice %263 {offsets = [0, 256], sizes = [32, 128], strides = [1, 1]} : vector<32x512xf32> to vector<32x128xf32>
    %281 = math.tanh %280 : vector<32x128xf32>
    %282 = vector.extract_strided_slice %263 {offsets = [0, 384], sizes = [32, 128], strides = [1, 1]} : vector<32x512xf32> to vector<32x128xf32>
    %cst_99 = arith.constant 5.000000e-01 : f32
    %283 = vector.broadcast %cst_99 : f32 to vector<32x128xf32>
    %284 = arith.mulf %283, %282 : vector<32x128xf32>
    %285 = math.tanh %284 : vector<32x128xf32>
    %cst_100 = arith.constant 5.000000e-01 : f32
    %286 = vector.broadcast %cst_100 : f32 to vector<32x128xf32>
    %287 = arith.mulf %286, %285 : vector<32x128xf32>
    %cst_101 = arith.constant 5.000000e-01 : f32
    %288 = vector.broadcast %cst_101 : f32 to vector<32x128xf32>
    %289 = arith.addf %287, %288 : vector<32x128xf32>
    %290 = arith.mulf %279, %251 : vector<32x128xf32>
    %291 = arith.mulf %271, %281 : vector<32x128xf32>
    %292 = arith.addf %290, %291 : vector<32x128xf32>
    %293 = math.tanh %292 : vector<32x128xf32>
    %294 = arith.mulf %289, %293 : vector<32x128xf32>
    %295 = arith.truncf %294 : vector<32x128xf32> to vector<32x128xbf16>
    %296 = arith.index_cast %258 : i32 to index
    %c0_102 = arith.constant 0 : index
    %297 = vector.load %arg13[%296, %c0_102] : memref<256x128xbf16, #tpu.memory_space<vmem>>, vector<32x128xbf16>
    tpu.vector_store %arg13[%296, %c0_102], %295 {strides = array<i32>} : memref<256x128xbf16, #tpu.memory_space<vmem>>, vector<32x128xbf16>,
    %c7_i32 = arith.constant 7 : i32
    %c32_i32_103 = arith.constant 32 : i32
    %298 = arith.muli %c7_i32, %c32_i32_103 : i32
    %299 = tpu.assume_multiple %298, 32 : i32
    %300 = arith.index_cast %299 : i32 to index
    %c0_104 = arith.constant 0 : index
    %301 = vector.load %arg12[%300, %c0_104] : memref<256x512xf32, #tpu.memory_space<vmem>>, vector<32x512xf32>
    %302 = arith.truncf %294 : vector<32x128xf32> to vector<32x128xbf16>
    %cst_105 = arith.constant dense<0.000000e+00> : vector<32x512xf32>
    %303 = tpu.matmul %302, %8, %cst_105 {dimension_numbers = #tpu.dot_dimension_numbers<[1], [0], [0], [1], [0, 0, 1, 1], [], []>} : vector<32x128xbf16>, vector<128x512xbf16>, vector<32x512xf32> -> vector<32x512xf32>
    %304 = arith.addf %301, %303 : vector<32x512xf32>
    %305 = vector.extract_strided_slice %304 {offsets = [0, 0], sizes = [32, 128], strides = [1, 1]} : vector<32x512xf32> to vector<32x128xf32>
    %cst_106 = arith.constant 5.000000e-01 : f32
    %306 = vector.broadcast %cst_106 : f32 to vector<32x128xf32>
    %307 = arith.mulf %306, %305 : vector<32x128xf32>
    %308 = math.tanh %307 : vector<32x128xf32>
    %cst_107 = arith.constant 5.000000e-01 : f32
    %309 = vector.broadcast %cst_107 : f32 to vector<32x128xf32>
    %310 = arith.mulf %309, %308 : vector<32x128xf32>
    %cst_108 = arith.constant 5.000000e-01 : f32
    %311 = vector.broadcast %cst_108 : f32 to vector<32x128xf32>
    %312 = arith.addf %310, %311 : vector<32x128xf32>
    %313 = vector.extract_strided_slice %304 {offsets = [0, 128], sizes = [32, 128], strides = [1, 1]} : vector<32x512xf32> to vector<32x128xf32>
    %cst_109 = arith.constant 5.000000e-01 : f32
    %314 = vector.broadcast %cst_109 : f32 to vector<32x128xf32>
    %315 = arith.mulf %314, %313 : vector<32x128xf32>
    %316 = math.tanh %315 : vector<32x128xf32>
    %cst_110 = arith.constant 5.000000e-01 : f32
    %317 = vector.broadcast %cst_110 : f32 to vector<32x128xf32>
    %318 = arith.mulf %317, %316 : vector<32x128xf32>
    %cst_111 = arith.constant 5.000000e-01 : f32
    %319 = vector.broadcast %cst_111 : f32 to vector<32x128xf32>
    %320 = arith.addf %318, %319 : vector<32x128xf32>
    %321 = vector.extract_strided_slice %304 {offsets = [0, 256], sizes = [32, 128], strides = [1, 1]} : vector<32x512xf32> to vector<32x128xf32>
    %322 = math.tanh %321 : vector<32x128xf32>
    %323 = vector.extract_strided_slice %304 {offsets = [0, 384], sizes = [32, 128], strides = [1, 1]} : vector<32x512xf32> to vector<32x128xf32>
    %cst_112 = arith.constant 5.000000e-01 : f32
    %324 = vector.broadcast %cst_112 : f32 to vector<32x128xf32>
    %325 = arith.mulf %324, %323 : vector<32x128xf32>
    %326 = math.tanh %325 : vector<32x128xf32>
    %cst_113 = arith.constant 5.000000e-01 : f32
    %327 = vector.broadcast %cst_113 : f32 to vector<32x128xf32>
    %328 = arith.mulf %327, %326 : vector<32x128xf32>
    %cst_114 = arith.constant 5.000000e-01 : f32
    %329 = vector.broadcast %cst_114 : f32 to vector<32x128xf32>
    %330 = arith.addf %328, %329 : vector<32x128xf32>
    %331 = arith.mulf %320, %292 : vector<32x128xf32>
    %332 = arith.mulf %312, %322 : vector<32x128xf32>
    %333 = arith.addf %331, %332 : vector<32x128xf32>
    %334 = math.tanh %333 : vector<32x128xf32>
    %335 = arith.mulf %330, %334 : vector<32x128xf32>
    %336 = arith.truncf %335 : vector<32x128xf32> to vector<32x128xbf16>
    %337 = arith.index_cast %299 : i32 to index
    %c0_115 = arith.constant 0 : index
    %338 = vector.load %arg13[%337, %c0_115] : memref<256x128xbf16, #tpu.memory_space<vmem>>, vector<32x128xbf16>
    tpu.vector_store %arg13[%337, %c0_115], %336 {strides = array<i32>} : memref<256x128xbf16, #tpu.memory_space<vmem>>, vector<32x128xbf16>,
    %c8_i32 = arith.constant 8 : i32
    %c0_116 = arith.constant 0 : index
    %c0_117 = arith.constant 0 : index
    %339 = vector.load %arg13[%c0_116, %c0_117] : memref<256x128xbf16, #tpu.memory_space<vmem>>, vector<256x128xbf16>
    %c0_118 = arith.constant 0 : index
    %c0_119 = arith.constant 0 : index
    %340 = vector.load %arg7[%c0_118, %c0_119] : memref<128x128xbf16, #tpu.memory_space<vmem>>, vector<128x128xbf16>
    %cst_120 = arith.constant dense<0.000000e+00> : vector<256x128xf32>
    %341 = tpu.matmul %339, %340, %cst_120 {dimension_numbers = #tpu.dot_dimension_numbers<[1], [0], [0], [1], [0, 0, 1, 1], [], []>} : vector<256x128xbf16>, vector<128x128xbf16>, vector<256x128xf32> -> vector<256x128xf32>
    %c0_121 = arith.constant 0 : index
    %c0_122 = arith.constant 0 : index
    %342 = vector.load %arg8[%c0_121, %c0_122] : memref<1x128xf32, #tpu.memory_space<vmem>>, vector<1x128xf32>
    %343 = vector.broadcast %342 : vector<1x128xf32> to vector<256x128xf32>
    %344 = arith.addf %341, %343 : vector<256x128xf32>
    %c0_123 = arith.constant 0 : index
    %c0_124 = arith.constant 0 : index
    %345 = vector.load %arg9[%c0_123, %c0_124] : memref<256x128xf32, #tpu.memory_space<vmem>>, vector<256x128xf32>
    tpu.vector_store %arg9[%c0_123, %c0_124], %344 {strides = array<i32>} : memref<256x128xf32, #tpu.memory_space<vmem>>, vector<256x128xf32>,
    %c0_125 = arith.constant 0 : index
    %c0_126 = arith.constant 0 : index
    %346 = vector.load %arg10[%c0_125, %c0_126] : memref<32x128xf32, #tpu.memory_space<vmem>>, vector<32x128xf32>
    tpu.vector_store %arg10[%c0_125, %c0_126], %335 {strides = array<i32>} : memref<32x128xf32, #tpu.memory_space<vmem>>, vector<32x128xf32>,
    %c0_127 = arith.constant 0 : index
    %c0_128 = arith.constant 0 : index
    %347 = vector.load %arg11[%c0_127, %c0_128] : memref<32x128xf32, #tpu.memory_space<vmem>>, vector<32x128xf32>
    tpu.vector_store %arg11[%c0_127, %c0_128], %333 {strides = array<i32>} : memref<32x128xf32, #tpu.memory_space<vmem>>, vector<32x128xf32>,
    return
  }
  func.func @transform_0(%arg0: i32) -> (i32, i32) {
    %c0_i32 = arith.constant 0 : i32
    %c0_i32_0 = arith.constant 0 : i32
    return %arg0, %c0_i32 : i32, i32
  }
  func.func @transform_1(%arg0: i32) -> (i32, i32) {
    %c0_i32 = arith.constant 0 : i32
    %c0_i32_0 = arith.constant 0 : i32
    return %arg0, %c0_i32 : i32, i32
  }
  func.func @transform_2(%arg0: i32) -> (i32, i32) {
    %c0_i32 = arith.constant 0 : i32
    %c0_i32_0 = arith.constant 0 : i32
    return %arg0, %c0_i32 : i32, i32
  }
  func.func @transform_3(%arg0: i32) -> (i32, i32) {
    %c0_i32 = arith.constant 0 : i32
    %c0_i32_0 = arith.constant 0 : i32
    %c0_i32_1 = arith.constant 0 : i32
    return %c0_i32, %c0_i32_0 : i32, i32
  }
  func.func @transform_4(%arg0: i32) -> (i32, i32) {
    %c0_i32 = arith.constant 0 : i32
    %c0_i32_0 = arith.constant 0 : i32
    %c0_i32_1 = arith.constant 0 : i32
    return %c0_i32, %c0_i32_0 : i32, i32
  }
  func.func @transform_5(%arg0: i32) -> (i32, i32) {
    %c0_i32 = arith.constant 0 : i32
    %c0_i32_0 = arith.constant 0 : i32
    %c0_i32_1 = arith.constant 0 : i32
    return %c0_i32, %c0_i32_0 : i32, i32
  }
  func.func @transform_6(%arg0: i32) -> (i32, i32) {
    %c0_i32 = arith.constant 0 : i32
    %c0_i32_0 = arith.constant 0 : i32
    %c0_i32_1 = arith.constant 0 : i32
    return %c0_i32, %c0_i32_0 : i32, i32
  }
  func.func @transform_7(%arg0: i32) -> (i32, i32) {
    %c0_i32 = arith.constant 0 : i32
    %c0_i32_0 = arith.constant 0 : i32
    %c0_i32_1 = arith.constant 0 : i32
    return %c0_i32, %c0_i32_0 : i32, i32
  }
  func.func @transform_8(%arg0: i32) -> (i32, i32) {
    %c0_i32 = arith.constant 0 : i32
    %c0_i32_0 = arith.constant 0 : i32
    return %arg0, %c0_i32 : i32, i32
  }
  func.func @transform_9(%arg0: i32) -> (i32, i32) {
    %c0_i32 = arith.constant 0 : i32
    %c0_i32_0 = arith.constant 0 : i32
    return %arg0, %c0_i32 : i32, i32
  }
  func.func @transform_10(%arg0: i32) -> (i32, i32) {
    %c0_i32 = arith.constant 0 : i32
    %c0_i32_0 = arith.constant 0 : i32
    return %arg0, %c0_i32 : i32, i32
  }
}

</mosaic_0001>

<llo_original>
// kernel: simple_lstm_forward.1
$region0: #{simple_lstm_forward.1}
  #allocation0 [shape = 'u32[]', space=smem, size = 0x4, offset = 0x4, fixed_abs, tag = 'smem constant byte address 0x4 - core index']
  #allocation1 [shape = 'u32[144,128]{1,0:T(1,128)}', space=vmem, size = 0x12000, scoped, tag = 'internal scratch']
  #allocation2 [shape = 'f32[256,512]{1,0:T(8,128)}', space=vmem, size = 0x80000, scoped, tag = 'scratch operand']
  #allocation3 [shape = 'bf16[256,128]{1,0:T(16,128)(2,1)}', space=vmem, size = 0x10000, scoped, tag = 'scratch operand']
  %s0 = inlined_call_operand.vmem [shape: f32[256,27], index: 0, kind: input, shape index: {}]
  %s1 = inlined_call_operand.vmem [shape: f32[32,128], index: 1, kind: input, shape index: {}]
  %s2 = inlined_call_operand.vmem [shape: f32[32,128], index: 2, kind: input, shape index: {}]
  %s3 = inlined_call_operand.vmem [shape: bf16[27,512], index: 3, kind: input, shape index: {}]
  %s4 = inlined_call_operand.vmem [shape: bf16[128,512], index: 4, kind: input, shape index: {}]
  %s5 = inlined_call_operand.vmem [shape: f32[1,512], index: 5, kind: input, shape index: {}]
  %s6 = inlined_call_operand.vmem [shape: bf16[128,128], index: 6, kind: input, shape index: {}]
  %s7 = inlined_call_operand.vmem [shape: f32[1,128], index: 7, kind: input, shape index: {}]
  %s8 = inlined_call_operand.vmem [shape: f32[256,128], index: 8, kind: output, shape index: {0}]
  %s9 = inlined_call_operand.vmem [shape: f32[32,128], index: 9, kind: output, shape index: {1}]
  %s10 = inlined_call_operand.vmem [shape: f32[32,128], index: 10, kind: output, shape index: {2}]
  %11 = xla_tuple %s8, %s9, %s10
  %s12 = sld [smem:[#allocation0]]
  $region58: #{simple_lstm_forward.1} parent=0
    _
  %s14 = ssub.s32 1, %s12
  %s15 = scalar_select 0, %s14, %s12
  // Predicated region
  $region2: #{simple_lstm_forward.1} parent=0 // pred_check
    _
  $region3: #{simple_lstm_forward.1} parent=0 // pred_check_branch
    %17 = sbr.rel (0) target = $region5
  $region4: #{simple_lstm_forward.1} parent=0 // pred_region
    _
  $region5: #{simple_lstm_forward.1} parent=0 // pred_fallthru
    _
  // Predicated region
  $region6: #{simple_lstm_forward.1} parent=0 // pred_check
    _
  $region7: #{simple_lstm_forward.1} parent=0 // pred_check_branch
    %19 = sbr.rel (0) target = $region9
  $region8: #{simple_lstm_forward.1} parent=0 // pred_region
    _
  $region9: #{simple_lstm_forward.1} parent=0 // pred_fallthru
    _
  // Predicated region
  $region10: #{simple_lstm_forward.1} parent=0 // pred_check
    _
  $region11: #{simple_lstm_forward.1} parent=0 // pred_check_branch
    %21 = sbr.rel (0) target = $region13
  $region12: #{simple_lstm_forward.1} parent=0 // pred_region
    _
  $region13: #{simple_lstm_forward.1} parent=0 // pred_fallthru
    _
  // Predicated region
  $region14: #{simple_lstm_forward.1} parent=0 // pred_check
    _
  $region15: #{simple_lstm_forward.1} parent=0 // pred_check_branch
    %23 = sbr.rel (0) target = $region17
  $region16: #{simple_lstm_forward.1} parent=0 // pred_region
    _
  $region17: #{simple_lstm_forward.1} parent=0 // pred_fallthru
    _
  // Predicated region
  $region18: #{simple_lstm_forward.1} parent=0 // pred_check
    _
  $region19: #{simple_lstm_forward.1} parent=0 // pred_check_branch
    %25 = sbr.rel (0) target = $region21
  $region20: #{simple_lstm_forward.1} parent=0 // pred_region
    _
  $region21: #{simple_lstm_forward.1} parent=0 // pred_fallthru
    _
  // Predicated region
  $region22: #{simple_lstm_forward.1} parent=0 // pred_check
    _
  $region23: #{simple_lstm_forward.1} parent=0 // pred_check_branch
    %27 = sbr.rel (0) target = $region25
  $region24: #{simple_lstm_forward.1} parent=0 // pred_region
    _
  $region25: #{simple_lstm_forward.1} parent=0 // pred_fallthru
    _
  // Predicated region
  $region26: #{simple_lstm_forward.1} parent=0 // pred_check
    _
  $region27: #{simple_lstm_forward.1} parent=0 // pred_check_branch
    %29 = sbr.rel (0) target = $region29
  $region28: #{simple_lstm_forward.1} parent=0 // pred_region
    _
  $region29: #{simple_lstm_forward.1} parent=0 // pred_fallthru
    _
  // Predicated region
  $region30: #{simple_lstm_forward.1} parent=0 // pred_check
    _
  $region31: #{simple_lstm_forward.1} parent=0 // pred_check_branch
    %31 = sbr.rel (0) target = $region33
  $region32: #{simple_lstm_forward.1} parent=0 // pred_region
    _
  $region33: #{simple_lstm_forward.1} parent=0 // pred_fallthru
    _
  %v33 = vld [vmem:[%s0] sm:$0xff]
  %v34 = vld [vmem:[%s0 + $0x8] sm:$0xff]
  %v35 = vld [vmem:[%s0 + $0x10] sm:$0xff]
  %v36 = vld [vmem:[%s0 + $0x18] sm:$0xff]
  %v37 = vld [vmem:[%s0 + $0x20] sm:$0xff]
  %v38 = vld [vmem:[%s0 + $0x28] sm:$0xff]
  %v39 = vld [vmem:[%s0 + $0x30] sm:$0xff]
  %v40 = vld [vmem:[%s0 + $0x38] sm:$0xff]
  %v41 = vld [vmem:[%s0 + $0x40] sm:$0xff]
  %v42 = vld [vmem:[%s0 + $0x48] sm:$0xff]
  %v43 = vld [vmem:[%s0 + $0x50] sm:$0xff]
  %v44 = vld [vmem:[%s0 + $0x58] sm:$0xff]
  %v45 = vld [vmem:[%s0 + $0x60] sm:$0xff]
  %v46 = vld [vmem:[%s0 + $0x68] sm:$0xff]
  %v47 = vld [vmem:[%s0 + $0x70] sm:$0xff]
  %v48 = vld [vmem:[%s0 + $0x78] sm:$0xff]
  %v49 = vld [vmem:[%s0 + $0x80] sm:$0xff]
  %v50 = vld [vmem:[%s0 + $0x88] sm:$0xff]
  %v51 = vld [vmem:[%s0 + $0x90] sm:$0xff]
  %v52 = vld [vmem:[%s0 + $0x98] sm:$0xff]
  %v53 = vld [vmem:[%s0 + $0xa0] sm:$0xff]
  %v54 = vld [vmem:[%s0 + $0xa8] sm:$0xff]
  %v55 = vld [vmem:[%s0 + $0xb0] sm:$0xff]
  %v56 = vld [vmem:[%s0 + $0xb8] sm:$0xff]
  %v57 = vld [vmem:[%s0 + $0xc0] sm:$0xff]
  %v58 = vld [vmem:[%s0 + $0xc8] sm:$0xff]
  %v59 = vld [vmem:[%s0 + $0xd0] sm:$0xff]
  %v60 = vld [vmem:[%s0 + $0xd8] sm:$0xff]
  %v61 = vld [vmem:[%s0 + $0xe0] sm:$0xff]
  %v62 = vld [vmem:[%s0 + $0xe8] sm:$0xff]
  %v63 = vld [vmem:[%s0 + $0xf0] sm:$0xff]
  %v64 = vld [vmem:[%s0 + $0xf8] sm:$0xff]
  %v65 = vpack.c.bf16 %v34, %v33
  %v66 = vpack.c.bf16 %v36, %v35
  %v67 = vpack.c.bf16 %v38, %v37
  %v68 = vpack.c.bf16 %v40, %v39
  %v69 = vpack.c.bf16 %v42, %v41
  %v70 = vpack.c.bf16 %v44, %v43
  %v71 = vpack.c.bf16 %v46, %v45
  %v72 = vpack.c.bf16 %v48, %v47
  %v73 = vpack.c.bf16 %v50, %v49
  %v74 = vpack.c.bf16 %v52, %v51
  %v75 = vpack.c.bf16 %v54, %v53
  %v76 = vpack.c.bf16 %v56, %v55
  %v77 = vpack.c.bf16 %v58, %v57
  %v78 = vpack.c.bf16 %v60, %v59
  %v79 = vpack.c.bf16 %v62, %v61
  %v80 = vpack.c.bf16 %v64, %v63
  %v81 = vld [vmem:[%s3] sm:$0xff]
  %v82 = vld [vmem:[%s3 + $0x8] sm:$0xff]
  %v83 = vld [vmem:[%s3 + $0x10] sm:$0xff]
  %v84 = vld [vmem:[%s3 + $0x18] sm:$0xff]
  %v85 = vld [vmem:[%s3 + $0x20] sm:$0xff]
  %v86 = vld [vmem:[%s3 + $0x28] sm:$0xff]
  %v87 = vld [vmem:[%s3 + $0x30] sm:$0x33]
  %v88 = vld [vmem:[%s3 + $0x38] sm:$0x33]
  %v89 = vld [vmem:[%s5] sm:$0xf]
  %v91 = vlaneseq
  %v92 = vshrl.u32 %v91, 7
  %v93 = vsub.s32 0, %v92
  %v94 = vrot.slane %v89, %v93
  %v95 = vlaneseq
  %v96 = vshrl.u32 %v95, 7
  %v97 = vsub.s32 1, %v96
  %v98 = vrot.slane %v89, %v97
  %v99 = vlaneseq
  %v100 = vshrl.u32 %v99, 7
  %v101 = vsub.s32 2, %v100
  %v102 = vrot.slane %v89, %v101
  %v103 = vlaneseq
  %v104 = vshrl.u32 %v103, 7
  %v105 = vsub.s32 3, %v104
  %v106 = vrot.slane %v89, %v105
  %v119 = vunpack.c.l.b16 %v81
  %v120 = vunpack.c.h.b16 %v81
  %v121 = vunpack.c.l.b16 %v82
  %v122 = vunpack.c.h.b16 %v82
  %v123 = vunpack.c.l.b16 %v83
  %v124 = vunpack.c.h.b16 %v83
  %v125 = vunpack.c.l.b16 %v84
  %v126 = vunpack.c.h.b16 %v84
  %v127 = vunpack.c.l.b16 %v85
  %v128 = vunpack.c.h.b16 %v85
  %v129 = vunpack.c.l.b16 %v86
  %v130 = vunpack.c.h.b16 %v86
  %v131 = vunpack.c.l.b16 %v87
  %v132 = vunpack.c.h.b16 %v87
  %v133 = vunpack.c.l.b16 %v88
  %v134 = vunpack.c.h.b16 %v88
  %v135 = vpack.c.b16 %v123, %v119
  %v136 = vpack.c.b16 %v124, %v120
  %v137 = vpack.c.b16 %v125, %v121
  %v138 = vpack.c.b16 %v126, %v122
  %v139 = vpack.c.b16 %v131, %v127
  %v140 = vpack.c.b16 %v132, %v128
  %v141 = vpack.c.b16 %v133, %v129
  %v142 = vpack.c.b16 %v134, %v130
  %vm147 = vcmask 220160
  %v149 = vsel %vm147, %v65, 0
  %v152 = vsel %vm147, %v66, 0
  %v155 = vsel %vm147, %v67, 0
  %v158 = vsel %vm147, %v68, 0
  %v161 = vsel %vm147, %v69, 0
  %v164 = vsel %vm147, %v70, 0
  %v167 = vsel %vm147, %v71, 0
  %v170 = vsel %vm147, %v72, 0
  %v173 = vsel %vm147, %v73, 0
  %v176 = vsel %vm147, %v74, 0
  %v179 = vsel %vm147, %v75, 0
  %v182 = vsel %vm147, %v76, 0
  %v185 = vsel %vm147, %v77, 0
  %v188 = vsel %vm147, %v78, 0
  %v191 = vsel %vm147, %v79, 0
  %v194 = vsel %vm147, %v80, 0
  %vm196 = vcmask 1044480
  %vm197 = vcmask 1045504
  %v198 = vsel %vm196, 4294967295, 65535
  %v199 = vsel %vm197, %v198, 0
  %v201 = vand.u32 %v139, %v199
  %v204 = vand.u32 %v140, %v199
  %v207 = vand.u32 %v141, %v199
  %v210 = vand.u32 %v142, %v199
  %212 = vmatprep.subr.bf16.mxu0 %v136
  %213 = vmatpush1.bf16.msra.mxu0 %v135
  %214 = vmatprep.subr.bf16.mxu0 %v204
  %215 = vmatpush1.bf16.msra.mxu0 %v201
  %216 = vmatprep.subr.bf16.mxu0 0
  %217 = vmatpush1.bf16.msra.mxu0 0
  %218 = vmatprep.subr.bf16.mxu0 0
  %219 = vmatpush1.bf16.msra.mxu0 0
  %220 = vmatprep.subr.bf16.mxu0 0
  %221 = vmatpush1.bf16.msra.mxu0 0
  %222 = vmatprep.subr.bf16.mxu0 0
  %223 = vmatpush1.bf16.msra.mxu0 0
  %224 = vmatprep.subr.bf16.mxu0 0
  %225 = vmatpush1.bf16.msra.mxu0 0
  %226 = vmatprep.subr.bf16.mxu0 0
  %227 = vmatpush1.bf16.msra.mxu0 0
  %228 = vmatprep.subr.bf16.mxu0 0
  %229 = vmatpush1.bf16.msra.mxu0 0
  %230 = vmatprep.subr.bf16.mxu0 0
  %231 = vmatpush1.bf16.msra.mxu0 0
  %232 = vmatprep.subr.bf16.mxu0 0
  %233 = vmatpush1.bf16.msra.mxu0 0
  %234 = vmatprep.subr.bf16.mxu0 0
  %235 = vmatpush1.bf16.msra.mxu0 0
  %236 = vmatprep.subr.bf16.mxu0 0
  %237 = vmatpush1.bf16.msra.mxu0 0
  %238 = vmatprep.subr.bf16.mxu0 0
  %239 = vmatpush1.bf16.msra.mxu0 0
  %240 = vmatprep.subr.bf16.mxu0 0
  %241 = vmatpush1.bf16.msra.mxu0 0
  %242 = vmatprep.subr.bf16.mxu0 0
  %243 = vmatpush1.bf16.msra.mxu0 0
  %244 = vmatprep.mubr.bf16.mxu0 0
  %245 = vmatmul.mubr.bf16.gmra.mrb[0].mxu0 %v149
  %v246 = vpop.f32.mrb[0].mxu0
  %v247 = vadd.f32 %v94, %v246
  %v248 = vpop.f32.mrb[0].mxu0
  %v249 = vadd.f32 %v98, %v248
  %v250 = vpop.f32.mrb[0].mxu0
  %v251 = vadd.f32 %v94, %v250
  %v252 = vpop.f32.mrb[0].mxu0
  %v253 = vadd.f32 %v98, %v252
  %254 = vmatprep.mubr.bf16.mxu0 0
  %255 = vmatmul.mubr.bf16.gmra.mrb[0].mxu0 %v152
  %v256 = vpop.f32.mrb[0].mxu0
  %v257 = vadd.f32 %v94, %v256
  %v258 = vpop.f32.mrb[0].mxu0
  %v259 = vadd.f32 %v98, %v258
  %v260 = vpop.f32.mrb[0].mxu0
  %v261 = vadd.f32 %v94, %v260
  %v262 = vpop.f32.mrb[0].mxu0
  %v263 = vadd.f32 %v98, %v262
  %264 = vmatprep.mubr.bf16.mxu0 0
  %265 = vmatmul.mubr.bf16.gmra.mrb[0].mxu0 %v155
  %v266 = vpop.f32.mrb[0].mxu0
  %v267 = vadd.f32 %v94, %v266
  %v268 = vpop.f32.mrb[0].mxu0
  %v269 = vadd.f32 %v98, %v268
  %v270 = vpop.f32.mrb[0].mxu0
  %v271 = vadd.f32 %v94, %v270
  %v272 = vpop.f32.mrb[0].mxu0
  %v273 = vadd.f32 %v98, %v272
  %274 = vmatprep.mubr.bf16.mxu0 0
  %275 = vmatmul.mubr.bf16.gmra.mrb[0].mxu0 %v158
  %v276 = vpop.f32.mrb[0].mxu0
  %v277 = vadd.f32 %v94, %v276
  %v278 = vpop.f32.mrb[0].mxu0
  %v279 = vadd.f32 %v98, %v278
  %v280 = vpop.f32.mrb[0].mxu0
  %v281 = vadd.f32 %v94, %v280
  %v282 = vpop.f32.mrb[0].mxu0
  %v283 = vadd.f32 %v98, %v282
  %284 = vmatprep.mubr.bf16.mxu0 0
  %285 = vmatmul.mubr.bf16.gmra.mrb[0].mxu0 %v161
  %v286 = vpop.f32.mrb[0].mxu0
  %v287 = vadd.f32 %v94, %v286
  %v288 = vpop.f32.mrb[0].mxu0
  %v289 = vadd.f32 %v98, %v288
  %v290 = vpop.f32.mrb[0].mxu0
  %v291 = vadd.f32 %v94, %v290
  %v292 = vpop.f32.mrb[0].mxu0
  %v293 = vadd.f32 %v98, %v292
  %294 = vmatprep.mubr.bf16.mxu0 0
  %295 = vmatmul.mubr.bf16.gmra.mrb[0].mxu0 %v164
  %v296 = vpop.f32.mrb[0].mxu0
  %v297 = vadd.f32 %v94, %v296
  %v298 = vpop.f32.mrb[0].mxu0
  %v299 = vadd.f32 %v98, %v298
  %v300 = vpop.f32.mrb[0].mxu0
  %v301 = vadd.f32 %v94, %v300
  %v302 = vpop.f32.mrb[0].mxu0
  %v303 = vadd.f32 %v98, %v302
  %304 = vmatprep.mubr.bf16.mxu0 0
  %305 = vmatmul.mubr.bf16.gmra.mrb[0].mxu0 %v167
  %v306 = vpop.f32.mrb[0].mxu0
  %v307 = vadd.f32 %v94, %v306
  %v308 = vpop.f32.mrb[0].mxu0
  %v309 = vadd.f32 %v98, %v308
  %v310 = vpop.f32.mrb[0].mxu0
  %v311 = vadd.f32 %v94, %v310
  %v312 = vpop.f32.mrb[0].mxu0
  %v313 = vadd.f32 %v98, %v312
  %314 = vmatprep.mubr.bf16.mxu0 0
  %315 = vmatmul.mubr.bf16.gmra.mrb[0].mxu0 %v170
  %v316 = vpop.f32.mrb[0].mxu0
  %v317 = vadd.f32 %v94, %v316
  %v318 = vpop.f32.mrb[0].mxu0
  %v319 = vadd.f32 %v98, %v318
  %v320 = vpop.f32.mrb[0].mxu0
  %v321 = vadd.f32 %v94, %v320
  %v322 = vpop.f32.mrb[0].mxu0
  %v323 = vadd.f32 %v98, %v322
  %324 = vmatprep.mubr.bf16.mxu0 0
  %325 = vmatmul.mubr.bf16.gmra.mrb[0].mxu0 %v173
  %v326 = vpop.f32.mrb[0].mxu0
  %v327 = vadd.f32 %v94, %v326
  %v328 = vpop.f32.mrb[0].mxu0
  %v329 = vadd.f32 %v98, %v328
  %v330 = vpop.f32.mrb[0].mxu0
  %v331 = vadd.f32 %v94, %v330
  %v332 = vpop.f32.mrb[0].mxu0
  %v333 = vadd.f32 %v98, %v332
  %334 = vmatprep.mubr.bf16.mxu0 0
  %335 = vmatmul.mubr.bf16.gmra.mrb[0].mxu0 %v176
  %v336 = vpop.f32.mrb[0].mxu0
  %v337 = vadd.f32 %v94, %v336
  %v338 = vpop.f32.mrb[0].mxu0
  %v339 = vadd.f32 %v98, %v338
  %v340 = vpop.f32.mrb[0].mxu0
  %v341 = vadd.f32 %v94, %v340
  %v342 = vpop.f32.mrb[0].mxu0
  %v343 = vadd.f32 %v98, %v342
  %344 = vmatprep.mubr.bf16.mxu0 0
  %345 = vmatmul.mubr.bf16.gmra.mrb[0].mxu0 %v179
  %v346 = vpop.f32.mrb[0].mxu0
  %v347 = vadd.f32 %v94, %v346
  %v348 = vpop.f32.mrb[0].mxu0
  %v349 = vadd.f32 %v98, %v348
  %v350 = vpop.f32.mrb[0].mxu0
  %v351 = vadd.f32 %v94, %v350
  %v352 = vpop.f32.mrb[0].mxu0
  %v353 = vadd.f32 %v98, %v352
  %354 = vmatprep.mubr.bf16.mxu0 0
  %355 = vmatmul.mubr.bf16.gmra.mrb[0].mxu0 %v182
  %v356 = vpop.f32.mrb[0].mxu0
  %v357 = vadd.f32 %v94, %v356
  %v358 = vpop.f32.mrb[0].mxu0
  %v359 = vadd.f32 %v98, %v358
  %v360 = vpop.f32.mrb[0].mxu0
  %v361 = vadd.f32 %v94, %v360
  %v362 = vpop.f32.mrb[0].mxu0
  %v363 = vadd.f32 %v98, %v362
  %364 = vmatprep.mubr.bf16.mxu0 0
  %365 = vmatmul.mubr.bf16.gmra.mrb[0].mxu0 %v185
  %v366 = vpop.f32.mrb[0].mxu0
  %v367 = vadd.f32 %v94, %v366
  %v368 = vpop.f32.mrb[0].mxu0
  %v369 = vadd.f32 %v98, %v368
  %v370 = vpop.f32.mrb[0].mxu0
  %v371 = vadd.f32 %v94, %v370
  %v372 = vpop.f32.mrb[0].mxu0
  %v373 = vadd.f32 %v98, %v372
  %374 = vmatprep.mubr.bf16.mxu0 0
  %375 = vmatmul.mubr.bf16.gmra.mrb[0].mxu0 %v188
  %v376 = vpop.f32.mrb[0].mxu0
  %v377 = vadd.f32 %v94, %v376
  %v378 = vpop.f32.mrb[0].mxu0
  %v379 = vadd.f32 %v98, %v378
  %v380 = vpop.f32.mrb[0].mxu0
  %v381 = vadd.f32 %v94, %v380
  %v382 = vpop.f32.mrb[0].mxu0
  %v383 = vadd.f32 %v98, %v382
  %384 = vmatprep.mubr.bf16.mxu0 0
  %385 = vmatmul.mubr.bf16.gmra.mrb[0].mxu0 %v191
  %v386 = vpop.f32.mrb[0].mxu0
  %v387 = vadd.f32 %v94, %v386
  %v388 = vpop.f32.mrb[0].mxu0
  %v389 = vadd.f32 %v98, %v388
  %v390 = vpop.f32.mrb[0].mxu0
  %v391 = vadd.f32 %v94, %v390
  %v392 = vpop.f32.mrb[0].mxu0
  %v393 = vadd.f32 %v98, %v392
  %394 = vmatprep.mubr.bf16.mxu0 0
  %395 = vmatmul.mubr.bf16.gmra.mrb[0].mxu0 %v194
  %v396 = vpop.f32.mrb[0].mxu0
  %v397 = vadd.f32 %v94, %v396
  %v398 = vpop.f32.mrb[0].mxu0
  %v399 = vadd.f32 %v98, %v398
  %v400 = vpop.f32.mrb[0].mxu0
  %v401 = vadd.f32 %v94, %v400
  %v402 = vpop.f32.mrb[0].mxu0
  %v403 = vadd.f32 %v98, %v402
  %404 = vdwg.mxu0
  %405 = vmatprep.subr.bf16.mxu0 %v138
  %406 = vmatpush1.bf16.msra.mxu0 %v137
  %407 = vmatprep.subr.bf16.mxu0 %v210
  %408 = vmatpush1.bf16.msra.mxu0 %v207
  %409 = vmatprep.subr.bf16.mxu0 0
  %410 = vmatpush1.bf16.msra.mxu0 0
  %411 = vmatprep.subr.bf16.mxu0 0
  %412 = vmatpush1.bf16.msra.mxu0 0
  %413 = vmatprep.subr.bf16.mxu0 0
  %414 = vmatpush1.bf16.msra.mxu0 0
  %415 = vmatprep.subr.bf16.mxu0 0
  %416 = vmatpush1.bf16.msra.mxu0 0
  %417 = vmatprep.subr.bf16.mxu0 0
  %418 = vmatpush1.bf16.msra.mxu0 0
  %419 = vmatprep.subr.bf16.mxu0 0
  %420 = vmatpush1.bf16.msra.mxu0 0
  %421 = vmatprep.subr.bf16.mxu0 0
  %422 = vmatpush1.bf16.msra.mxu0 0
  %423 = vmatprep.subr.bf16.mxu0 0
  %424 = vmatpush1.bf16.msra.mxu0 0
  %425 = vmatprep.subr.bf16.mxu0 0
  %426 = vmatpush1.bf16.msra.mxu0 0
  %427 = vmatprep.subr.bf16.mxu0 0
  %428 = vmatpush1.bf16.msra.mxu0 0
  %429 = vmatprep.subr.bf16.mxu0 0
  %430 = vmatpush1.bf16.msra.mxu0 0
  %431 = vmatprep.subr.bf16.mxu0 0
  %432 = vmatpush1.bf16.msra.mxu0 0
  %433 = vmatprep.subr.bf16.mxu0 0
  %434 = vmatpush1.bf16.msra.mxu0 0
  %435 = vmatprep.subr.bf16.mxu0 0
  %436 = vmatpush1.bf16.msra.mxu0 0
  %437 = vmatprep.mubr.bf16.mxu0 0
  %438 = vmatmul.mubr.bf16.gmra.mrb[0].mxu0 %v149
  %v439 = vpop.f32.mrb[0].mxu0
  %v440 = vadd.f32 %v102, %v439
  %v441 = vpop.f32.mrb[0].mxu0
  %v442 = vadd.f32 %v106, %v441
  %v443 = vpop.f32.mrb[0].mxu0
  %v444 = vadd.f32 %v102, %v443
  %v445 = vpop.f32.mrb[0].mxu0
  %v446 = vadd.f32 %v106, %v445
  %447 = vmatprep.mubr.bf16.mxu0 0
  %448 = vmatmul.mubr.bf16.gmra.mrb[0].mxu0 %v152
  %v449 = vpop.f32.mrb[0].mxu0
  %v450 = vadd.f32 %v102, %v449
  %v451 = vpop.f32.mrb[0].mxu0
  %v452 = vadd.f32 %v106, %v451
  %v453 = vpop.f32.mrb[0].mxu0
  %v454 = vadd.f32 %v102, %v453
  %v455 = vpop.f32.mrb[0].mxu0
  %v456 = vadd.f32 %v106, %v455
  %457 = vmatprep.mubr.bf16.mxu0 0
  %458 = vmatmul.mubr.bf16.gmra.mrb[0].mxu0 %v155
  %v459 = vpop.f32.mrb[0].mxu0
  %v460 = vadd.f32 %v102, %v459
  %v461 = vpop.f32.mrb[0].mxu0
  %v462 = vadd.f32 %v106, %v461
  %v463 = vpop.f32.mrb[0].mxu0
  %v464 = vadd.f32 %v102, %v463
  %v465 = vpop.f32.mrb[0].mxu0
  %v466 = vadd.f32 %v106, %v465
  %467 = vmatprep.mubr.bf16.mxu0 0
  %468 = vmatmul.mubr.bf16.gmra.mrb[0].mxu0 %v158
  %v469 = vpop.f32.mrb[0].mxu0
  %v470 = vadd.f32 %v102, %v469
  %v471 = vpop.f32.mrb[0].mxu0
  %v472 = vadd.f32 %v106, %v471
  %v473 = vpop.f32.mrb[0].mxu0
  %v474 = vadd.f32 %v102, %v473
  %v475 = vpop.f32.mrb[0].mxu0
  %v476 = vadd.f32 %v106, %v475
  %477 = vmatprep.mubr.bf16.mxu0 0
  %478 = vmatmul.mubr.bf16.gmra.mrb[0].mxu0 %v161
  %v479 = vpop.f32.mrb[0].mxu0
  %v480 = vadd.f32 %v102, %v479
  %v481 = vpop.f32.mrb[0].mxu0
  %v482 = vadd.f32 %v106, %v481
  %v483 = vpop.f32.mrb[0].mxu0
  %v484 = vadd.f32 %v102, %v483
  %v485 = vpop.f32.mrb[0].mxu0
  %v486 = vadd.f32 %v106, %v485
  %487 = vmatprep.mubr.bf16.mxu0 0
  %488 = vmatmul.mubr.bf16.gmra.mrb[0].mxu0 %v164
  %v489 = vpop.f32.mrb[0].mxu0
  %v490 = vadd.f32 %v102, %v489
  %v491 = vpop.f32.mrb[0].mxu0
  %v492 = vadd.f32 %v106, %v491
  %v493 = vpop.f32.mrb[0].mxu0
  %v494 = vadd.f32 %v102, %v493
  %v495 = vpop.f32.mrb[0].mxu0
  %v496 = vadd.f32 %v106, %v495
  %497 = vmatprep.mubr.bf16.mxu0 0
  %498 = vmatmul.mubr.bf16.gmra.mrb[0].mxu0 %v167
  %v499 = vpop.f32.mrb[0].mxu0
  %v500 = vadd.f32 %v102, %v499
  %v501 = vpop.f32.mrb[0].mxu0
  %v502 = vadd.f32 %v106, %v501
  %v503 = vpop.f32.mrb[0].mxu0
  %v504 = vadd.f32 %v102, %v503
  %v505 = vpop.f32.mrb[0].mxu0
  %v506 = vadd.f32 %v106, %v505
  %507 = vmatprep.mubr.bf16.mxu0 0
  %508 = vmatmul.mubr.bf16.gmra.mrb[0].mxu0 %v170
  %v509 = vpop.f32.mrb[0].mxu0
  %v510 = vadd.f32 %v102, %v509
  %v511 = vpop.f32.mrb[0].mxu0
  %v512 = vadd.f32 %v106, %v511
  %v513 = vpop.f32.mrb[0].mxu0
  %v514 = vadd.f32 %v102, %v513
  %v515 = vpop.f32.mrb[0].mxu0
  %v516 = vadd.f32 %v106, %v515
  %517 = vmatprep.mubr.bf16.mxu0 0
  %518 = vmatmul.mubr.bf16.gmra.mrb[0].mxu0 %v173
  %v519 = vpop.f32.mrb[0].mxu0
  %v520 = vadd.f32 %v102, %v519
  %v521 = vpop.f32.mrb[0].mxu0
  %v522 = vadd.f32 %v106, %v521
  %v523 = vpop.f32.mrb[0].mxu0
  %v524 = vadd.f32 %v102, %v523
  %v525 = vpop.f32.mrb[0].mxu0
  %v526 = vadd.f32 %v106, %v525
  %527 = vmatprep.mubr.bf16.mxu0 0
  %528 = vmatmul.mubr.bf16.gmra.mrb[0].mxu0 %v176
  %v529 = vpop.f32.mrb[0].mxu0
  %v530 = vadd.f32 %v102, %v529
  %v531 = vpop.f32.mrb[0].mxu0
  %v532 = vadd.f32 %v106, %v531
  %v533 = vpop.f32.mrb[0].mxu0
  %v534 = vadd.f32 %v102, %v533
  %v535 = vpop.f32.mrb[0].mxu0
  %v536 = vadd.f32 %v106, %v535
  %537 = vmatprep.mubr.bf16.mxu0 0
  %538 = vmatmul.mubr.bf16.gmra.mrb[0].mxu0 %v179
  %v539 = vpop.f32.mrb[0].mxu0
  %v540 = vadd.f32 %v102, %v539
  %v541 = vpop.f32.mrb[0].mxu0
  %v542 = vadd.f32 %v106, %v541
  %v543 = vpop.f32.mrb[0].mxu0
  %v544 = vadd.f32 %v102, %v543
  %v545 = vpop.f32.mrb[0].mxu0
  %v546 = vadd.f32 %v106, %v545
  %547 = vmatprep.mubr.bf16.mxu0 0
  %548 = vmatmul.mubr.bf16.gmra.mrb[0].mxu0 %v182
  %v549 = vpop.f32.mrb[0].mxu0
  %v550 = vadd.f32 %v102, %v549
  %v551 = vpop.f32.mrb[0].mxu0
  %v552 = vadd.f32 %v106, %v551
  %v553 = vpop.f32.mrb[0].mxu0
  %v554 = vadd.f32 %v102, %v553
  %v555 = vpop.f32.mrb[0].mxu0
  %v556 = vadd.f32 %v106, %v555
  %557 = vmatprep.mubr.bf16.mxu0 0
  %558 = vmatmul.mubr.bf16.gmra.mrb[0].mxu0 %v185
  %v559 = vpop.f32.mrb[0].mxu0
  %v560 = vadd.f32 %v102, %v559
  %v561 = vpop.f32.mrb[0].mxu0
  %v562 = vadd.f32 %v106, %v561
  %v563 = vpop.f32.mrb[0].mxu0
  %v564 = vadd.f32 %v102, %v563
  %v565 = vpop.f32.mrb[0].mxu0
  %v566 = vadd.f32 %v106, %v565
  %567 = vmatprep.mubr.bf16.mxu0 0
  %568 = vmatmul.mubr.bf16.gmra.mrb[0].mxu0 %v188
  %v569 = vpop.f32.mrb[0].mxu0
  %v570 = vadd.f32 %v102, %v569
  %v571 = vpop.f32.mrb[0].mxu0
  %v572 = vadd.f32 %v106, %v571
  %v573 = vpop.f32.mrb[0].mxu0
  %v574 = vadd.f32 %v102, %v573
  %v575 = vpop.f32.mrb[0].mxu0
  %v576 = vadd.f32 %v106, %v575
  %577 = vmatprep.mubr.bf16.mxu0 0
  %578 = vmatmul.mubr.bf16.gmra.mrb[0].mxu0 %v191
  %v579 = vpop.f32.mrb[0].mxu0
  %v580 = vadd.f32 %v102, %v579
  %v581 = vpop.f32.mrb[0].mxu0
  %v582 = vadd.f32 %v106, %v581
  %v583 = vpop.f32.mrb[0].mxu0
  %v584 = vadd.f32 %v102, %v583
  %v585 = vpop.f32.mrb[0].mxu0
  %v586 = vadd.f32 %v106, %v585
  %587 = vmatprep.mubr.bf16.mxu0 0
  %588 = vmatmul.mubr.bf16.gmra.mrb[0].mxu0 %v194
  %v589 = vpop.f32.mrb[0].mxu0
  %v590 = vadd.f32 %v102, %v589
  %v591 = vpop.f32.mrb[0].mxu0
  %v592 = vadd.f32 %v106, %v591
  %v593 = vpop.f32.mrb[0].mxu0
  %v594 = vadd.f32 %v102, %v593
  %v595 = vpop.f32.mrb[0].mxu0
  %v596 = vadd.f32 %v106, %v595
  %597 = vdwg.mxu0
  %598 = vst [vmem:[#allocation2] sm:$0xff] %v247
  %599 = vst [vmem:[#allocation2 + $0x8] sm:$0xff] %v249
  %600 = vst [vmem:[#allocation2 + $0x10] sm:$0xff] %v440
  %601 = vst [vmem:[#allocation2 + $0x18] sm:$0xff] %v442
  %602 = vst [vmem:[#allocation2 + $0x20] sm:$0xff] %v251
  %603 = vst [vmem:[#allocation2 + $0x28] sm:$0xff] %v253
  %604 = vst [vmem:[#allocation2 + $0x30] sm:$0xff] %v444
  %605 = vst [vmem:[#allocation2 + $0x38] sm:$0xff] %v446
  %606 = vst [vmem:[#allocation2 + $0x40] sm:$0xff] %v257
  %607 = vst [vmem:[#allocation2 + $0x48] sm:$0xff] %v259
  %608 = vst [vmem:[#allocation2 + $0x50] sm:$0xff] %v450
  %609 = vst [vmem:[#allocation2 + $0x58] sm:$0xff] %v452
  %610 = vst [vmem:[#allocation2 + $0x60] sm:$0xff] %v261
  %611 = vst [vmem:[#allocation2 + $0x68] sm:$0xff] %v263
  %612 = vst [vmem:[#allocation2 + $0x70] sm:$0xff] %v454
  %613 = vst [vmem:[#allocation2 + $0x78] sm:$0xff] %v456
  %614 = vst [vmem:[#allocation2 + $0x80] sm:$0xff] %v267
  %615 = vst [vmem:[#allocation2 + $0x88] sm:$0xff] %v269
  %616 = vst [vmem:[#allocation2 + $0x90] sm:$0xff] %v460
  %617 = vst [vmem:[#allocation2 + $0x98] sm:$0xff] %v462
  %618 = vst [vmem:[#allocation2 + $0xa0] sm:$0xff] %v271
  %619 = vst [vmem:[#allocation2 + $0xa8] sm:$0xff] %v273
  %620 = vst [vmem:[#allocation2 + $0xb0] sm:$0xff] %v464
  %621 = vst [vmem:[#allocation2 + $0xb8] sm:$0xff] %v466
  %622 = vst [vmem:[#allocation2 + $0xc0] sm:$0xff] %v277
  %623 = vst [vmem:[#allocation2 + $0xc8] sm:$0xff] %v279
  %624 = vst [vmem:[#allocation2 + $0xd0] sm:$0xff] %v470
  %625 = vst [vmem:[#allocation2 + $0xd8] sm:$0xff] %v472
  %626 = vst [vmem:[#allocation2 + $0xe0] sm:$0xff] %v281
  %627 = vst [vmem:[#allocation2 + $0xe8] sm:$0xff] %v283
  %628 = vst [vmem:[#allocation2 + $0xf0] sm:$0xff] %v474
  %629 = vst [vmem:[#allocation2 + $0xf8] sm:$0xff] %v476
  %630 = vst [vmem:[#allocation2 + $0x100] sm:$0xff] %v287
  %631 = vst [vmem:[#allocation2 + $0x108] sm:$0xff] %v289
  %632 = vst [vmem:[#allocation2 + $0x110] sm:$0xff] %v480
  %633 = vst [vmem:[#allocation2 + $0x118] sm:$0xff] %v482
  %634 = vst [vmem:[#allocation2 + $0x120] sm:$0xff] %v291
  %635 = vst [vmem:[#allocation2 + $0x128] sm:$0xff] %v293
  %636 = vst [vmem:[#allocation2 + $0x130] sm:$0xff] %v484
  %637 = vst [vmem:[#allocation2 + $0x138] sm:$0xff] %v486
  %638 = vst [vmem:[#allocation2 + $0x140] sm:$0xff] %v297
  %639 = vst [vmem:[#allocation2 + $0x148] sm:$0xff] %v299
  %640 = vst [vmem:[#allocation2 + $0x150] sm:$0xff] %v490
  %641 = vst [vmem:[#allocation2 + $0x158] sm:$0xff] %v492
  %642 = vst [vmem:[#allocation2 + $0x160] sm:$0xff] %v301
  %643 = vst [vmem:[#allocation2 + $0x168] sm:$0xff] %v303
  %644 = vst [vmem:[#allocation2 + $0x170] sm:$0xff] %v494
  %645 = vst [vmem:[#allocation2 + $0x178] sm:$0xff] %v496
  %646 = vst [vmem:[#allocation2 + $0x180] sm:$0xff] %v307
  %647 = vst [vmem:[#allocation2 + $0x188] sm:$0xff] %v309
  %648 = vst [vmem:[#allocation2 + $0x190] sm:$0xff] %v500
  %649 = vst [vmem:[#allocation2 + $0x198] sm:$0xff] %v502
  %650 = vst [vmem:[#allocation2 + $0x1a0] sm:$0xff] %v311
  %651 = vst [vmem:[#allocation2 + $0x1a8] sm:$0xff] %v313
  %652 = vst [vmem:[#allocation2 + $0x1b0] sm:$0xff] %v504
  %653 = vst [vmem:[#allocation2 + $0x1b8] sm:$0xff] %v506
  %654 = vst [vmem:[#allocation2 + $0x1c0] sm:$0xff] %v317
  %655 = vst [vmem:[#allocation2 + $0x1c8] sm:$0xff] %v319
  %656 = vst [vmem:[#allocation2 + $0x1d0] sm:$0xff] %v510
  %657 = vst [vmem:[#allocation2 + $0x1d8] sm:$0xff] %v512
  %658 = vst [vmem:[#allocation2 + $0x1e0] sm:$0xff] %v321
  %659 = vst [vmem:[#allocation2 + $0x1e8] sm:$0xff] %v323
  %660 = vst [vmem:[#allocation2 + $0x1f0] sm:$0xff] %v514
  %661 = vst [vmem:[#allocation2 + $0x1f8] sm:$0xff] %v516
  %662 = vst [vmem:[#allocation2 + $0x200] sm:$0xff] %v327
  %663 = vst [vmem:[#allocation2 + $0x208] sm:$0xff] %v329
  %664 = vst [vmem:[#allocation2 + $0x210] sm:$0xff] %v520
  %665 = vst [vmem:[#allocation2 + $0x218] sm:$0xff] %v522
  %666 = vst [vmem:[#allocation2 + $0x220] sm:$0xff] %v331
  %667 = vst [vmem:[#allocation2 + $0x228] sm:$0xff] %v333
  %668 = vst [vmem:[#allocation2 + $0x230] sm:$0xff] %v524
  %669 = vst [vmem:[#allocation2 + $0x238] sm:$0xff] %v526
  %670 = vst [vmem:[#allocation2 + $0x240] sm:$0xff] %v337
  %671 = vst [vmem:[#allocation2 + $0x248] sm:$0xff] %v339
  %672 = vst [vmem:[#allocation2 + $0x250] sm:$0xff] %v530
  %673 = vst [vmem:[#allocation2 + $0x258] sm:$0xff] %v532
  %674 = vst [vmem:[#allocation2 + $0x260] sm:$0xff] %v341
  %675 = vst [vmem:[#allocation2 + $0x268] sm:$0xff] %v343
  %676 = vst [vmem:[#allocation2 + $0x270] sm:$0xff] %v534
  %677 = vst [vmem:[#allocation2 + $0x278] sm:$0xff] %v536
  %678 = vst [vmem:[#allocation2 + $0x280] sm:$0xff] %v347
  %679 = vst [vmem:[#allocation2 + $0x288] sm:$0xff] %v349
  %680 = vst [vmem:[#allocation2 + $0x290] sm:$0xff] %v540
  %681 = vst [vmem:[#allocation2 + $0x298] sm:$0xff] %v542
  %682 = vst [vmem:[#allocation2 + $0x2a0] sm:$0xff] %v351
  %683 = vst [vmem:[#allocation2 + $0x2a8] sm:$0xff] %v353
  %684 = vst [vmem:[#allocation2 + $0x2b0] sm:$0xff] %v544
  %685 = vst [vmem:[#allocation2 + $0x2b8] sm:$0xff] %v546
  %686 = vst [vmem:[#allocation2 + $0x2c0] sm:$0xff] %v357
  %687 = vst [vmem:[#allocation2 + $0x2c8] sm:$0xff] %v359
  %688 = vst [vmem:[#allocation2 + $0x2d0] sm:$0xff] %v550
  %689 = vst [vmem:[#allocation2 + $0x2d8] sm:$0xff] %v552
  %690 = vst [vmem:[#allocation2 + $0x2e0] sm:$0xff] %v361
  %691 = vst [vmem:[#allocation2 + $0x2e8] sm:$0xff] %v363
  %692 = vst [vmem:[#allocation2 + $0x2f0] sm:$0xff] %v554
  %693 = vst [vmem:[#allocation2 + $0x2f8] sm:$0xff] %v556
  %694 = vst [vmem:[#allocation2 + $0x300] sm:$0xff] %v367
  %695 = vst [vmem:[#allocation2 + $0x308] sm:$0xff] %v369
  %696 = vst [vmem:[#allocation2 + $0x310] sm:$0xff] %v560
  %697 = vst [vmem:[#allocation2 + $0x318] sm:$0xff] %v562
  %698 = vst [vmem:[#allocation2 + $0x320] sm:$0xff] %v371
  %699 = vst [vmem:[#allocation2 + $0x328] sm:$0xff] %v373
  %700 = vst [vmem:[#allocation2 + $0x330] sm:$0xff] %v564
  %701 = vst [vmem:[#allocation2 + $0x338] sm:$0xff] %v566
  %702 = vst [vmem:[#allocation2 + $0x340] sm:$0xff] %v377
  %703 = vst [vmem:[#allocation2 + $0x348] sm:$0xff] %v379
  %704 = vst [vmem:[#allocation2 + $0x350] sm:$0xff] %v570
  %705 = vst [vmem:[#allocation2 + $0x358] sm:$0xff] %v572
  %706 = vst [vmem:[#allocation2 + $0x360] sm:$0xff] %v381
  %707 = vst [vmem:[#allocation2 + $0x368] sm:$0xff] %v383
  %708 = vst [vmem:[#allocation2 + $0x370] sm:$0xff] %v574
  %709 = vst [vmem:[#allocation2 + $0x378] sm:$0xff] %v576
  %710 = vst [vmem:[#allocation2 + $0x380] sm:$0xff] %v387
  %711 = vst [vmem:[#allocation2 + $0x388] sm:$0xff] %v389
  %712 = vst [vmem:[#allocation2 + $0x390] sm:$0xff] %v580
  %713 = vst [vmem:[#allocation2 + $0x398] sm:$0xff] %v582
  %714 = vst [vmem:[#allocation2 + $0x3a0] sm:$0xff] %v391
  %715 = vst [vmem:[#allocation2 + $0x3a8] sm:$0xff] %v393
  %716 = vst [vmem:[#allocation2 + $0x3b0] sm:$0xff] %v584
  %717 = vst [vmem:[#allocation2 + $0x3b8] sm:$0xff] %v586
  %718 = vst [vmem:[#allocation2 + $0x3c0] sm:$0xff] %v397
  %719 = vst [vmem:[#allocation2 + $0x3c8] sm:$0xff] %v399
  %720 = vst [vmem:[#allocation2 + $0x3d0] sm:$0xff] %v590
  %721 = vst [vmem:[#allocation2 + $0x3d8] sm:$0xff] %v592
  %722 = vst [vmem:[#allocation2 + $0x3e0] sm:$0xff] %v401
  %723 = vst [vmem:[#allocation2 + $0x3e8] sm:$0xff] %v403
  %724 = vst [vmem:[#allocation2 + $0x3f0] sm:$0xff] %v594
  %725 = vst [vmem:[#allocation2 + $0x3f8] sm:$0xff] %v596
  %v726 = vld [vmem:[%s4] sm:$0xff]
  %v727 = vld [vmem:[%s4 + $0x8] sm:$0xff]
  %v728 = vld [vmem:[%s4 + $0x10] sm:$0xff]
  %v729 = vld [vmem:[%s4 + $0x18] sm:$0xff]
  %v730 = vld [vmem:[%s4 + $0x20] sm:$0xff]
  %v731 = vld [vmem:[%s4 + $0x28] sm:$0xff]
  %v732 = vld [vmem:[%s4 + $0x30] sm:$0xff]
  %v733 = vld [vmem:[%s4 + $0x38] sm:$0xff]
  %v734 = vld [vmem:[%s4 + $0x40] sm:$0xff]
  %v735 = vld [vmem:[%s4 + $0x48] sm:$0xff]
  %v736 = vld [vmem:[%s4 + $0x50] sm:$0xff]
  %v737 = vld [vmem:[%s4 + $0x58] sm:$0xff]
  %v738 = vld [vmem:[%s4 + $0x60] sm:$0xff]
  %v739 = vld [vmem:[%s4 + $0x68] sm:$0xff]
  %v740 = vld [vmem:[%s4 + $0x70] sm:$0xff]
  %v741 = vld [vmem:[%s4 + $0x78] sm:$0xff]
  %v742 = vld [vmem:[%s4 + $0x80] sm:$0xff]
  %v743 = vld [vmem:[%s4 + $0x88] sm:$0xff]
  %v744 = vld [vmem:[%s4 + $0x90] sm:$0xff]
  %v745 = vld [vmem:[%s4 + $0x98] sm:$0xff]
  %v746 = vld [vmem:[%s4 + $0xa0] sm:$0xff]
  %v747 = vld [vmem:[%s4 + $0xa8] sm:$0xff]
  %v748 = vld [vmem:[%s4 + $0xb0] sm:$0xff]
  %v749 = vld [vmem:[%s4 + $0xb8] sm:$0xff]
  %v750 = vld [vmem:[%s4 + $0xc0] sm:$0xff]
  %v751 = vld [vmem:[%s4 + $0xc8] sm:$0xff]
  %v752 = vld [vmem:[%s4 + $0xd0] sm:$0xff]
  %v753 = vld [vmem:[%s4 + $0xd8] sm:$0xff]
  %v754 = vld [vmem:[%s4 + $0xe0] sm:$0xff]
  %v755 = vld [vmem:[%s4 + $0xe8] sm:$0xff]
  %v756 = vld [vmem:[%s4 + $0xf0] sm:$0xff]
  %v757 = vld [vmem:[%s4 + $0xf8] sm:$0xff]
  %v758 = vld [vmem:[%s1] sm:$0xff]
  %v759 = vld [vmem:[%s1 + $0x8] sm:$0xff]
  %v760 = vld [vmem:[%s1 + $0x10] sm:$0xff]
  %v761 = vld [vmem:[%s1 + $0x18] sm:$0xff]
  %v762 = vld [vmem:[%s2] sm:$0xff]
  %v763 = vld [vmem:[%s2 + $0x8] sm:$0xff]
  %v764 = vld [vmem:[%s2 + $0x10] sm:$0xff]
  %v765 = vld [vmem:[%s2 + $0x18] sm:$0xff]
  %s766 = smul.u32 0, 4
  %s767 = smul.addr %s766, 8
  %s768 = scalar_lea.vmem [#allocation2], %s767
  %v769 = vld [vmem:[%s768] sm:$0xff]
  %v770 = vld [vmem:[%s768 + $0x8] sm:$0xff]
  %v771 = vld [vmem:[%s768 + $0x10] sm:$0xff]
  %v772 = vld [vmem:[%s768 + $0x18] sm:$0xff]
  %v773 = vld [vmem:[%s768 + $0x20] sm:$0xff]
  %v774 = vld [vmem:[%s768 + $0x28] sm:$0xff]
  %v775 = vld [vmem:[%s768 + $0x30] sm:$0xff]
  %v776 = vld [vmem:[%s768 + $0x38] sm:$0xff]
  %v777 = vld [vmem:[%s768 + $0x40] sm:$0xff]
  %v778 = vld [vmem:[%s768 + $0x48] sm:$0xff]
  %v779 = vld [vmem:[%s768 + $0x50] sm:$0xff]
  %v780 = vld [vmem:[%s768 + $0x58] sm:$0xff]
  %v781 = vld [vmem:[%s768 + $0x60] sm:$0xff]
  %v782 = vld [vmem:[%s768 + $0x68] sm:$0xff]
  %v783 = vld [vmem:[%s768 + $0x70] sm:$0xff]
  %v784 = vld [vmem:[%s768 + $0x78] sm:$0xff]
  %v785 = vpack.c.bf16 %v759, %v758
  %v786 = vpack.c.bf16 %v761, %v760
  %v819 = vunpack.c.l.b16 %v726
  %v820 = vunpack.c.h.b16 %v726
  %v821 = vunpack.c.l.b16 %v727
  %v822 = vunpack.c.h.b16 %v727
  %v823 = vunpack.c.l.b16 %v728
  %v824 = vunpack.c.h.b16 %v728
  %v825 = vunpack.c.l.b16 %v729
  %v826 = vunpack.c.h.b16 %v729
  %v827 = vunpack.c.l.b16 %v730
  %v828 = vunpack.c.h.b16 %v730
  %v829 = vunpack.c.l.b16 %v731
  %v830 = vunpack.c.h.b16 %v731
  %v831 = vunpack.c.l.b16 %v732
  %v832 = vunpack.c.h.b16 %v732
  %v833 = vunpack.c.l.b16 %v733
  %v834 = vunpack.c.h.b16 %v733
  %v835 = vunpack.c.l.b16 %v734
  %v836 = vunpack.c.h.b16 %v734
  %v837 = vunpack.c.l.b16 %v735
  %v838 = vunpack.c.h.b16 %v735
  %v839 = vunpack.c.l.b16 %v736
  %v840 = vunpack.c.h.b16 %v736
  %v841 = vunpack.c.l.b16 %v737
  %v842 = vunpack.c.h.b16 %v737
  %v843 = vunpack.c.l.b16 %v738
  %v844 = vunpack.c.h.b16 %v738
  %v845 = vunpack.c.l.b16 %v739
  %v846 = vunpack.c.h.b16 %v739
  %v847 = vunpack.c.l.b16 %v740
  %v848 = vunpack.c.h.b16 %v740
  %v849 = vunpack.c.l.b16 %v741
  %v850 = vunpack.c.h.b16 %v741
  %v851 = vunpack.c.l.b16 %v742
  %v852 = vunpack.c.h.b16 %v742
  %v853 = vunpack.c.l.b16 %v743
  %v854 = vunpack.c.h.b16 %v743
  %v855 = vunpack.c.l.b16 %v744
  %v856 = vunpack.c.h.b16 %v744
  %v857 = vunpack.c.l.b16 %v745
  %v858 = vunpack.c.h.b16 %v745
  %v859 = vunpack.c.l.b16 %v746
  %v860 = vunpack.c.h.b16 %v746
  %v861 = vunpack.c.l.b16 %v747
  %v862 = vunpack.c.h.b16 %v747
  %v863 = vunpack.c.l.b16 %v748
  %v864 = vunpack.c.h.b16 %v748
  %v865 = vunpack.c.l.b16 %v749
  %v866 = vunpack.c.h.b16 %v749
  %v867 = vunpack.c.l.b16 %v750
  %v868 = vunpack.c.h.b16 %v750
  %v869 = vunpack.c.l.b16 %v751
  %v870 = vunpack.c.h.b16 %v751
  %v871 = vunpack.c.l.b16 %v752
  %v872 = vunpack.c.h.b16 %v752
  %v873 = vunpack.c.l.b16 %v753
  %v874 = vunpack.c.h.b16 %v753
  %v875 = vunpack.c.l.b16 %v754
  %v876 = vunpack.c.h.b16 %v754
  %v877 = vunpack.c.l.b16 %v755
  %v878 = vunpack.c.h.b16 %v755
  %v879 = vunpack.c.l.b16 %v756
  %v880 = vunpack.c.h.b16 %v756
  %v881 = vunpack.c.l.b16 %v757
  %v882 = vunpack.c.h.b16 %v757
  %v883 = vpack.c.b16 %v823, %v819
  %v884 = vpack.c.b16 %v824, %v820
  %v885 = vpack.c.b16 %v825, %v821
  %v886 = vpack.c.b16 %v826, %v822
  %v887 = vpack.c.b16 %v831, %v827
  %v888 = vpack.c.b16 %v832, %v828
  %v889 = vpack.c.b16 %v833, %v829
  %v890 = vpack.c.b16 %v834, %v830
  %v891 = vpack.c.b16 %v839, %v835
  %v892 = vpack.c.b16 %v840, %v836
  %v893 = vpack.c.b16 %v841, %v837
  %v894 = vpack.c.b16 %v842, %v838
  %v895 = vpack.c.b16 %v847, %v843
  %v896 = vpack.c.b16 %v848, %v844
  %v897 = vpack.c.b16 %v849, %v845
  %v898 = vpack.c.b16 %v850, %v846
  %v899 = vpack.c.b16 %v855, %v851
  %v900 = vpack.c.b16 %v856, %v852
  %v901 = vpack.c.b16 %v857, %v853
  %v902 = vpack.c.b16 %v858, %v854
  %v903 = vpack.c.b16 %v863, %v859
  %v904 = vpack.c.b16 %v864, %v860
  %v905 = vpack.c.b16 %v865, %v861
  %v906 = vpack.c.b16 %v866, %v862
  %v907 = vpack.c.b16 %v871, %v867
  %v908 = vpack.c.b16 %v872, %v868
  %v909 = vpack.c.b16 %v873, %v869
  %v910 = vpack.c.b16 %v874, %v870
  %v911 = vpack.c.b16 %v879, %v875
  %v912 = vpack.c.b16 %v880, %v876
  %v913 = vpack.c.b16 %v881, %v877
  %v914 = vpack.c.b16 %v882, %v878
  %947 = vmatprep.subr.bf16.mxu0 %v884
  %948 = vmatpush1.bf16.msra.mxu0 %v883
  %949 = vmatprep.subr.bf16.mxu0 %v888
  %950 = vmatpush1.bf16.msra.mxu0 %v887
  %951 = vmatprep.subr.bf16.mxu0 %v892
  %952 = vmatpush1.bf16.msra.mxu0 %v891
  %953 = vmatprep.subr.bf16.mxu0 %v896
  %954 = vmatpush1.bf16.msra.mxu0 %v895
  %955 = vmatprep.subr.bf16.mxu0 %v900
  %956 = vmatpush1.bf16.msra.mxu0 %v899
  %957 = vmatprep.subr.bf16.mxu0 %v904
  %958 = vmatpush1.bf16.msra.mxu0 %v903
  %959 = vmatprep.subr.bf16.mxu0 %v908
  %960 = vmatpush1.bf16.msra.mxu0 %v907
  %961 = vmatprep.subr.bf16.mxu0 %v912
  %962 = vmatpush1.bf16.msra.mxu0 %v911
  %963 = vmatprep.subr.bf16.mxu0 0
  %964 = vmatpush1.bf16.msra.mxu0 0
  %965 = vmatprep.subr.bf16.mxu0 0
  %966 = vmatpush1.bf16.msra.mxu0 0
  %967 = vmatprep.subr.bf16.mxu0 0
  %968 = vmatpush1.bf16.msra.mxu0 0
  %969 = vmatprep.subr.bf16.mxu0 0
  %970 = vmatpush1.bf16.msra.mxu0 0
  %971 = vmatprep.subr.bf16.mxu0 0
  %972 = vmatpush1.bf16.msra.mxu0 0
  %973 = vmatprep.subr.bf16.mxu0 0
  %974 = vmatpush1.bf16.msra.mxu0 0
  %975 = vmatprep.subr.bf16.mxu0 0
  %976 = vmatpush1.bf16.msra.mxu0 0
  %977 = vmatprep.subr.bf16.mxu0 0
  %978 = vmatpush1.bf16.msra.mxu0 0
  %979 = vmatprep.mubr.bf16.mxu0 0
  %980 = vmatmul.mubr.bf16.gmra.mrb[0].mxu0 %v785
  %v981 = vpop.f32.mrb[0].mxu0
  %v982 = vadd.f32 0.0, %v981
  %v983 = vpop.f32.mrb[0].mxu0
  %v984 = vadd.f32 0.0, %v983
  %v985 = vpop.f32.mrb[0].mxu0
  %v986 = vadd.f32 0.0, %v985
  %v987 = vpop.f32.mrb[0].mxu0
  %v988 = vadd.f32 0.0, %v987
  %989 = vmatprep.mubr.bf16.mxu0 0
  %990 = vmatmul.mubr.bf16.gmra.mrb[0].mxu0 %v786
  %v991 = vpop.f32.mrb[0].mxu0
  %v992 = vadd.f32 0.0, %v991
  %v993 = vpop.f32.mrb[0].mxu0
  %v994 = vadd.f32 0.0, %v993
  %v995 = vpop.f32.mrb[0].mxu0
  %v996 = vadd.f32 0.0, %v995
  %v997 = vpop.f32.mrb[0].mxu0
  %v998 = vadd.f32 0.0, %v997
  %999 = vdwg.mxu0
  %1000 = vmatprep.subr.bf16.mxu0 %v886
  %1001 = vmatpush1.bf16.msra.mxu0 %v885
  %1002 = vmatprep.subr.bf16.mxu0 %v890
  %1003 = vmatpush1.bf16.msra.mxu0 %v889
  %1004 = vmatprep.subr.bf16.mxu0 %v894
  %1005 = vmatpush1.bf16.msra.mxu0 %v893
  %1006 = vmatprep.subr.bf16.mxu0 %v898
  %1007 = vmatpush1.bf16.msra.mxu0 %v897
  %1008 = vmatprep.subr.bf16.mxu0 %v902
  %1009 = vmatpush1.bf16.msra.mxu0 %v901
  %1010 = vmatprep.subr.bf16.mxu0 %v906
  %1011 = vmatpush1.bf16.msra.mxu0 %v905
  %1012 = vmatprep.subr.bf16.mxu0 %v910
  %1013 = vmatpush1.bf16.msra.mxu0 %v909
  %1014 = vmatprep.subr.bf16.mxu0 %v914
  %1015 = vmatpush1.bf16.msra.mxu0 %v913
  %1016 = vmatprep.subr.bf16.mxu0 0
  %1017 = vmatpush1.bf16.msra.mxu0 0
  %1018 = vmatprep.subr.bf16.mxu0 0
  %1019 = vmatpush1.bf16.msra.mxu0 0
  %1020 = vmatprep.subr.bf16.mxu0 0
  %1021 = vmatpush1.bf16.msra.mxu0 0
  %1022 = vmatprep.subr.bf16.mxu0 0
  %1023 = vmatpush1.bf16.msra.mxu0 0
  %1024 = vmatprep.subr.bf16.mxu0 0
  %1025 = vmatpush1.bf16.msra.mxu0 0
  %1026 = vmatprep.subr.bf16.mxu0 0
  %1027 = vmatpush1.bf16.msra.mxu0 0
  %1028 = vmatprep.subr.bf16.mxu0 0
  %1029 = vmatpush1.bf16.msra.mxu0 0
  %1030 = vmatprep.subr.bf16.mxu0 0
  %1031 = vmatpush1.bf16.msra.mxu0 0
  %1032 = vmatprep.mubr.bf16.mxu0 0
  %1033 = vmatmul.mubr.bf16.gmra.mrb[0].mxu0 %v785
  %v1034 = vpop.f32.mrb[0].mxu0
  %v1035 = vadd.f32 0.0, %v1034
  %v1036 = vpop.f32.mrb[0].mxu0
  %v1037 = vadd.f32 0.0, %v1036
  %v1038 = vpop.f32.mrb[0].mxu0
  %v1039 = vadd.f32 0.0, %v1038
  %v1040 = vpop.f32.mrb[0].mxu0
  %v1041 = vadd.f32 0.0, %v1040
  %1042 = vmatprep.mubr.bf16.mxu0 0
  %1043 = vmatmul.mubr.bf16.gmra.mrb[0].mxu0 %v786
  %v1044 = vpop.f32.mrb[0].mxu0
  %v1045 = vadd.f32 0.0, %v1044
  %v1046 = vpop.f32.mrb[0].mxu0
  %v1047 = vadd.f32 0.0, %v1046
  %v1048 = vpop.f32.mrb[0].mxu0
  %v1049 = vadd.f32 0.0, %v1048
  %v1050 = vpop.f32.mrb[0].mxu0
  %v1051 = vadd.f32 0.0, %v1050
  %1052 = vdwg.mxu0
  %v1053 = vadd.f32 %v769, %v982
  %v1054 = vadd.f32 %v770, %v984
  %v1055 = vadd.f32 %v771, %v1035
  %v1056 = vadd.f32 %v772, %v1037
  %v1057 = vadd.f32 %v773, %v986
  %v1058 = vadd.f32 %v774, %v988
  %v1059 = vadd.f32 %v775, %v1039
  %v1060 = vadd.f32 %v776, %v1041
  %v1061 = vadd.f32 %v777, %v992
  %v1062 = vadd.f32 %v778, %v994
  %v1063 = vadd.f32 %v779, %v1045
  %v1064 = vadd.f32 %v780, %v1047
  %v1065 = vadd.f32 %v781, %v996
  %v1066 = vadd.f32 %v782, %v998
  %v1067 = vadd.f32 %v783, %v1049
  %v1068 = vadd.f32 %v784, %v1051
  %v1069 = vmul.f32 %v1053, 0.5
  %v1070 = vmul.f32 %v1057, 0.5
  %v1071 = vmul.f32 %v1061, 0.5
  %v1072 = vmul.f32 %v1065, 0.5
  %v1073 = vtanh.pop %v1069
  %v1074 = vtanh.pop %v1070
  %v1075 = vtanh.pop %v1071
  %v1076 = vtanh.pop %v1072
  %v1077 = vmul.f32 %v1073, 0.5
  %v1078 = vmul.f32 %v1074, 0.5
  %v1079 = vmul.f32 %v1075, 0.5
  %v1080 = vmul.f32 %v1076, 0.5
  %v1081 = vadd.f32 %v1077, 0.5
  %v1082 = vadd.f32 %v1078, 0.5
  %v1083 = vadd.f32 %v1079, 0.5
  %v1084 = vadd.f32 %v1080, 0.5
  %v1085 = vmul.f32 %v1054, 0.5
  %v1086 = vmul.f32 %v1058, 0.5
  %v1087 = vmul.f32 %v1062, 0.5
  %v1088 = vmul.f32 %v1066, 0.5
  %v1089 = vtanh.pop %v1085
  %v1090 = vtanh.pop %v1086
  %v1091 = vtanh.pop %v1087
  %v1092 = vtanh.pop %v1088
  %v1093 = vmul.f32 %v1089, 0.5
  %v1094 = vmul.f32 %v1090, 0.5
  %v1095 = vmul.f32 %v1091, 0.5
  %v1096 = vmul.f32 %v1092, 0.5
  %v1097 = vadd.f32 %v1093, 0.5
  %v1098 = vadd.f32 %v1094, 0.5
  %v1099 = vadd.f32 %v1095, 0.5
  %v1100 = vadd.f32 %v1096, 0.5
  %v1101 = vtanh.pop %v1055
  %v1102 = vtanh.pop %v1059
  %v1103 = vtanh.pop %v1063
  %v1104 = vtanh.pop %v1067
  %v1105 = vmul.f32 %v1056, 0.5
  %v1106 = vmul.f32 %v1060, 0.5
  %v1107 = vmul.f32 %v1064, 0.5
  %v1108 = vmul.f32 %v1068, 0.5
  %v1109 = vtanh.pop %v1105
  %v1110 = vtanh.pop %v1106
  %v1111 = vtanh.pop %v1107
  %v1112 = vtanh.pop %v1108
  %v1113 = vmul.f32 %v1109, 0.5
  %v1114 = vmul.f32 %v1110, 0.5
  %v1115 = vmul.f32 %v1111, 0.5
  %v1116 = vmul.f32 %v1112, 0.5
  %v1117 = vadd.f32 %v1113, 0.5
  %v1118 = vadd.f32 %v1114, 0.5
  %v1119 = vadd.f32 %v1115, 0.5
  %v1120 = vadd.f32 %v1116, 0.5
  %v1121 = vmul.f32 %v1097, %v762
  %v1122 = vmul.f32 %v1098, %v763
  %v1123 = vmul.f32 %v1099, %v764
  %v1124 = vmul.f32 %v1100, %v765
  %v1125 = vmul.f32 %v1081, %v1101
  %v1126 = vmul.f32 %v1082, %v1102
  %v1127 = vmul.f32 %v1083, %v1103
  %v1128 = vmul.f32 %v1084, %v1104
  %v1129 = vadd.f32 %v1121, %v1125
  %v1130 = vadd.f32 %v1122, %v1126
  %v1131 = vadd.f32 %v1123, %v1127
  %v1132 = vadd.f32 %v1124, %v1128
  %v1133 = vtanh.pop %v1129
  %v1134 = vtanh.pop %v1130
  %v1135 = vtanh.pop %v1131
  %v1136 = vtanh.pop %v1132
  %v1137 = vmul.f32 %v1117, %v1133
  %v1138 = vmul.f32 %v1118, %v1134
  %v1139 = vmul.f32 %v1119, %v1135
  %v1140 = vmul.f32 %v1120, %v1136
  %v1141 = vpack.c.bf16 %v1138, %v1137
  %v1142 = vpack.c.bf16 %v1140, %v1139
  %1143 = vst [vmem:[#allocation3] sm:$0xff] %v1141
  %1144 = vst [vmem:[#allocation3 + $0x8] sm:$0xff] %v1142
  %s1145 = smul.u32 4, 4
  %s1146 = smul.addr %s1145, 8
  %s1147 = scalar_lea.vmem [#allocation2], %s1146
  %v1148 = vld [vmem:[%s1147] sm:$0xff]
  %v1149 = vld [vmem:[%s1147 + $0x8] sm:$0xff]
  %v1150 = vld [vmem:[%s1147 + $0x10] sm:$0xff]
  %v1151 = vld [vmem:[%s1147 + $0x18] sm:$0xff]
  %v1152 = vld [vmem:[%s1147 + $0x20] sm:$0xff]
  %v1153 = vld [vmem:[%s1147 + $0x28] sm:$0xff]
  %v1154 = vld [vmem:[%s1147 + $0x30] sm:$0xff]
  %v1155 = vld [vmem:[%s1147 + $0x38] sm:$0xff]
  %v1156 = vld [vmem:[%s1147 + $0x40] sm:$0xff]
  %v1157 = vld [vmem:[%s1147 + $0x48] sm:$0xff]
  %v1158 = vld [vmem:[%s1147 + $0x50] sm:$0xff]
  %v1159 = vld [vmem:[%s1147 + $0x58] sm:$0xff]
  %v1160 = vld [vmem:[%s1147 + $0x60] sm:$0xff]
  %v1161 = vld [vmem:[%s1147 + $0x68] sm:$0xff]
  %v1162 = vld [vmem:[%s1147 + $0x70] sm:$0xff]
  %v1163 = vld [vmem:[%s1147 + $0x78] sm:$0xff]
  %1164 = vmatprep.subr.bf16.mxu0 %v884
  %1165 = vmatpush1.bf16.msra.mxu0 %v883
  %1166 = vmatprep.subr.bf16.mxu0 %v888
  %1167 = vmatpush1.bf16.msra.mxu0 %v887
  %1168 = vmatprep.subr.bf16.mxu0 %v892
  %1169 = vmatpush1.bf16.msra.mxu0 %v891
  %1170 = vmatprep.subr.bf16.mxu0 %v896
  %1171 = vmatpush1.bf16.msra.mxu0 %v895
  %1172 = vmatprep.subr.bf16.mxu0 %v900
  %1173 = vmatpush1.bf16.msra.mxu0 %v899
  %1174 = vmatprep.subr.bf16.mxu0 %v904
  %1175 = vmatpush1.bf16.msra.mxu0 %v903
  %1176 = vmatprep.subr.bf16.mxu0 %v908
  %1177 = vmatpush1.bf16.msra.mxu0 %v907
  %1178 = vmatprep.subr.bf16.mxu0 %v912
  %1179 = vmatpush1.bf16.msra.mxu0 %v911
  %1180 = vmatprep.subr.bf16.mxu0 0
  %1181 = vmatpush1.bf16.msra.mxu0 0
  %1182 = vmatprep.subr.bf16.mxu0 0
  %1183 = vmatpush1.bf16.msra.mxu0 0
  %1184 = vmatprep.subr.bf16.mxu0 0
  %1185 = vmatpush1.bf16.msra.mxu0 0
  %1186 = vmatprep.subr.bf16.mxu0 0
  %1187 = vmatpush1.bf16.msra.mxu0 0
  %1188 = vmatprep.subr.bf16.mxu0 0
  %1189 = vmatpush1.bf16.msra.mxu0 0
  %1190 = vmatprep.subr.bf16.mxu0 0
  %1191 = vmatpush1.bf16.msra.mxu0 0
  %1192 = vmatprep.subr.bf16.mxu0 0
  %1193 = vmatpush1.bf16.msra.mxu0 0
  %1194 = vmatprep.subr.bf16.mxu0 0
  %1195 = vmatpush1.bf16.msra.mxu0 0
  %1196 = vmatprep.mubr.bf16.mxu0 0
  %1197 = vmatmul.mubr.bf16.gmra.mrb[0].mxu0 %v1141
  %v1198 = vpop.f32.mrb[0].mxu0
  %v1199 = vadd.f32 0.0, %v1198
  %v1200 = vpop.f32.mrb[0].mxu0
  %v1201 = vadd.f32 0.0, %v1200
  %v1202 = vpop.f32.mrb[0].mxu0
  %v1203 = vadd.f32 0.0, %v1202
  %v1204 = vpop.f32.mrb[0].mxu0
  %v1205 = vadd.f32 0.0, %v1204
  %1206 = vmatprep.mubr.bf16.mxu0 0
  %1207 = vmatmul.mubr.bf16.gmra.mrb[0].mxu0 %v1142
  %v1208 = vpop.f32.mrb[0].mxu0
  %v1209 = vadd.f32 0.0, %v1208
  %v1210 = vpop.f32.mrb[0].mxu0
  %v1211 = vadd.f32 0.0, %v1210
  %v1212 = vpop.f32.mrb[0].mxu0
  %v1213 = vadd.f32 0.0, %v1212
  %v1214 = vpop.f32.mrb[0].mxu0
  %v1215 = vadd.f32 0.0, %v1214
  %1216 = vdwg.mxu0
  %1217 = vmatprep.subr.bf16.mxu0 %v886
  %1218 = vmatpush1.bf16.msra.mxu0 %v885
  %1219 = vmatprep.subr.bf16.mxu0 %v890
  %1220 = vmatpush1.bf16.msra.mxu0 %v889
  %1221 = vmatprep.subr.bf16.mxu0 %v894
  %1222 = vmatpush1.bf16.msra.mxu0 %v893
  %1223 = vmatprep.subr.bf16.mxu0 %v898
  %1224 = vmatpush1.bf16.msra.mxu0 %v897
  %1225 = vmatprep.subr.bf16.mxu0 %v902
  %1226 = vmatpush1.bf16.msra.mxu0 %v901
  %1227 = vmatprep.subr.bf16.mxu0 %v906
  %1228 = vmatpush1.bf16.msra.mxu0 %v905
  %1229 = vmatprep.subr.bf16.mxu0 %v910
  %1230 = vmatpush1.bf16.msra.mxu0 %v909
  %1231 = vmatprep.subr.bf16.mxu0 %v914
  %1232 = vmatpush1.bf16.msra.mxu0 %v913
  %1233 = vmatprep.subr.bf16.mxu0 0
  %1234 = vmatpush1.bf16.msra.mxu0 0
  %1235 = vmatprep.subr.bf16.mxu0 0
  %1236 = vmatpush1.bf16.msra.mxu0 0
  %1237 = vmatprep.subr.bf16.mxu0 0
  %1238 = vmatpush1.bf16.msra.mxu0 0
  %1239 = vmatprep.subr.bf16.mxu0 0
  %1240 = vmatpush1.bf16.msra.mxu0 0
  %1241 = vmatprep.subr.bf16.mxu0 0
  %1242 = vmatpush1.bf16.msra.mxu0 0
  %1243 = vmatprep.subr.bf16.mxu0 0
  %1244 = vmatpush1.bf16.msra.mxu0 0
  %1245 = vmatprep.subr.bf16.mxu0 0
  %1246 = vmatpush1.bf16.msra.mxu0 0
  %1247 = vmatprep.subr.bf16.mxu0 0
  %1248 = vmatpush1.bf16.msra.mxu0 0
  %1249 = vmatprep.mubr.bf16.mxu0 0
  %1250 = vmatmul.mubr.bf16.gmra.mrb[0].mxu0 %v1141
  %v1251 = vpop.f32.mrb[0].mxu0
  %v1252 = vadd.f32 0.0, %v1251
  %v1253 = vpop.f32.mrb[0].mxu0
  %v1254 = vadd.f32 0.0, %v1253
  %v1255 = vpop.f32.mrb[0].mxu0
  %v1256 = vadd.f32 0.0, %v1255
  %v1257 = vpop.f32.mrb[0].mxu0
  %v1258 = vadd.f32 0.0, %v1257
  %1259 = vmatprep.mubr.bf16.mxu0 0
  %1260 = vmatmul.mubr.bf16.gmra.mrb[0].mxu0 %v1142
  %v1261 = vpop.f32.mrb[0].mxu0
  %v1262 = vadd.f32 0.0, %v1261
  %v1263 = vpop.f32.mrb[0].mxu0
  %v1264 = vadd.f32 0.0, %v1263
  %v1265 = vpop.f32.mrb[0].mxu0
  %v1266 = vadd.f32 0.0, %v1265
  %v1267 = vpop.f32.mrb[0].mxu0
  %v1268 = vadd.f32 0.0, %v1267
  %1269 = vdwg.mxu0
  %v1270 = vadd.f32 %v1148, %v1199
  %v1271 = vadd.f32 %v1149, %v1201
  %v1272 = vadd.f32 %v1150, %v1252
  %v1273 = vadd.f32 %v1151, %v1254
  %v1274 = vadd.f32 %v1152, %v1203
  %v1275 = vadd.f32 %v1153, %v1205
  %v1276 = vadd.f32 %v1154, %v1256
  %v1277 = vadd.f32 %v1155, %v1258
  %v1278 = vadd.f32 %v1156, %v1209
  %v1279 = vadd.f32 %v1157, %v1211
  %v1280 = vadd.f32 %v1158, %v1262
  %v1281 = vadd.f32 %v1159, %v1264
  %v1282 = vadd.f32 %v1160, %v1213
  %v1283 = vadd.f32 %v1161, %v1215
  %v1284 = vadd.f32 %v1162, %v1266
  %v1285 = vadd.f32 %v1163, %v1268
  %v1286 = vmul.f32 %v1270, 0.5
  %v1287 = vmul.f32 %v1274, 0.5
  %v1288 = vmul.f32 %v1278, 0.5
  %v1289 = vmul.f32 %v1282, 0.5
  %v1290 = vtanh.pop %v1286
  %v1291 = vtanh.pop %v1287
  %v1292 = vtanh.pop %v1288
  %v1293 = vtanh.pop %v1289
  %v1294 = vmul.f32 %v1290, 0.5
  %v1295 = vmul.f32 %v1291, 0.5
  %v1296 = vmul.f32 %v1292, 0.5
  %v1297 = vmul.f32 %v1293, 0.5
  %v1298 = vadd.f32 %v1294, 0.5
  %v1299 = vadd.f32 %v1295, 0.5
  %v1300 = vadd.f32 %v1296, 0.5
  %v1301 = vadd.f32 %v1297, 0.5
  %v1302 = vmul.f32 %v1271, 0.5
  %v1303 = vmul.f32 %v1275, 0.5
  %v1304 = vmul.f32 %v1279, 0.5
  %v1305 = vmul.f32 %v1283, 0.5
  %v1306 = vtanh.pop %v1302
  %v1307 = vtanh.pop %v1303
  %v1308 = vtanh.pop %v1304
  %v1309 = vtanh.pop %v1305
  %v1310 = vmul.f32 %v1306, 0.5
  %v1311 = vmul.f32 %v1307, 0.5
  %v1312 = vmul.f32 %v1308, 0.5
  %v1313 = vmul.f32 %v1309, 0.5
  %v1314 = vadd.f32 %v1310, 0.5
  %v1315 = vadd.f32 %v1311, 0.5
  %v1316 = vadd.f32 %v1312, 0.5
  %v1317 = vadd.f32 %v1313, 0.5
  %v1318 = vtanh.pop %v1272
  %v1319 = vtanh.pop %v1276
  %v1320 = vtanh.pop %v1280
  %v1321 = vtanh.pop %v1284
  %v1322 = vmul.f32 %v1273, 0.5
  %v1323 = vmul.f32 %v1277, 0.5
  %v1324 = vmul.f32 %v1281, 0.5
  %v1325 = vmul.f32 %v1285, 0.5
  %v1326 = vtanh.pop %v1322
  %v1327 = vtanh.pop %v1323
  %v1328 = vtanh.pop %v1324
  %v1329 = vtanh.pop %v1325
  %v1330 = vmul.f32 %v1326, 0.5
  %v1331 = vmul.f32 %v1327, 0.5
  %v1332 = vmul.f32 %v1328, 0.5
  %v1333 = vmul.f32 %v1329, 0.5
  %v1334 = vadd.f32 %v1330, 0.5
  %v1335 = vadd.f32 %v1331, 0.5
  %v1336 = vadd.f32 %v1332, 0.5
  %v1337 = vadd.f32 %v1333, 0.5
  %v1338 = vmul.f32 %v1314, %v1129
  %v1339 = vmul.f32 %v1315, %v1130
  %v1340 = vmul.f32 %v1316, %v1131
  %v1341 = vmul.f32 %v1317, %v1132
  %v1342 = vmul.f32 %v1298, %v1318
  %v1343 = vmul.f32 %v1299, %v1319
  %v1344 = vmul.f32 %v1300, %v1320
  %v1345 = vmul.f32 %v1301, %v1321
  %v1346 = vadd.f32 %v1338, %v1342
  %v1347 = vadd.f32 %v1339, %v1343
  %v1348 = vadd.f32 %v1340, %v1344
  %v1349 = vadd.f32 %v1341, %v1345
  %v1350 = vtanh.pop %v1346
  %v1351 = vtanh.pop %v1347
  %v1352 = vtanh.pop %v1348
  %v1353 = vtanh.pop %v1349
  %v1354 = vmul.f32 %v1334, %v1350
  %v1355 = vmul.f32 %v1335, %v1351
  %v1356 = vmul.f32 %v1336, %v1352
  %v1357 = vmul.f32 %v1337, %v1353
  %v1358 = vpack.c.bf16 %v1355, %v1354
  %v1359 = vpack.c.bf16 %v1357, %v1356
  %s1360 = scalar_lea.vmem [#allocation3], 16
  %1361 = vst [vmem:[%s1360] sm:$0xff] %v1358
  %1362 = vst [vmem:[%s1360 + $0x8] sm:$0xff] %v1359
  %s1363 = smul.u32 8, 4
  %s1364 = smul.addr %s1363, 8
  %s1365 = scalar_lea.vmem [#allocation2], %s1364
  %v1366 = vld [vmem:[%s1365] sm:$0xff]
  %v1367 = vld [vmem:[%s1365 + $0x8] sm:$0xff]
  %v1368 = vld [vmem:[%s1365 + $0x10] sm:$0xff]
  %v1369 = vld [vmem:[%s1365 + $0x18] sm:$0xff]
  %v1370 = vld [vmem:[%s1365 + $0x20] sm:$0xff]
  %v1371 = vld [vmem:[%s1365 + $0x28] sm:$0xff]
  %v1372 = vld [vmem:[%s1365 + $0x30] sm:$0xff]
  %v1373 = vld [vmem:[%s1365 + $0x38] sm:$0xff]
  %v1374 = vld [vmem:[%s1365 + $0x40] sm:$0xff]
  %v1375 = vld [vmem:[%s1365 + $0x48] sm:$0xff]
  %v1376 = vld [vmem:[%s1365 + $0x50] sm:$0xff]
  %v1377 = vld [vmem:[%s1365 + $0x58] sm:$0xff]
  %v1378 = vld [vmem:[%s1365 + $0x60] sm:$0xff]
  %v1379 = vld [vmem:[%s1365 + $0x68] sm:$0xff]
  %v1380 = vld [vmem:[%s1365 + $0x70] sm:$0xff]
  %v1381 = vld [vmem:[%s1365 + $0x78] sm:$0xff]
  %1382 = vmatprep.subr.bf16.mxu0 %v884
  %1383 = vmatpush1.bf16.msra.mxu0 %v883
  %1384 = vmatprep.subr.bf16.mxu0 %v888
  %1385 = vmatpush1.bf16.msra.mxu0 %v887
  %1386 = vmatprep.subr.bf16.mxu0 %v892
  %1387 = vmatpush1.bf16.msra.mxu0 %v891
  %1388 = vmatprep.subr.bf16.mxu0 %v896
  %1389 = vmatpush1.bf16.msra.mxu0 %v895
  %1390 = vmatprep.subr.bf16.mxu0 %v900
  %1391 = vmatpush1.bf16.msra.mxu0 %v899
  %1392 = vmatprep.subr.bf16.mxu0 %v904
  %1393 = vmatpush1.bf16.msra.mxu0 %v903
  %1394 = vmatprep.subr.bf16.mxu0 %v908
  %1395 = vmatpush1.bf16.msra.mxu0 %v907
  %1396 = vmatprep.subr.bf16.mxu0 %v912
  %1397 = vmatpush1.bf16.msra.mxu0 %v911
  %1398 = vmatprep.subr.bf16.mxu0 0
  %1399 = vmatpush1.bf16.msra.mxu0 0
  %1400 = vmatprep.subr.bf16.mxu0 0
  %1401 = vmatpush1.bf16.msra.mxu0 0
  %1402 = vmatprep.subr.bf16.mxu0 0
  %1403 = vmatpush1.bf16.msra.mxu0 0
  %1404 = vmatprep.subr.bf16.mxu0 0
  %1405 = vmatpush1.bf16.msra.mxu0 0
  %1406 = vmatprep.subr.bf16.mxu0 0
  %1407 = vmatpush1.bf16.msra.mxu0 0
  %1408 = vmatprep.subr.bf16.mxu0 0
  %1409 = vmatpush1.bf16.msra.mxu0 0
  %1410 = vmatprep.subr.bf16.mxu0 0
  %1411 = vmatpush1.bf16.msra.mxu0 0
  %1412 = vmatprep.subr.bf16.mxu0 0
  %1413 = vmatpush1.bf16.msra.mxu0 0
  %1414 = vmatprep.mubr.bf16.mxu0 0
  %1415 = vmatmul.mubr.bf16.gmra.mrb[0].mxu0 %v1358
  %v1416 = vpop.f32.mrb[0].mxu0
  %v1417 = vadd.f32 0.0, %v1416
  %v1418 = vpop.f32.mrb[0].mxu0
  %v1419 = vadd.f32 0.0, %v1418
  %v1420 = vpop.f32.mrb[0].mxu0
  %v1421 = vadd.f32 0.0, %v1420
  %v1422 = vpop.f32.mrb[0].mxu0
  %v1423 = vadd.f32 0.0, %v1422
  %1424 = vmatprep.mubr.bf16.mxu0 0
  %1425 = vmatmul.mubr.bf16.gmra.mrb[0].mxu0 %v1359
  %v1426 = vpop.f32.mrb[0].mxu0
  %v1427 = vadd.f32 0.0, %v1426
  %v1428 = vpop.f32.mrb[0].mxu0
  %v1429 = vadd.f32 0.0, %v1428
  %v1430 = vpop.f32.mrb[0].mxu0
  %v1431 = vadd.f32 0.0, %v1430
  %v1432 = vpop.f32.mrb[0].mxu0
  %v1433 = vadd.f32 0.0, %v1432
  %1434 = vdwg.mxu0
  %1435 = vmatprep.subr.bf16.mxu0 %v886
  %1436 = vmatpush1.bf16.msra.mxu0 %v885
  %1437 = vmatprep.subr.bf16.mxu0 %v890
  %1438 = vmatpush1.bf16.msra.mxu0 %v889
  %1439 = vmatprep.subr.bf16.mxu0 %v894
  %1440 = vmatpush1.bf16.msra.mxu0 %v893
  %1441 = vmatprep.subr.bf16.mxu0 %v898
  %1442 = vmatpush1.bf16.msra.mxu0 %v897
  %1443 = vmatprep.subr.bf16.mxu0 %v902
  %1444 = vmatpush1.bf16.msra.mxu0 %v901
  %1445 = vmatprep.subr.bf16.mxu0 %v906
  %1446 = vmatpush1.bf16.msra.mxu0 %v905
  %1447 = vmatprep.subr.bf16.mxu0 %v910
  %1448 = vmatpush1.bf16.msra.mxu0 %v909
  %1449 = vmatprep.subr.bf16.mxu0 %v914
  %1450 = vmatpush1.bf16.msra.mxu0 %v913
  %1451 = vmatprep.subr.bf16.mxu0 0
  %1452 = vmatpush1.bf16.msra.mxu0 0
  %1453 = vmatprep.subr.bf16.mxu0 0
  %1454 = vmatpush1.bf16.msra.mxu0 0
  %1455 = vmatprep.subr.bf16.mxu0 0
  %1456 = vmatpush1.bf16.msra.mxu0 0
  %1457 = vmatprep.subr.bf16.mxu0 0
  %1458 = vmatpush1.bf16.msra.mxu0 0
  %1459 = vmatprep.subr.bf16.mxu0 0
  %1460 = vmatpush1.bf16.msra.mxu0 0
  %1461 = vmatprep.subr.bf16.mxu0 0
  %1462 = vmatpush1.bf16.msra.mxu0 0
  %1463 = vmatprep.subr.bf16.mxu0 0
  %1464 = vmatpush1.bf16.msra.mxu0 0
  %1465 = vmatprep.subr.bf16.mxu0 0
  %1466 = vmatpush1.bf16.msra.mxu0 0
  %1467 = vmatprep.mubr.bf16.mxu0 0
  %1468 = vmatmul.mubr.bf16.gmra.mrb[0].mxu0 %v1358
  %v1469 = vpop.f32.mrb[0].mxu0
  %v1470 = vadd.f32 0.0, %v1469
  %v1471 = vpop.f32.mrb[0].mxu0
  %v1472 = vadd.f32 0.0, %v1471
  %v1473 = vpop.f32.mrb[0].mxu0
  %v1474 = vadd.f32 0.0, %v1473
  %v1475 = vpop.f32.mrb[0].mxu0
  %v1476 = vadd.f32 0.0, %v1475
  %1477 = vmatprep.mubr.bf16.mxu0 0
  %1478 = vmatmul.mubr.bf16.gmra.mrb[0].mxu0 %v1359
  %v1479 = vpop.f32.mrb[0].mxu0
  %v1480 = vadd.f32 0.0, %v1479
  %v1481 = vpop.f32.mrb[0].mxu0
  %v1482 = vadd.f32 0.0, %v1481
  %v1483 = vpop.f32.mrb[0].mxu0
  %v1484 = vadd.f32 0.0, %v1483
  %v1485 = vpop.f32.mrb[0].mxu0
  %v1486 = vadd.f32 0.0, %v1485
  %1487 = vdwg.mxu0
  %v1488 = vadd.f32 %v1366, %v1417
  %v1489 = vadd.f32 %v1367, %v1419
  %v1490 = vadd.f32 %v1368, %v1470
  %v1491 = vadd.f32 %v1369, %v1472
  %v1492 = vadd.f32 %v1370, %v1421
  %v1493 = vadd.f32 %v1371, %v1423
  %v1494 = vadd.f32 %v1372, %v1474
  %v1495 = vadd.f32 %v1373, %v1476
  %v1496 = vadd.f32 %v1374, %v1427
  %v1497 = vadd.f32 %v1375, %v1429
  %v1498 = vadd.f32 %v1376, %v1480
  %v1499 = vadd.f32 %v1377, %v1482
  %v1500 = vadd.f32 %v1378, %v1431
  %v1501 = vadd.f32 %v1379, %v1433
  %v1502 = vadd.f32 %v1380, %v1484
  %v1503 = vadd.f32 %v1381, %v1486
  %v1504 = vmul.f32 %v1488, 0.5
  %v1505 = vmul.f32 %v1492, 0.5
  %v1506 = vmul.f32 %v1496, 0.5
  %v1507 = vmul.f32 %v1500, 0.5
  %v1508 = vtanh.pop %v1504
  %v1509 = vtanh.pop %v1505
  %v1510 = vtanh.pop %v1506
  %v1511 = vtanh.pop %v1507
  %v1512 = vmul.f32 %v1508, 0.5
  %v1513 = vmul.f32 %v1509, 0.5
  %v1514 = vmul.f32 %v1510, 0.5
  %v1515 = vmul.f32 %v1511, 0.5
  %v1516 = vadd.f32 %v1512, 0.5
  %v1517 = vadd.f32 %v1513, 0.5
  %v1518 = vadd.f32 %v1514, 0.5
  %v1519 = vadd.f32 %v1515, 0.5
  %v1520 = vmul.f32 %v1489, 0.5
  %v1521 = vmul.f32 %v1493, 0.5
  %v1522 = vmul.f32 %v1497, 0.5
  %v1523 = vmul.f32 %v1501, 0.5
  %v1524 = vtanh.pop %v1520
  %v1525 = vtanh.pop %v1521
  %v1526 = vtanh.pop %v1522
  %v1527 = vtanh.pop %v1523
  %v1528 = vmul.f32 %v1524, 0.5
  %v1529 = vmul.f32 %v1525, 0.5
  %v1530 = vmul.f32 %v1526, 0.5
  %v1531 = vmul.f32 %v1527, 0.5
  %v1532 = vadd.f32 %v1528, 0.5
  %v1533 = vadd.f32 %v1529, 0.5
  %v1534 = vadd.f32 %v1530, 0.5
  %v1535 = vadd.f32 %v1531, 0.5
  %v1536 = vtanh.pop %v1490
  %v1537 = vtanh.pop %v1494
  %v1538 = vtanh.pop %v1498
  %v1539 = vtanh.pop %v1502
  %v1540 = vmul.f32 %v1491, 0.5
  %v1541 = vmul.f32 %v1495, 0.5
  %v1542 = vmul.f32 %v1499, 0.5
  %v1543 = vmul.f32 %v1503, 0.5
  %v1544 = vtanh.pop %v1540
  %v1545 = vtanh.pop %v1541
  %v1546 = vtanh.pop %v1542
  %v1547 = vtanh.pop %v1543
  %v1548 = vmul.f32 %v1544, 0.5
  %v1549 = vmul.f32 %v1545, 0.5
  %v1550 = vmul.f32 %v1546, 0.5
  %v1551 = vmul.f32 %v1547, 0.5
  %v1552 = vadd.f32 %v1548, 0.5
  %v1553 = vadd.f32 %v1549, 0.5
  %v1554 = vadd.f32 %v1550, 0.5
  %v1555 = vadd.f32 %v1551, 0.5
  %v1556 = vmul.f32 %v1532, %v1346
  %v1557 = vmul.f32 %v1533, %v1347
  %v1558 = vmul.f32 %v1534, %v1348
  %v1559 = vmul.f32 %v1535, %v1349
  %v1560 = vmul.f32 %v1516, %v1536
  %v1561 = vmul.f32 %v1517, %v1537
  %v1562 = vmul.f32 %v1518, %v1538
  %v1563 = vmul.f32 %v1519, %v1539
  %v1564 = vadd.f32 %v1556, %v1560
  %v1565 = vadd.f32 %v1557, %v1561
  %v1566 = vadd.f32 %v1558, %v1562
  %v1567 = vadd.f32 %v1559, %v1563
  %v1568 = vtanh.pop %v1564
  %v1569 = vtanh.pop %v1565
  %v1570 = vtanh.pop %v1566
  %v1571 = vtanh.pop %v1567
  %v1572 = vmul.f32 %v1552, %v1568
  %v1573 = vmul.f32 %v1553, %v1569
  %v1574 = vmul.f32 %v1554, %v1570
  %v1575 = vmul.f32 %v1555, %v1571
  %v1576 = vpack.c.bf16 %v1573, %v1572
  %v1577 = vpack.c.bf16 %v1575, %v1574
  %s1578 = scalar_lea.vmem [#allocation3], 32
  %1579 = vst [vmem:[%s1578] sm:$0xff] %v1576
  %1580 = vst [vmem:[%s1578 + $0x8] sm:$0xff] %v1577
  %s1581 = smul.u32 12, 4
  %s1582 = smul.addr %s1581, 8
  %s1583 = scalar_lea.vmem [#allocation2], %s1582
  %v1584 = vld [vmem:[%s1583] sm:$0xff]
  %v1585 = vld [vmem:[%s1583 + $0x8] sm:$0xff]
  %v1586 = vld [vmem:[%s1583 + $0x10] sm:$0xff]
  %v1587 = vld [vmem:[%s1583 + $0x18] sm:$0xff]
  %v1588 = vld [vmem:[%s1583 + $0x20] sm:$0xff]
  %v1589 = vld [vmem:[%s1583 + $0x28] sm:$0xff]
  %v1590 = vld [vmem:[%s1583 + $0x30] sm:$0xff]
  %v1591 = vld [vmem:[%s1583 + $0x38] sm:$0xff]
  %v1592 = vld [vmem:[%s1583 + $0x40] sm:$0xff]
  %v1593 = vld [vmem:[%s1583 + $0x48] sm:$0xff]
  %v1594 = vld [vmem:[%s1583 + $0x50] sm:$0xff]
  %v1595 = vld [vmem:[%s1583 + $0x58] sm:$0xff]
  %v1596 = vld [vmem:[%s1583 + $0x60] sm:$0xff]
  %v1597 = vld [vmem:[%s1583 + $0x68] sm:$0xff]
  %v1598 = vld [vmem:[%s1583 + $0x70] sm:$0xff]
  %v1599 = vld [vmem:[%s1583 + $0x78] sm:$0xff]
  %1600 = vmatprep.subr.bf16.mxu0 %v884
  %1601 = vmatpush1.bf16.msra.mxu0 %v883
  %1602 = vmatprep.subr.bf16.mxu0 %v888
  %1603 = vmatpush1.bf16.msra.mxu0 %v887
  %1604 = vmatprep.subr.bf16.mxu0 %v892
  %1605 = vmatpush1.bf16.msra.mxu0 %v891
  %1606 = vmatprep.subr.bf16.mxu0 %v896
  %1607 = vmatpush1.bf16.msra.mxu0 %v895
  %1608 = vmatprep.subr.bf16.mxu0 %v900
  %1609 = vmatpush1.bf16.msra.mxu0 %v899
  %1610 = vmatprep.subr.bf16.mxu0 %v904
  %1611 = vmatpush1.bf16.msra.mxu0 %v903
  %1612 = vmatprep.subr.bf16.mxu0 %v908
  %1613 = vmatpush1.bf16.msra.mxu0 %v907
  %1614 = vmatprep.subr.bf16.mxu0 %v912
  %1615 = vmatpush1.bf16.msra.mxu0 %v911
  %1616 = vmatprep.subr.bf16.mxu0 0
  %1617 = vmatpush1.bf16.msra.mxu0 0
  %1618 = vmatprep.subr.bf16.mxu0 0
  %1619 = vmatpush1.bf16.msra.mxu0 0
  %1620 = vmatprep.subr.bf16.mxu0 0
  %1621 = vmatpush1.bf16.msra.mxu0 0
  %1622 = vmatprep.subr.bf16.mxu0 0
  %1623 = vmatpush1.bf16.msra.mxu0 0
  %1624 = vmatprep.subr.bf16.mxu0 0
  %1625 = vmatpush1.bf16.msra.mxu0 0
  %1626 = vmatprep.subr.bf16.mxu0 0
  %1627 = vmatpush1.bf16.msra.mxu0 0
  %1628 = vmatprep.subr.bf16.mxu0 0
  %1629 = vmatpush1.bf16.msra.mxu0 0
  %1630 = vmatprep.subr.bf16.mxu0 0
  %1631 = vmatpush1.bf16.msra.mxu0 0
  %1632 = vmatprep.mubr.bf16.mxu0 0
  %1633 = vmatmul.mubr.bf16.gmra.mrb[0].mxu0 %v1576
  %v1634 = vpop.f32.mrb[0].mxu0
  %v1635 = vadd.f32 0.0, %v1634
  %v1636 = vpop.f32.mrb[0].mxu0
  %v1637 = vadd.f32 0.0, %v1636
  %v1638 = vpop.f32.mrb[0].mxu0
  %v1639 = vadd.f32 0.0, %v1638
  %v1640 = vpop.f32.mrb[0].mxu0
  %v1641 = vadd.f32 0.0, %v1640
  %1642 = vmatprep.mubr.bf16.mxu0 0
  %1643 = vmatmul.mubr.bf16.gmra.mrb[0].mxu0 %v1577
  %v1644 = vpop.f32.mrb[0].mxu0
  %v1645 = vadd.f32 0.0, %v1644
  %v1646 = vpop.f32.mrb[0].mxu0
  %v1647 = vadd.f32 0.0, %v1646
  %v1648 = vpop.f32.mrb[0].mxu0
  %v1649 = vadd.f32 0.0, %v1648
  %v1650 = vpop.f32.mrb[0].mxu0
  %v1651 = vadd.f32 0.0, %v1650
  %1652 = vdwg.mxu0
  %1653 = vmatprep.subr.bf16.mxu0 %v886
  %1654 = vmatpush1.bf16.msra.mxu0 %v885
  %1655 = vmatprep.subr.bf16.mxu0 %v890
  %1656 = vmatpush1.bf16.msra.mxu0 %v889
  %1657 = vmatprep.subr.bf16.mxu0 %v894
  %1658 = vmatpush1.bf16.msra.mxu0 %v893
  %1659 = vmatprep.subr.bf16.mxu0 %v898
  %1660 = vmatpush1.bf16.msra.mxu0 %v897
  %1661 = vmatprep.subr.bf16.mxu0 %v902
  %1662 = vmatpush1.bf16.msra.mxu0 %v901
  %1663 = vmatprep.subr.bf16.mxu0 %v906
  %1664 = vmatpush1.bf16.msra.mxu0 %v905
  %1665 = vmatprep.subr.bf16.mxu0 %v910
  %1666 = vmatpush1.bf16.msra.mxu0 %v909
  %1667 = vmatprep.subr.bf16.mxu0 %v914
  %1668 = vmatpush1.bf16.msra.mxu0 %v913
  %1669 = vmatprep.subr.bf16.mxu0 0
  %1670 = vmatpush1.bf16.msra.mxu0 0
  %1671 = vmatprep.subr.bf16.mxu0 0
  %1672 = vmatpush1.bf16.msra.mxu0 0
  %1673 = vmatprep.subr.bf16.mxu0 0
  %1674 = vmatpush1.bf16.msra.mxu0 0
  %1675 = vmatprep.subr.bf16.mxu0 0
  %1676 = vmatpush1.bf16.msra.mxu0 0
  %1677 = vmatprep.subr.bf16.mxu0 0
  %1678 = vmatpush1.bf16.msra.mxu0 0
  %1679 = vmatprep.subr.bf16.mxu0 0
  %1680 = vmatpush1.bf16.msra.mxu0 0
  %1681 = vmatprep.subr.bf16.mxu0 0
  %1682 = vmatpush1.bf16.msra.mxu0 0
  %1683 = vmatprep.subr.bf16.mxu0 0
  %1684 = vmatpush1.bf16.msra.mxu0 0
  %1685 = vmatprep.mubr.bf16.mxu0 0
  %1686 = vmatmul.mubr.bf16.gmra.mrb[0].mxu0 %v1576
  %v1687 = vpop.f32.mrb[0].mxu0
  %v1688 = vadd.f32 0.0, %v1687
  %v1689 = vpop.f32.mrb[0].mxu0
  %v1690 = vadd.f32 0.0, %v1689
  %v1691 = vpop.f32.mrb[0].mxu0
  %v1692 = vadd.f32 0.0, %v1691
  %v1693 = vpop.f32.mrb[0].mxu0
  %v1694 = vadd.f32 0.0, %v1693
  %1695 = vmatprep.mubr.bf16.mxu0 0
  %1696 = vmatmul.mubr.bf16.gmra.mrb[0].mxu0 %v1577
  %v1697 = vpop.f32.mrb[0].mxu0
  %v1698 = vadd.f32 0.0, %v1697
  %v1699 = vpop.f32.mrb[0].mxu0
  %v1700 = vadd.f32 0.0, %v1699
  %v1701 = vpop.f32.mrb[0].mxu0
  %v1702 = vadd.f32 0.0, %v1701
  %v1703 = vpop.f32.mrb[0].mxu0
  %v1704 = vadd.f32 0.0, %v1703
  %1705 = vdwg.mxu0
  %v1706 = vadd.f32 %v1584, %v1635
  %v1707 = vadd.f32 %v1585, %v1637
  %v1708 = vadd.f32 %v1586, %v1688
  %v1709 = vadd.f32 %v1587, %v1690
  %v1710 = vadd.f32 %v1588, %v1639
  %v1711 = vadd.f32 %v1589, %v1641
  %v1712 = vadd.f32 %v1590, %v1692
  %v1713 = vadd.f32 %v1591, %v1694
  %v1714 = vadd.f32 %v1592, %v1645
  %v1715 = vadd.f32 %v1593, %v1647
  %v1716 = vadd.f32 %v1594, %v1698
  %v1717 = vadd.f32 %v1595, %v1700
  %v1718 = vadd.f32 %v1596, %v1649
  %v1719 = vadd.f32 %v1597, %v1651
  %v1720 = vadd.f32 %v1598, %v1702
  %v1721 = vadd.f32 %v1599, %v1704
  %v1722 = vmul.f32 %v1706, 0.5
  %v1723 = vmul.f32 %v1710, 0.5
  %v1724 = vmul.f32 %v1714, 0.5
  %v1725 = vmul.f32 %v1718, 0.5
  %v1726 = vtanh.pop %v1722
  %v1727 = vtanh.pop %v1723
  %v1728 = vtanh.pop %v1724
  %v1729 = vtanh.pop %v1725
  %v1730 = vmul.f32 %v1726, 0.5
  %v1731 = vmul.f32 %v1727, 0.5
  %v1732 = vmul.f32 %v1728, 0.5
  %v1733 = vmul.f32 %v1729, 0.5
  %v1734 = vadd.f32 %v1730, 0.5
  %v1735 = vadd.f32 %v1731, 0.5
  %v1736 = vadd.f32 %v1732, 0.5
  %v1737 = vadd.f32 %v1733, 0.5
  %v1738 = vmul.f32 %v1707, 0.5
  %v1739 = vmul.f32 %v1711, 0.5
  %v1740 = vmul.f32 %v1715, 0.5
  %v1741 = vmul.f32 %v1719, 0.5
  %v1742 = vtanh.pop %v1738
  %v1743 = vtanh.pop %v1739
  %v1744 = vtanh.pop %v1740
  %v1745 = vtanh.pop %v1741
  %v1746 = vmul.f32 %v1742, 0.5
  %v1747 = vmul.f32 %v1743, 0.5
  %v1748 = vmul.f32 %v1744, 0.5
  %v1749 = vmul.f32 %v1745, 0.5
  %v1750 = vadd.f32 %v1746, 0.5
  %v1751 = vadd.f32 %v1747, 0.5
  %v1752 = vadd.f32 %v1748, 0.5
  %v1753 = vadd.f32 %v1749, 0.5
  %v1754 = vtanh.pop %v1708
  %v1755 = vtanh.pop %v1712
  %v1756 = vtanh.pop %v1716
  %v1757 = vtanh.pop %v1720
  %v1758 = vmul.f32 %v1709, 0.5
  %v1759 = vmul.f32 %v1713, 0.5
  %v1760 = vmul.f32 %v1717, 0.5
  %v1761 = vmul.f32 %v1721, 0.5
  %v1762 = vtanh.pop %v1758
  %v1763 = vtanh.pop %v1759
  %v1764 = vtanh.pop %v1760
  %v1765 = vtanh.pop %v1761
  %v1766 = vmul.f32 %v1762, 0.5
  %v1767 = vmul.f32 %v1763, 0.5
  %v1768 = vmul.f32 %v1764, 0.5
  %v1769 = vmul.f32 %v1765, 0.5
  %v1770 = vadd.f32 %v1766, 0.5
  %v1771 = vadd.f32 %v1767, 0.5
  %v1772 = vadd.f32 %v1768, 0.5
  %v1773 = vadd.f32 %v1769, 0.5
  %v1774 = vmul.f32 %v1750, %v1564
  %v1775 = vmul.f32 %v1751, %v1565
  %v1776 = vmul.f32 %v1752, %v1566
  %v1777 = vmul.f32 %v1753, %v1567
  %v1778 = vmul.f32 %v1734, %v1754
  %v1779 = vmul.f32 %v1735, %v1755
  %v1780 = vmul.f32 %v1736, %v1756
  %v1781 = vmul.f32 %v1737, %v1757
  %v1782 = vadd.f32 %v1774, %v1778
  %v1783 = vadd.f32 %v1775, %v1779
  %v1784 = vadd.f32 %v1776, %v1780
  %v1785 = vadd.f32 %v1777, %v1781
  %v1786 = vtanh.pop %v1782
  %v1787 = vtanh.pop %v1783
  %v1788 = vtanh.pop %v1784
  %v1789 = vtanh.pop %v1785
  %v1790 = vmul.f32 %v1770, %v1786
  %v1791 = vmul.f32 %v1771, %v1787
  %v1792 = vmul.f32 %v1772, %v1788
  %v1793 = vmul.f32 %v1773, %v1789
  %v1794 = vpack.c.bf16 %v1791, %v1790
  %v1795 = vpack.c.bf16 %v1793, %v1792
  %s1796 = scalar_lea.vmem [#allocation3], 48
  %1797 = vst [vmem:[%s1796] sm:$0xff] %v1794
  %1798 = vst [vmem:[%s1796 + $0x8] sm:$0xff] %v1795
  %s1799 = smul.u32 16, 4
  %s1800 = smul.addr %s1799, 8
  %s1801 = scalar_lea.vmem [#allocation2], %s1800
  %v1802 = vld [vmem:[%s1801] sm:$0xff]
  %v1803 = vld [vmem:[%s1801 + $0x8] sm:$0xff]
  %v1804 = vld [vmem:[%s1801 + $0x10] sm:$0xff]
  %v1805 = vld [vmem:[%s1801 + $0x18] sm:$0xff]
  %v1806 = vld [vmem:[%s1801 + $0x20] sm:$0xff]
  %v1807 = vld [vmem:[%s1801 + $0x28] sm:$0xff]
  %v1808 = vld [vmem:[%s1801 + $0x30] sm:$0xff]
  %v1809 = vld [vmem:[%s1801 + $0x38] sm:$0xff]
  %v1810 = vld [vmem:[%s1801 + $0x40] sm:$0xff]
  %v1811 = vld [vmem:[%s1801 + $0x48] sm:$0xff]
  %v1812 = vld [vmem:[%s1801 + $0x50] sm:$0xff]
  %v1813 = vld [vmem:[%s1801 + $0x58] sm:$0xff]
  %v1814 = vld [vmem:[%s1801 + $0x60] sm:$0xff]
  %v1815 = vld [vmem:[%s1801 + $0x68] sm:$0xff]
  %v1816 = vld [vmem:[%s1801 + $0x70] sm:$0xff]
  %v1817 = vld [vmem:[%s1801 + $0x78] sm:$0xff]
  %1818 = vmatprep.subr.bf16.mxu0 %v884
  %1819 = vmatpush1.bf16.msra.mxu0 %v883
  %1820 = vmatprep.subr.bf16.mxu0 %v888
  %1821 = vmatpush1.bf16.msra.mxu0 %v887
  %1822 = vmatprep.subr.bf16.mxu0 %v892
  %1823 = vmatpush1.bf16.msra.mxu0 %v891
  %1824 = vmatprep.subr.bf16.mxu0 %v896
  %1825 = vmatpush1.bf16.msra.mxu0 %v895
  %1826 = vmatprep.subr.bf16.mxu0 %v900
  %1827 = vmatpush1.bf16.msra.mxu0 %v899
  %1828 = vmatprep.subr.bf16.mxu0 %v904
  %1829 = vmatpush1.bf16.msra.mxu0 %v903
  %1830 = vmatprep.subr.bf16.mxu0 %v908
  %1831 = vmatpush1.bf16.msra.mxu0 %v907
  %1832 = vmatprep.subr.bf16.mxu0 %v912
  %1833 = vmatpush1.bf16.msra.mxu0 %v911
  %1834 = vmatprep.subr.bf16.mxu0 0
  %1835 = vmatpush1.bf16.msra.mxu0 0
  %1836 = vmatprep.subr.bf16.mxu0 0
  %1837 = vmatpush1.bf16.msra.mxu0 0
  %1838 = vmatprep.subr.bf16.mxu0 0
  %1839 = vmatpush1.bf16.msra.mxu0 0
  %1840 = vmatprep.subr.bf16.mxu0 0
  %1841 = vmatpush1.bf16.msra.mxu0 0
  %1842 = vmatprep.subr.bf16.mxu0 0
  %1843 = vmatpush1.bf16.msra.mxu0 0
  %1844 = vmatprep.subr.bf16.mxu0 0
  %1845 = vmatpush1.bf16.msra.mxu0 0
  %1846 = vmatprep.subr.bf16.mxu0 0
  %1847 = vmatpush1.bf16.msra.mxu0 0
  %1848 = vmatprep.subr.bf16.mxu0 0
  %1849 = vmatpush1.bf16.msra.mxu0 0
  %1850 = vmatprep.mubr.bf16.mxu0 0
  %1851 = vmatmul.mubr.bf16.gmra.mrb[0].mxu0 %v1794
  %v1852 = vpop.f32.mrb[0].mxu0
  %v1853 = vadd.f32 0.0, %v1852
  %v1854 = vpop.f32.mrb[0].mxu0
  %v1855 = vadd.f32 0.0, %v1854
  %v1856 = vpop.f32.mrb[0].mxu0
  %v1857 = vadd.f32 0.0, %v1856
  %v1858 = vpop.f32.mrb[0].mxu0
  %v1859 = vadd.f32 0.0, %v1858
  %1860 = vmatprep.mubr.bf16.mxu0 0
  %1861 = vmatmul.mubr.bf16.gmra.mrb[0].mxu0 %v1795
  %v1862 = vpop.f32.mrb[0].mxu0
  %v1863 = vadd.f32 0.0, %v1862
  %v1864 = vpop.f32.mrb[0].mxu0
  %v1865 = vadd.f32 0.0, %v1864
  %v1866 = vpop.f32.mrb[0].mxu0
  %v1867 = vadd.f32 0.0, %v1866
  %v1868 = vpop.f32.mrb[0].mxu0
  %v1869 = vadd.f32 0.0, %v1868
  %1870 = vdwg.mxu0
  %1871 = vmatprep.subr.bf16.mxu0 %v886
  %1872 = vmatpush1.bf16.msra.mxu0 %v885
  %1873 = vmatprep.subr.bf16.mxu0 %v890
  %1874 = vmatpush1.bf16.msra.mxu0 %v889
  %1875 = vmatprep.subr.bf16.mxu0 %v894
  %1876 = vmatpush1.bf16.msra.mxu0 %v893
  %1877 = vmatprep.subr.bf16.mxu0 %v898
  %1878 = vmatpush1.bf16.msra.mxu0 %v897
  %1879 = vmatprep.subr.bf16.mxu0 %v902
  %1880 = vmatpush1.bf16.msra.mxu0 %v901
  %1881 = vmatprep.subr.bf16.mxu0 %v906
  %1882 = vmatpush1.bf16.msra.mxu0 %v905
  %1883 = vmatprep.subr.bf16.mxu0 %v910
  %1884 = vmatpush1.bf16.msra.mxu0 %v909
  %1885 = vmatprep.subr.bf16.mxu0 %v914
  %1886 = vmatpush1.bf16.msra.mxu0 %v913
  %1887 = vmatprep.subr.bf16.mxu0 0
  %1888 = vmatpush1.bf16.msra.mxu0 0
  %1889 = vmatprep.subr.bf16.mxu0 0
  %1890 = vmatpush1.bf16.msra.mxu0 0
  %1891 = vmatprep.subr.bf16.mxu0 0
  %1892 = vmatpush1.bf16.msra.mxu0 0
  %1893 = vmatprep.subr.bf16.mxu0 0
  %1894 = vmatpush1.bf16.msra.mxu0 0
  %1895 = vmatprep.subr.bf16.mxu0 0
  %1896 = vmatpush1.bf16.msra.mxu0 0
  %1897 = vmatprep.subr.bf16.mxu0 0
  %1898 = vmatpush1.bf16.msra.mxu0 0
  %1899 = vmatprep.subr.bf16.mxu0 0
  %1900 = vmatpush1.bf16.msra.mxu0 0
  %1901 = vmatprep.subr.bf16.mxu0 0
  %1902 = vmatpush1.bf16.msra.mxu0 0
  %1903 = vmatprep.mubr.bf16.mxu0 0
  %1904 = vmatmul.mubr.bf16.gmra.mrb[0].mxu0 %v1794
  %v1905 = vpop.f32.mrb[0].mxu0
  %v1906 = vadd.f32 0.0, %v1905
  %v1907 = vpop.f32.mrb[0].mxu0
  %v1908 = vadd.f32 0.0, %v1907
  %v1909 = vpop.f32.mrb[0].mxu0
  %v1910 = vadd.f32 0.0, %v1909
  %v1911 = vpop.f32.mrb[0].mxu0
  %v1912 = vadd.f32 0.0, %v1911
  %1913 = vmatprep.mubr.bf16.mxu0 0
  %1914 = vmatmul.mubr.bf16.gmra.mrb[0].mxu0 %v1795
  %v1915 = vpop.f32.mrb[0].mxu0
  %v1916 = vadd.f32 0.0, %v1915
  %v1917 = vpop.f32.mrb[0].mxu0
  %v1918 = vadd.f32 0.0, %v1917
  %v1919 = vpop.f32.mrb[0].mxu0
  %v1920 = vadd.f32 0.0, %v1919
  %v1921 = vpop.f32.mrb[0].mxu0
  %v1922 = vadd.f32 0.0, %v1921
  %1923 = vdwg.mxu0
  %v1924 = vadd.f32 %v1802, %v1853
  %v1925 = vadd.f32 %v1803, %v1855
  %v1926 = vadd.f32 %v1804, %v1906
  %v1927 = vadd.f32 %v1805, %v1908
  %v1928 = vadd.f32 %v1806, %v1857
  %v1929 = vadd.f32 %v1807, %v1859
  %v1930 = vadd.f32 %v1808, %v1910
  %v1931 = vadd.f32 %v1809, %v1912
  %v1932 = vadd.f32 %v1810, %v1863
  %v1933 = vadd.f32 %v1811, %v1865
  %v1934 = vadd.f32 %v1812, %v1916
  %v1935 = vadd.f32 %v1813, %v1918
  %v1936 = vadd.f32 %v1814, %v1867
  %v1937 = vadd.f32 %v1815, %v1869
  %v1938 = vadd.f32 %v1816, %v1920
  %v1939 = vadd.f32 %v1817, %v1922
  %v1940 = vmul.f32 %v1924, 0.5
  %v1941 = vmul.f32 %v1928, 0.5
  %v1942 = vmul.f32 %v1932, 0.5
  %v1943 = vmul.f32 %v1936, 0.5
  %v1944 = vtanh.pop %v1940
  %v1945 = vtanh.pop %v1941
  %v1946 = vtanh.pop %v1942
  %v1947 = vtanh.pop %v1943
  %v1948 = vmul.f32 %v1944, 0.5
  %v1949 = vmul.f32 %v1945, 0.5
  %v1950 = vmul.f32 %v1946, 0.5
  %v1951 = vmul.f32 %v1947, 0.5
  %v1952 = vadd.f32 %v1948, 0.5
  %v1953 = vadd.f32 %v1949, 0.5
  %v1954 = vadd.f32 %v1950, 0.5
  %v1955 = vadd.f32 %v1951, 0.5
  %v1956 = vmul.f32 %v1925, 0.5
  %v1957 = vmul.f32 %v1929, 0.5
  %v1958 = vmul.f32 %v1933, 0.5
  %v1959 = vmul.f32 %v1937, 0.5
  %v1960 = vtanh.pop %v1956
  %v1961 = vtanh.pop %v1957
  %v1962 = vtanh.pop %v1958
  %v1963 = vtanh.pop %v1959
  %v1964 = vmul.f32 %v1960, 0.5
  %v1965 = vmul.f32 %v1961, 0.5
  %v1966 = vmul.f32 %v1962, 0.5
  %v1967 = vmul.f32 %v1963, 0.5
  %v1968 = vadd.f32 %v1964, 0.5
  %v1969 = vadd.f32 %v1965, 0.5
  %v1970 = vadd.f32 %v1966, 0.5
  %v1971 = vadd.f32 %v1967, 0.5
  %v1972 = vtanh.pop %v1926
  %v1973 = vtanh.pop %v1930
  %v1974 = vtanh.pop %v1934
  %v1975 = vtanh.pop %v1938
  %v1976 = vmul.f32 %v1927, 0.5
  %v1977 = vmul.f32 %v1931, 0.5
  %v1978 = vmul.f32 %v1935, 0.5
  %v1979 = vmul.f32 %v1939, 0.5
  %v1980 = vtanh.pop %v1976
  %v1981 = vtanh.pop %v1977
  %v1982 = vtanh.pop %v1978
  %v1983 = vtanh.pop %v1979
  %v1984 = vmul.f32 %v1980, 0.5
  %v1985 = vmul.f32 %v1981, 0.5
  %v1986 = vmul.f32 %v1982, 0.5
  %v1987 = vmul.f32 %v1983, 0.5
  %v1988 = vadd.f32 %v1984, 0.5
  %v1989 = vadd.f32 %v1985, 0.5
  %v1990 = vadd.f32 %v1986, 0.5
  %v1991 = vadd.f32 %v1987, 0.5
  %v1992 = vmul.f32 %v1968, %v1782
  %v1993 = vmul.f32 %v1969, %v1783
  %v1994 = vmul.f32 %v1970, %v1784
  %v1995 = vmul.f32 %v1971, %v1785
  %v1996 = vmul.f32 %v1952, %v1972
  %v1997 = vmul.f32 %v1953, %v1973
  %v1998 = vmul.f32 %v1954, %v1974
  %v1999 = vmul.f32 %v1955, %v1975
  %v2000 = vadd.f32 %v1992, %v1996
  %v2001 = vadd.f32 %v1993, %v1997
  %v2002 = vadd.f32 %v1994, %v1998
  %v2003 = vadd.f32 %v1995, %v1999
  %v2004 = vtanh.pop %v2000
  %v2005 = vtanh.pop %v2001
  %v2006 = vtanh.pop %v2002
  %v2007 = vtanh.pop %v2003
  %v2008 = vmul.f32 %v1988, %v2004
  %v2009 = vmul.f32 %v1989, %v2005
  %v2010 = vmul.f32 %v1990, %v2006
  %v2011 = vmul.f32 %v1991, %v2007
  %v2012 = vpack.c.bf16 %v2009, %v2008
  %v2013 = vpack.c.bf16 %v2011, %v2010
  %s2014 = scalar_lea.vmem [#allocation3], 64
  %2015 = vst [vmem:[%s2014] sm:$0xff] %v2012
  %2016 = vst [vmem:[%s2014 + $0x8] sm:$0xff] %v2013
  %s2017 = smul.u32 20, 4
  %s2018 = smul.addr %s2017, 8
  %s2019 = scalar_lea.vmem [#allocation2], %s2018
  %v2020 = vld [vmem:[%s2019] sm:$0xff]
  %v2021 = vld [vmem:[%s2019 + $0x8] sm:$0xff]
  %v2022 = vld [vmem:[%s2019 + $0x10] sm:$0xff]
  %v2023 = vld [vmem:[%s2019 + $0x18] sm:$0xff]
  %v2024 = vld [vmem:[%s2019 + $0x20] sm:$0xff]
  %v2025 = vld [vmem:[%s2019 + $0x28] sm:$0xff]
  %v2026 = vld [vmem:[%s2019 + $0x30] sm:$0xff]
  %v2027 = vld [vmem:[%s2019 + $0x38] sm:$0xff]
  %v2028 = vld [vmem:[%s2019 + $0x40] sm:$0xff]
  %v2029 = vld [vmem:[%s2019 + $0x48] sm:$0xff]
  %v2030 = vld [vmem:[%s2019 + $0x50] sm:$0xff]
  %v2031 = vld [vmem:[%s2019 + $0x58] sm:$0xff]
  %v2032 = vld [vmem:[%s2019 + $0x60] sm:$0xff]
  %v2033 = vld [vmem:[%s2019 + $0x68] sm:$0xff]
  %v2034 = vld [vmem:[%s2019 + $0x70] sm:$0xff]
  %v2035 = vld [vmem:[%s2019 + $0x78] sm:$0xff]
  %2036 = vmatprep.subr.bf16.mxu0 %v884
  %2037 = vmatpush1.bf16.msra.mxu0 %v883
  %2038 = vmatprep.subr.bf16.mxu0 %v888
  %2039 = vmatpush1.bf16.msra.mxu0 %v887
  %2040 = vmatprep.subr.bf16.mxu0 %v892
  %2041 = vmatpush1.bf16.msra.mxu0 %v891
  %2042 = vmatprep.subr.bf16.mxu0 %v896
  %2043 = vmatpush1.bf16.msra.mxu0 %v895
  %2044 = vmatprep.subr.bf16.mxu0 %v900
  %2045 = vmatpush1.bf16.msra.mxu0 %v899
  %2046 = vmatprep.subr.bf16.mxu0 %v904
  %2047 = vmatpush1.bf16.msra.mxu0 %v903
  %2048 = vmatprep.subr.bf16.mxu0 %v908
  %2049 = vmatpush1.bf16.msra.mxu0 %v907
  %2050 = vmatprep.subr.bf16.mxu0 %v912
  %2051 = vmatpush1.bf16.msra.mxu0 %v911
  %2052 = vmatprep.subr.bf16.mxu0 0
  %2053 = vmatpush1.bf16.msra.mxu0 0
  %2054 = vmatprep.subr.bf16.mxu0 0
  %2055 = vmatpush1.bf16.msra.mxu0 0
  %2056 = vmatprep.subr.bf16.mxu0 0
  %2057 = vmatpush1.bf16.msra.mxu0 0
  %2058 = vmatprep.subr.bf16.mxu0 0
  %2059 = vmatpush1.bf16.msra.mxu0 0
  %2060 = vmatprep.subr.bf16.mxu0 0
  %2061 = vmatpush1.bf16.msra.mxu0 0
  %2062 = vmatprep.subr.bf16.mxu0 0
  %2063 = vmatpush1.bf16.msra.mxu0 0
  %2064 = vmatprep.subr.bf16.mxu0 0
  %2065 = vmatpush1.bf16.msra.mxu0 0
  %2066 = vmatprep.subr.bf16.mxu0 0
  %2067 = vmatpush1.bf16.msra.mxu0 0
  %2068 = vmatprep.mubr.bf16.mxu0 0
  %2069 = vmatmul.mubr.bf16.gmra.mrb[0].mxu0 %v2012
  %v2070 = vpop.f32.mrb[0].mxu0
  %v2071 = vadd.f32 0.0, %v2070
  %v2072 = vpop.f32.mrb[0].mxu0
  %v2073 = vadd.f32 0.0, %v2072
  %v2074 = vpop.f32.mrb[0].mxu0
  %v2075 = vadd.f32 0.0, %v2074
  %v2076 = vpop.f32.mrb[0].mxu0
  %v2077 = vadd.f32 0.0, %v2076
  %2078 = vmatprep.mubr.bf16.mxu0 0
  %2079 = vmatmul.mubr.bf16.gmra.mrb[0].mxu0 %v2013
  %v2080 = vpop.f32.mrb[0].mxu0
  %v2081 = vadd.f32 0.0, %v2080
  %v2082 = vpop.f32.mrb[0].mxu0
  %v2083 = vadd.f32 0.0, %v2082
  %v2084 = vpop.f32.mrb[0].mxu0
  %v2085 = vadd.f32 0.0, %v2084
  %v2086 = vpop.f32.mrb[0].mxu0
  %v2087 = vadd.f32 0.0, %v2086
  %2088 = vdwg.mxu0
  %2089 = vmatprep.subr.bf16.mxu0 %v886
  %2090 = vmatpush1.bf16.msra.mxu0 %v885
  %2091 = vmatprep.subr.bf16.mxu0 %v890
  %2092 = vmatpush1.bf16.msra.mxu0 %v889
  %2093 = vmatprep.subr.bf16.mxu0 %v894
  %2094 = vmatpush1.bf16.msra.mxu0 %v893
  %2095 = vmatprep.subr.bf16.mxu0 %v898
  %2096 = vmatpush1.bf16.msra.mxu0 %v897
  %2097 = vmatprep.subr.bf16.mxu0 %v902
  %2098 = vmatpush1.bf16.msra.mxu0 %v901
  %2099 = vmatprep.subr.bf16.mxu0 %v906
  %2100 = vmatpush1.bf16.msra.mxu0 %v905
  %2101 = vmatprep.subr.bf16.mxu0 %v910
  %2102 = vmatpush1.bf16.msra.mxu0 %v909
  %2103 = vmatprep.subr.bf16.mxu0 %v914
  %2104 = vmatpush1.bf16.msra.mxu0 %v913
  %2105 = vmatprep.subr.bf16.mxu0 0
  %2106 = vmatpush1.bf16.msra.mxu0 0
  %2107 = vmatprep.subr.bf16.mxu0 0
  %2108 = vmatpush1.bf16.msra.mxu0 0
  %2109 = vmatprep.subr.bf16.mxu0 0
  %2110 = vmatpush1.bf16.msra.mxu0 0
  %2111 = vmatprep.subr.bf16.mxu0 0
  %2112 = vmatpush1.bf16.msra.mxu0 0
  %2113 = vmatprep.subr.bf16.mxu0 0
  %2114 = vmatpush1.bf16.msra.mxu0 0
  %2115 = vmatprep.subr.bf16.mxu0 0
  %2116 = vmatpush1.bf16.msra.mxu0 0
  %2117 = vmatprep.subr.bf16.mxu0 0
  %2118 = vmatpush1.bf16.msra.mxu0 0
  %2119 = vmatprep.subr.bf16.mxu0 0
  %2120 = vmatpush1.bf16.msra.mxu0 0
  %2121 = vmatprep.mubr.bf16.mxu0 0
  %2122 = vmatmul.mubr.bf16.gmra.mrb[0].mxu0 %v2012
  %v2123 = vpop.f32.mrb[0].mxu0
  %v2124 = vadd.f32 0.0, %v2123
  %v2125 = vpop.f32.mrb[0].mxu0
  %v2126 = vadd.f32 0.0, %v2125
  %v2127 = vpop.f32.mrb[0].mxu0
  %v2128 = vadd.f32 0.0, %v2127
  %v2129 = vpop.f32.mrb[0].mxu0
  %v2130 = vadd.f32 0.0, %v2129
  %2131 = vmatprep.mubr.bf16.mxu0 0
  %2132 = vmatmul.mubr.bf16.gmra.mrb[0].mxu0 %v2013
  %v2133 = vpop.f32.mrb[0].mxu0
  %v2134 = vadd.f32 0.0, %v2133
  %v2135 = vpop.f32.mrb[0].mxu0
  %v2136 = vadd.f32 0.0, %v2135
  %v2137 = vpop.f32.mrb[0].mxu0
  %v2138 = vadd.f32 0.0, %v2137
  %v2139 = vpop.f32.mrb[0].mxu0
  %v2140 = vadd.f32 0.0, %v2139
  %2141 = vdwg.mxu0
  %v2142 = vadd.f32 %v2020, %v2071
  %v2143 = vadd.f32 %v2021, %v2073
  %v2144 = vadd.f32 %v2022, %v2124
  %v2145 = vadd.f32 %v2023, %v2126
  %v2146 = vadd.f32 %v2024, %v2075
  %v2147 = vadd.f32 %v2025, %v2077
  %v2148 = vadd.f32 %v2026, %v2128
  %v2149 = vadd.f32 %v2027, %v2130
  %v2150 = vadd.f32 %v2028, %v2081
  %v2151 = vadd.f32 %v2029, %v2083
  %v2152 = vadd.f32 %v2030, %v2134
  %v2153 = vadd.f32 %v2031, %v2136
  %v2154 = vadd.f32 %v2032, %v2085
  %v2155 = vadd.f32 %v2033, %v2087
  %v2156 = vadd.f32 %v2034, %v2138
  %v2157 = vadd.f32 %v2035, %v2140
  %v2158 = vmul.f32 %v2142, 0.5
  %v2159 = vmul.f32 %v2146, 0.5
  %v2160 = vmul.f32 %v2150, 0.5
  %v2161 = vmul.f32 %v2154, 0.5
  %v2162 = vtanh.pop %v2158
  %v2163 = vtanh.pop %v2159
  %v2164 = vtanh.pop %v2160
  %v2165 = vtanh.pop %v2161
  %v2166 = vmul.f32 %v2162, 0.5
  %v2167 = vmul.f32 %v2163, 0.5
  %v2168 = vmul.f32 %v2164, 0.5
  %v2169 = vmul.f32 %v2165, 0.5
  %v2170 = vadd.f32 %v2166, 0.5
  %v2171 = vadd.f32 %v2167, 0.5
  %v2172 = vadd.f32 %v2168, 0.5
  %v2173 = vadd.f32 %v2169, 0.5
  %v2174 = vmul.f32 %v2143, 0.5
  %v2175 = vmul.f32 %v2147, 0.5
  %v2176 = vmul.f32 %v2151, 0.5
  %v2177 = vmul.f32 %v2155, 0.5
  %v2178 = vtanh.pop %v2174
  %v2179 = vtanh.pop %v2175
  %v2180 = vtanh.pop %v2176
  %v2181 = vtanh.pop %v2177
  %v2182 = vmul.f32 %v2178, 0.5
  %v2183 = vmul.f32 %v2179, 0.5
  %v2184 = vmul.f32 %v2180, 0.5
  %v2185 = vmul.f32 %v2181, 0.5
  %v2186 = vadd.f32 %v2182, 0.5
  %v2187 = vadd.f32 %v2183, 0.5
  %v2188 = vadd.f32 %v2184, 0.5
  %v2189 = vadd.f32 %v2185, 0.5
  %v2190 = vtanh.pop %v2144
  %v2191 = vtanh.pop %v2148
  %v2192 = vtanh.pop %v2152
  %v2193 = vtanh.pop %v2156
  %v2194 = vmul.f32 %v2145, 0.5
  %v2195 = vmul.f32 %v2149, 0.5
  %v2196 = vmul.f32 %v2153, 0.5
  %v2197 = vmul.f32 %v2157, 0.5
  %v2198 = vtanh.pop %v2194
  %v2199 = vtanh.pop %v2195
  %v2200 = vtanh.pop %v2196
  %v2201 = vtanh.pop %v2197
  %v2202 = vmul.f32 %v2198, 0.5
  %v2203 = vmul.f32 %v2199, 0.5
  %v2204 = vmul.f32 %v2200, 0.5
  %v2205 = vmul.f32 %v2201, 0.5
  %v2206 = vadd.f32 %v2202, 0.5
  %v2207 = vadd.f32 %v2203, 0.5
  %v2208 = vadd.f32 %v2204, 0.5
  %v2209 = vadd.f32 %v2205, 0.5
  %v2210 = vmul.f32 %v2186, %v2000
  %v2211 = vmul.f32 %v2187, %v2001
  %v2212 = vmul.f32 %v2188, %v2002
  %v2213 = vmul.f32 %v2189, %v2003
  %v2214 = vmul.f32 %v2170, %v2190
  %v2215 = vmul.f32 %v2171, %v2191
  %v2216 = vmul.f32 %v2172, %v2192
  %v2217 = vmul.f32 %v2173, %v2193
  %v2218 = vadd.f32 %v2210, %v2214
  %v2219 = vadd.f32 %v2211, %v2215
  %v2220 = vadd.f32 %v2212, %v2216
  %v2221 = vadd.f32 %v2213, %v2217
  %v2222 = vtanh.pop %v2218
  %v2223 = vtanh.pop %v2219
  %v2224 = vtanh.pop %v2220
  %v2225 = vtanh.pop %v2221
  %v2226 = vmul.f32 %v2206, %v2222
  %v2227 = vmul.f32 %v2207, %v2223
  %v2228 = vmul.f32 %v2208, %v2224
  %v2229 = vmul.f32 %v2209, %v2225
  %v2230 = vpack.c.bf16 %v2227, %v2226
  %v2231 = vpack.c.bf16 %v2229, %v2228
  %s2232 = scalar_lea.vmem [#allocation3], 80
  %2233 = vst [vmem:[%s2232] sm:$0xff] %v2230
  %2234 = vst [vmem:[%s2232 + $0x8] sm:$0xff] %v2231
  %s2235 = smul.u32 24, 4
  %s2236 = smul.addr %s2235, 8
  %s2237 = scalar_lea.vmem [#allocation2], %s2236
  %v2238 = vld [vmem:[%s2237] sm:$0xff]
  %v2239 = vld [vmem:[%s2237 + $0x8] sm:$0xff]
  %v2240 = vld [vmem:[%s2237 + $0x10] sm:$0xff]
  %v2241 = vld [vmem:[%s2237 + $0x18] sm:$0xff]
  %v2242 = vld [vmem:[%s2237 + $0x20] sm:$0xff]
  %v2243 = vld [vmem:[%s2237 + $0x28] sm:$0xff]
  %v2244 = vld [vmem:[%s2237 + $0x30] sm:$0xff]
  %v2245 = vld [vmem:[%s2237 + $0x38] sm:$0xff]
  %v2246 = vld [vmem:[%s2237 + $0x40] sm:$0xff]
  %v2247 = vld [vmem:[%s2237 + $0x48] sm:$0xff]
  %v2248 = vld [vmem:[%s2237 + $0x50] sm:$0xff]
  %v2249 = vld [vmem:[%s2237 + $0x58] sm:$0xff]
  %v2250 = vld [vmem:[%s2237 + $0x60] sm:$0xff]
  %v2251 = vld [vmem:[%s2237 + $0x68] sm:$0xff]
  %v2252 = vld [vmem:[%s2237 + $0x70] sm:$0xff]
  %v2253 = vld [vmem:[%s2237 + $0x78] sm:$0xff]
  %2254 = vmatprep.subr.bf16.mxu0 %v884
  %2255 = vmatpush1.bf16.msra.mxu0 %v883
  %2256 = vmatprep.subr.bf16.mxu0 %v888
  %2257 = vmatpush1.bf16.msra.mxu0 %v887
  %2258 = vmatprep.subr.bf16.mxu0 %v892
  %2259 = vmatpush1.bf16.msra.mxu0 %v891
  %2260 = vmatprep.subr.bf16.mxu0 %v896
  %2261 = vmatpush1.bf16.msra.mxu0 %v895
  %2262 = vmatprep.subr.bf16.mxu0 %v900
  %2263 = vmatpush1.bf16.msra.mxu0 %v899
  %2264 = vmatprep.subr.bf16.mxu0 %v904
  %2265 = vmatpush1.bf16.msra.mxu0 %v903
  %2266 = vmatprep.subr.bf16.mxu0 %v908
  %2267 = vmatpush1.bf16.msra.mxu0 %v907
  %2268 = vmatprep.subr.bf16.mxu0 %v912
  %2269 = vmatpush1.bf16.msra.mxu0 %v911
  %2270 = vmatprep.subr.bf16.mxu0 0
  %2271 = vmatpush1.bf16.msra.mxu0 0
  %2272 = vmatprep.subr.bf16.mxu0 0
  %2273 = vmatpush1.bf16.msra.mxu0 0
  %2274 = vmatprep.subr.bf16.mxu0 0
  %2275 = vmatpush1.bf16.msra.mxu0 0
  %2276 = vmatprep.subr.bf16.mxu0 0
  %2277 = vmatpush1.bf16.msra.mxu0 0
  %2278 = vmatprep.subr.bf16.mxu0 0
  %2279 = vmatpush1.bf16.msra.mxu0 0
  %2280 = vmatprep.subr.bf16.mxu0 0
  %2281 = vmatpush1.bf16.msra.mxu0 0
  %2282 = vmatprep.subr.bf16.mxu0 0
  %2283 = vmatpush1.bf16.msra.mxu0 0
  %2284 = vmatprep.subr.bf16.mxu0 0
  %2285 = vmatpush1.bf16.msra.mxu0 0
  %2286 = vmatprep.mubr.bf16.mxu0 0
  %2287 = vmatmul.mubr.bf16.gmra.mrb[0].mxu0 %v2230
  %v2288 = vpop.f32.mrb[0].mxu0
  %v2289 = vadd.f32 0.0, %v2288
  %v2290 = vpop.f32.mrb[0].mxu0
  %v2291 = vadd.f32 0.0, %v2290
  %v2292 = vpop.f32.mrb[0].mxu0
  %v2293 = vadd.f32 0.0, %v2292
  %v2294 = vpop.f32.mrb[0].mxu0
  %v2295 = vadd.f32 0.0, %v2294
  %2296 = vmatprep.mubr.bf16.mxu0 0
  %2297 = vmatmul.mubr.bf16.gmra.mrb[0].mxu0 %v2231
  %v2298 = vpop.f32.mrb[0].mxu0
  %v2299 = vadd.f32 0.0, %v2298
  %v2300 = vpop.f32.mrb[0].mxu0
  %v2301 = vadd.f32 0.0, %v2300
  %v2302 = vpop.f32.mrb[0].mxu0
  %v2303 = vadd.f32 0.0, %v2302
  %v2304 = vpop.f32.mrb[0].mxu0
  %v2305 = vadd.f32 0.0, %v2304
  %2306 = vdwg.mxu0
  %2307 = vmatprep.subr.bf16.mxu0 %v886
  %2308 = vmatpush1.bf16.msra.mxu0 %v885
  %2309 = vmatprep.subr.bf16.mxu0 %v890
  %2310 = vmatpush1.bf16.msra.mxu0 %v889
  %2311 = vmatprep.subr.bf16.mxu0 %v894
  %2312 = vmatpush1.bf16.msra.mxu0 %v893
  %2313 = vmatprep.subr.bf16.mxu0 %v898
  %2314 = vmatpush1.bf16.msra.mxu0 %v897
  %2315 = vmatprep.subr.bf16.mxu0 %v902
  %2316 = vmatpush1.bf16.msra.mxu0 %v901
  %2317 = vmatprep.subr.bf16.mxu0 %v906
  %2318 = vmatpush1.bf16.msra.mxu0 %v905
  %2319 = vmatprep.subr.bf16.mxu0 %v910
  %2320 = vmatpush1.bf16.msra.mxu0 %v909
  %2321 = vmatprep.subr.bf16.mxu0 %v914
  %2322 = vmatpush1.bf16.msra.mxu0 %v913
  %2323 = vmatprep.subr.bf16.mxu0 0
  %2324 = vmatpush1.bf16.msra.mxu0 0
  %2325 = vmatprep.subr.bf16.mxu0 0
  %2326 = vmatpush1.bf16.msra.mxu0 0
  %2327 = vmatprep.subr.bf16.mxu0 0
  %2328 = vmatpush1.bf16.msra.mxu0 0
  %2329 = vmatprep.subr.bf16.mxu0 0
  %2330 = vmatpush1.bf16.msra.mxu0 0
  %2331 = vmatprep.subr.bf16.mxu0 0
  %2332 = vmatpush1.bf16.msra.mxu0 0
  %2333 = vmatprep.subr.bf16.mxu0 0
  %2334 = vmatpush1.bf16.msra.mxu0 0
  %2335 = vmatprep.subr.bf16.mxu0 0
  %2336 = vmatpush1.bf16.msra.mxu0 0
  %2337 = vmatprep.subr.bf16.mxu0 0
  %2338 = vmatpush1.bf16.msra.mxu0 0
  %2339 = vmatprep.mubr.bf16.mxu0 0
  %2340 = vmatmul.mubr.bf16.gmra.mrb[0].mxu0 %v2230
  %v2341 = vpop.f32.mrb[0].mxu0
  %v2342 = vadd.f32 0.0, %v2341
  %v2343 = vpop.f32.mrb[0].mxu0
  %v2344 = vadd.f32 0.0, %v2343
  %v2345 = vpop.f32.mrb[0].mxu0
  %v2346 = vadd.f32 0.0, %v2345
  %v2347 = vpop.f32.mrb[0].mxu0
  %v2348 = vadd.f32 0.0, %v2347
  %2349 = vmatprep.mubr.bf16.mxu0 0
  %2350 = vmatmul.mubr.bf16.gmra.mrb[0].mxu0 %v2231
  %v2351 = vpop.f32.mrb[0].mxu0
  %v2352 = vadd.f32 0.0, %v2351
  %v2353 = vpop.f32.mrb[0].mxu0
  %v2354 = vadd.f32 0.0, %v2353
  %v2355 = vpop.f32.mrb[0].mxu0
  %v2356 = vadd.f32 0.0, %v2355
  %v2357 = vpop.f32.mrb[0].mxu0
  %v2358 = vadd.f32 0.0, %v2357
  %2359 = vdwg.mxu0
  %v2360 = vadd.f32 %v2238, %v2289
  %v2361 = vadd.f32 %v2239, %v2291
  %v2362 = vadd.f32 %v2240, %v2342
  %v2363 = vadd.f32 %v2241, %v2344
  %v2364 = vadd.f32 %v2242, %v2293
  %v2365 = vadd.f32 %v2243, %v2295
  %v2366 = vadd.f32 %v2244, %v2346
  %v2367 = vadd.f32 %v2245, %v2348
  %v2368 = vadd.f32 %v2246, %v2299
  %v2369 = vadd.f32 %v2247, %v2301
  %v2370 = vadd.f32 %v2248, %v2352
  %v2371 = vadd.f32 %v2249, %v2354
  %v2372 = vadd.f32 %v2250, %v2303
  %v2373 = vadd.f32 %v2251, %v2305
  %v2374 = vadd.f32 %v2252, %v2356
  %v2375 = vadd.f32 %v2253, %v2358
  %v2376 = vmul.f32 %v2360, 0.5
  %v2377 = vmul.f32 %v2364, 0.5
  %v2378 = vmul.f32 %v2368, 0.5
  %v2379 = vmul.f32 %v2372, 0.5
  %v2380 = vtanh.pop %v2376
  %v2381 = vtanh.pop %v2377
  %v2382 = vtanh.pop %v2378
  %v2383 = vtanh.pop %v2379
  %v2384 = vmul.f32 %v2380, 0.5
  %v2385 = vmul.f32 %v2381, 0.5
  %v2386 = vmul.f32 %v2382, 0.5
  %v2387 = vmul.f32 %v2383, 0.5
  %v2388 = vadd.f32 %v2384, 0.5
  %v2389 = vadd.f32 %v2385, 0.5
  %v2390 = vadd.f32 %v2386, 0.5
  %v2391 = vadd.f32 %v2387, 0.5
  %v2392 = vmul.f32 %v2361, 0.5
  %v2393 = vmul.f32 %v2365, 0.5
  %v2394 = vmul.f32 %v2369, 0.5
  %v2395 = vmul.f32 %v2373, 0.5
  %v2396 = vtanh.pop %v2392
  %v2397 = vtanh.pop %v2393
  %v2398 = vtanh.pop %v2394
  %v2399 = vtanh.pop %v2395
  %v2400 = vmul.f32 %v2396, 0.5
  %v2401 = vmul.f32 %v2397, 0.5
  %v2402 = vmul.f32 %v2398, 0.5
  %v2403 = vmul.f32 %v2399, 0.5
  %v2404 = vadd.f32 %v2400, 0.5
  %v2405 = vadd.f32 %v2401, 0.5
  %v2406 = vadd.f32 %v2402, 0.5
  %v2407 = vadd.f32 %v2403, 0.5
  %v2408 = vtanh.pop %v2362
  %v2409 = vtanh.pop %v2366
  %v2410 = vtanh.pop %v2370
  %v2411 = vtanh.pop %v2374
  %v2412 = vmul.f32 %v2363, 0.5
  %v2413 = vmul.f32 %v2367, 0.5
  %v2414 = vmul.f32 %v2371, 0.5
  %v2415 = vmul.f32 %v2375, 0.5
  %v2416 = vtanh.pop %v2412
  %v2417 = vtanh.pop %v2413
  %v2418 = vtanh.pop %v2414
  %v2419 = vtanh.pop %v2415
  %v2420 = vmul.f32 %v2416, 0.5
  %v2421 = vmul.f32 %v2417, 0.5
  %v2422 = vmul.f32 %v2418, 0.5
  %v2423 = vmul.f32 %v2419, 0.5
  %v2424 = vadd.f32 %v2420, 0.5
  %v2425 = vadd.f32 %v2421, 0.5
  %v2426 = vadd.f32 %v2422, 0.5
  %v2427 = vadd.f32 %v2423, 0.5
  %v2428 = vmul.f32 %v2404, %v2218
  %v2429 = vmul.f32 %v2405, %v2219
  %v2430 = vmul.f32 %v2406, %v2220
  %v2431 = vmul.f32 %v2407, %v2221
  %v2432 = vmul.f32 %v2388, %v2408
  %v2433 = vmul.f32 %v2389, %v2409
  %v2434 = vmul.f32 %v2390, %v2410
  %v2435 = vmul.f32 %v2391, %v2411
  %v2436 = vadd.f32 %v2428, %v2432
  %v2437 = vadd.f32 %v2429, %v2433
  %v2438 = vadd.f32 %v2430, %v2434
  %v2439 = vadd.f32 %v2431, %v2435
  %v2440 = vtanh.pop %v2436
  %v2441 = vtanh.pop %v2437
  %v2442 = vtanh.pop %v2438
  %v2443 = vtanh.pop %v2439
  %v2444 = vmul.f32 %v2424, %v2440
  %v2445 = vmul.f32 %v2425, %v2441
  %v2446 = vmul.f32 %v2426, %v2442
  %v2447 = vmul.f32 %v2427, %v2443
  %v2448 = vpack.c.bf16 %v2445, %v2444
  %v2449 = vpack.c.bf16 %v2447, %v2446
  %s2450 = scalar_lea.vmem [#allocation3], 96
  %2451 = vst [vmem:[%s2450] sm:$0xff] %v2448
  %2452 = vst [vmem:[%s2450 + $0x8] sm:$0xff] %v2449
  %s2453 = smul.u32 28, 4
  %s2454 = smul.addr %s2453, 8
  %s2455 = scalar_lea.vmem [#allocation2], %s2454
  %v2456 = vld [vmem:[%s2455] sm:$0xff]
  %v2457 = vld [vmem:[%s2455 + $0x8] sm:$0xff]
  %v2458 = vld [vmem:[%s2455 + $0x10] sm:$0xff]
  %v2459 = vld [vmem:[%s2455 + $0x18] sm:$0xff]
  %v2460 = vld [vmem:[%s2455 + $0x20] sm:$0xff]
  %v2461 = vld [vmem:[%s2455 + $0x28] sm:$0xff]
  %v2462 = vld [vmem:[%s2455 + $0x30] sm:$0xff]
  %v2463 = vld [vmem:[%s2455 + $0x38] sm:$0xff]
  %v2464 = vld [vmem:[%s2455 + $0x40] sm:$0xff]
  %v2465 = vld [vmem:[%s2455 + $0x48] sm:$0xff]
  %v2466 = vld [vmem:[%s2455 + $0x50] sm:$0xff]
  %v2467 = vld [vmem:[%s2455 + $0x58] sm:$0xff]
  %v2468 = vld [vmem:[%s2455 + $0x60] sm:$0xff]
  %v2469 = vld [vmem:[%s2455 + $0x68] sm:$0xff]
  %v2470 = vld [vmem:[%s2455 + $0x70] sm:$0xff]
  %v2471 = vld [vmem:[%s2455 + $0x78] sm:$0xff]
  %2472 = vmatprep.subr.bf16.mxu0 %v884
  %2473 = vmatpush1.bf16.msra.mxu0 %v883
  %2474 = vmatprep.subr.bf16.mxu0 %v888
  %2475 = vmatpush1.bf16.msra.mxu0 %v887
  %2476 = vmatprep.subr.bf16.mxu0 %v892
  %2477 = vmatpush1.bf16.msra.mxu0 %v891
  %2478 = vmatprep.subr.bf16.mxu0 %v896
  %2479 = vmatpush1.bf16.msra.mxu0 %v895
  %2480 = vmatprep.subr.bf16.mxu0 %v900
  %2481 = vmatpush1.bf16.msra.mxu0 %v899
  %2482 = vmatprep.subr.bf16.mxu0 %v904
  %2483 = vmatpush1.bf16.msra.mxu0 %v903
  %2484 = vmatprep.subr.bf16.mxu0 %v908
  %2485 = vmatpush1.bf16.msra.mxu0 %v907
  %2486 = vmatprep.subr.bf16.mxu0 %v912
  %2487 = vmatpush1.bf16.msra.mxu0 %v911
  %2488 = vmatprep.subr.bf16.mxu0 0
  %2489 = vmatpush1.bf16.msra.mxu0 0
  %2490 = vmatprep.subr.bf16.mxu0 0
  %2491 = vmatpush1.bf16.msra.mxu0 0
  %2492 = vmatprep.subr.bf16.mxu0 0
  %2493 = vmatpush1.bf16.msra.mxu0 0
  %2494 = vmatprep.subr.bf16.mxu0 0
  %2495 = vmatpush1.bf16.msra.mxu0 0
  %2496 = vmatprep.subr.bf16.mxu0 0
  %2497 = vmatpush1.bf16.msra.mxu0 0
  %2498 = vmatprep.subr.bf16.mxu0 0
  %2499 = vmatpush1.bf16.msra.mxu0 0
  %2500 = vmatprep.subr.bf16.mxu0 0
  %2501 = vmatpush1.bf16.msra.mxu0 0
  %2502 = vmatprep.subr.bf16.mxu0 0
  %2503 = vmatpush1.bf16.msra.mxu0 0
  %2504 = vmatprep.mubr.bf16.mxu0 0
  %2505 = vmatmul.mubr.bf16.gmra.mrb[0].mxu0 %v2448
  %v2506 = vpop.f32.mrb[0].mxu0
  %v2507 = vadd.f32 0.0, %v2506
  %v2508 = vpop.f32.mrb[0].mxu0
  %v2509 = vadd.f32 0.0, %v2508
  %v2510 = vpop.f32.mrb[0].mxu0
  %v2511 = vadd.f32 0.0, %v2510
  %v2512 = vpop.f32.mrb[0].mxu0
  %v2513 = vadd.f32 0.0, %v2512
  %2514 = vmatprep.mubr.bf16.mxu0 0
  %2515 = vmatmul.mubr.bf16.gmra.mrb[0].mxu0 %v2449
  %v2516 = vpop.f32.mrb[0].mxu0
  %v2517 = vadd.f32 0.0, %v2516
  %v2518 = vpop.f32.mrb[0].mxu0
  %v2519 = vadd.f32 0.0, %v2518
  %v2520 = vpop.f32.mrb[0].mxu0
  %v2521 = vadd.f32 0.0, %v2520
  %v2522 = vpop.f32.mrb[0].mxu0
  %v2523 = vadd.f32 0.0, %v2522
  %2524 = vdwg.mxu0
  %2525 = vmatprep.subr.bf16.mxu0 %v886
  %2526 = vmatpush1.bf16.msra.mxu0 %v885
  %2527 = vmatprep.subr.bf16.mxu0 %v890
  %2528 = vmatpush1.bf16.msra.mxu0 %v889
  %2529 = vmatprep.subr.bf16.mxu0 %v894
  %2530 = vmatpush1.bf16.msra.mxu0 %v893
  %2531 = vmatprep.subr.bf16.mxu0 %v898
  %2532 = vmatpush1.bf16.msra.mxu0 %v897
  %2533 = vmatprep.subr.bf16.mxu0 %v902
  %2534 = vmatpush1.bf16.msra.mxu0 %v901
  %2535 = vmatprep.subr.bf16.mxu0 %v906
  %2536 = vmatpush1.bf16.msra.mxu0 %v905
  %2537 = vmatprep.subr.bf16.mxu0 %v910
  %2538 = vmatpush1.bf16.msra.mxu0 %v909
  %2539 = vmatprep.subr.bf16.mxu0 %v914
  %2540 = vmatpush1.bf16.msra.mxu0 %v913
  %2541 = vmatprep.subr.bf16.mxu0 0
  %2542 = vmatpush1.bf16.msra.mxu0 0
  %2543 = vmatprep.subr.bf16.mxu0 0
  %2544 = vmatpush1.bf16.msra.mxu0 0
  %2545 = vmatprep.subr.bf16.mxu0 0
  %2546 = vmatpush1.bf16.msra.mxu0 0
  %2547 = vmatprep.subr.bf16.mxu0 0
  %2548 = vmatpush1.bf16.msra.mxu0 0
  %2549 = vmatprep.subr.bf16.mxu0 0
  %2550 = vmatpush1.bf16.msra.mxu0 0
  %2551 = vmatprep.subr.bf16.mxu0 0
  %2552 = vmatpush1.bf16.msra.mxu0 0
  %2553 = vmatprep.subr.bf16.mxu0 0
  %2554 = vmatpush1.bf16.msra.mxu0 0
  %2555 = vmatprep.subr.bf16.mxu0 0
  %2556 = vmatpush1.bf16.msra.mxu0 0
  %2557 = vmatprep.mubr.bf16.mxu0 0
  %2558 = vmatmul.mubr.bf16.gmra.mrb[0].mxu0 %v2448
  %v2559 = vpop.f32.mrb[0].mxu0
  %v2560 = vadd.f32 0.0, %v2559
  %v2561 = vpop.f32.mrb[0].mxu0
  %v2562 = vadd.f32 0.0, %v2561
  %v2563 = vpop.f32.mrb[0].mxu0
  %v2564 = vadd.f32 0.0, %v2563
  %v2565 = vpop.f32.mrb[0].mxu0
  %v2566 = vadd.f32 0.0, %v2565
  %2567 = vmatprep.mubr.bf16.mxu0 0
  %2568 = vmatmul.mubr.bf16.gmra.mrb[0].mxu0 %v2449
  %v2569 = vpop.f32.mrb[0].mxu0
  %v2570 = vadd.f32 0.0, %v2569
  %v2571 = vpop.f32.mrb[0].mxu0
  %v2572 = vadd.f32 0.0, %v2571
  %v2573 = vpop.f32.mrb[0].mxu0
  %v2574 = vadd.f32 0.0, %v2573
  %v2575 = vpop.f32.mrb[0].mxu0
  %v2576 = vadd.f32 0.0, %v2575
  %2577 = vdwg.mxu0
  %v2578 = vadd.f32 %v2456, %v2507
  %v2579 = vadd.f32 %v2457, %v2509
  %v2580 = vadd.f32 %v2458, %v2560
  %v2581 = vadd.f32 %v2459, %v2562
  %v2582 = vadd.f32 %v2460, %v2511
  %v2583 = vadd.f32 %v2461, %v2513
  %v2584 = vadd.f32 %v2462, %v2564
  %v2585 = vadd.f32 %v2463, %v2566
  %v2586 = vadd.f32 %v2464, %v2517
  %v2587 = vadd.f32 %v2465, %v2519
  %v2588 = vadd.f32 %v2466, %v2570
  %v2589 = vadd.f32 %v2467, %v2572
  %v2590 = vadd.f32 %v2468, %v2521
  %v2591 = vadd.f32 %v2469, %v2523
  %v2592 = vadd.f32 %v2470, %v2574
  %v2593 = vadd.f32 %v2471, %v2576
  %v2594 = vmul.f32 %v2578, 0.5
  %v2595 = vmul.f32 %v2582, 0.5
  %v2596 = vmul.f32 %v2586, 0.5
  %v2597 = vmul.f32 %v2590, 0.5
  %v2598 = vtanh.pop %v2594
  %v2599 = vtanh.pop %v2595
  %v2600 = vtanh.pop %v2596
  %v2601 = vtanh.pop %v2597
  %v2602 = vmul.f32 %v2598, 0.5
  %v2603 = vmul.f32 %v2599, 0.5
  %v2604 = vmul.f32 %v2600, 0.5
  %v2605 = vmul.f32 %v2601, 0.5
  %v2606 = vadd.f32 %v2602, 0.5
  %v2607 = vadd.f32 %v2603, 0.5
  %v2608 = vadd.f32 %v2604, 0.5
  %v2609 = vadd.f32 %v2605, 0.5
  %v2610 = vmul.f32 %v2579, 0.5
  %v2611 = vmul.f32 %v2583, 0.5
  %v2612 = vmul.f32 %v2587, 0.5
  %v2613 = vmul.f32 %v2591, 0.5
  %v2614 = vtanh.pop %v2610
  %v2615 = vtanh.pop %v2611
  %v2616 = vtanh.pop %v2612
  %v2617 = vtanh.pop %v2613
  %v2618 = vmul.f32 %v2614, 0.5
  %v2619 = vmul.f32 %v2615, 0.5
  %v2620 = vmul.f32 %v2616, 0.5
  %v2621 = vmul.f32 %v2617, 0.5
  %v2622 = vadd.f32 %v2618, 0.5
  %v2623 = vadd.f32 %v2619, 0.5
  %v2624 = vadd.f32 %v2620, 0.5
  %v2625 = vadd.f32 %v2621, 0.5
  %v2626 = vtanh.pop %v2580
  %v2627 = vtanh.pop %v2584
  %v2628 = vtanh.pop %v2588
  %v2629 = vtanh.pop %v2592
  %v2630 = vmul.f32 %v2581, 0.5
  %v2631 = vmul.f32 %v2585, 0.5
  %v2632 = vmul.f32 %v2589, 0.5
  %v2633 = vmul.f32 %v2593, 0.5
  %v2634 = vtanh.pop %v2630
  %v2635 = vtanh.pop %v2631
  %v2636 = vtanh.pop %v2632
  %v2637 = vtanh.pop %v2633
  %v2638 = vmul.f32 %v2634, 0.5
  %v2639 = vmul.f32 %v2635, 0.5
  %v2640 = vmul.f32 %v2636, 0.5
  %v2641 = vmul.f32 %v2637, 0.5
  %v2642 = vadd.f32 %v2638, 0.5
  %v2643 = vadd.f32 %v2639, 0.5
  %v2644 = vadd.f32 %v2640, 0.5
  %v2645 = vadd.f32 %v2641, 0.5
  %v2646 = vmul.f32 %v2622, %v2436
  %v2647 = vmul.f32 %v2623, %v2437
  %v2648 = vmul.f32 %v2624, %v2438
  %v2649 = vmul.f32 %v2625, %v2439
  %v2650 = vmul.f32 %v2606, %v2626
  %v2651 = vmul.f32 %v2607, %v2627
  %v2652 = vmul.f32 %v2608, %v2628
  %v2653 = vmul.f32 %v2609, %v2629
  %v2654 = vadd.f32 %v2646, %v2650
  %v2655 = vadd.f32 %v2647, %v2651
  %v2656 = vadd.f32 %v2648, %v2652
  %v2657 = vadd.f32 %v2649, %v2653
  %v2658 = vtanh.pop %v2654
  %v2659 = vtanh.pop %v2655
  %v2660 = vtanh.pop %v2656
  %v2661 = vtanh.pop %v2657
  %v2662 = vmul.f32 %v2642, %v2658
  %v2663 = vmul.f32 %v2643, %v2659
  %v2664 = vmul.f32 %v2644, %v2660
  %v2665 = vmul.f32 %v2645, %v2661
  %v2666 = vpack.c.bf16 %v2663, %v2662
  %v2667 = vpack.c.bf16 %v2665, %v2664
  %s2668 = scalar_lea.vmem [#allocation3], 112
  %2669 = vst [vmem:[%s2668] sm:$0xff] %v2666
  %2670 = vst [vmem:[%s2668 + $0x8] sm:$0xff] %v2667
  %v2671 = vld [vmem:[#allocation3] sm:$0xff]
  %v2672 = vld [vmem:[#allocation3 + $0x8] sm:$0xff]
  %v2673 = vld [vmem:[#allocation3 + $0x10] sm:$0xff]
  %v2674 = vld [vmem:[#allocation3 + $0x18] sm:$0xff]
  %v2675 = vld [vmem:[#allocation3 + $0x20] sm:$0xff]
  %v2676 = vld [vmem:[#allocation3 + $0x28] sm:$0xff]
  %v2677 = vld [vmem:[#allocation3 + $0x30] sm:$0xff]
  %v2678 = vld [vmem:[#allocation3 + $0x38] sm:$0xff]
  %v2679 = vld [vmem:[#allocation3 + $0x40] sm:$0xff]
  %v2680 = vld [vmem:[#allocation3 + $0x48] sm:$0xff]
  %v2681 = vld [vmem:[#allocation3 + $0x50] sm:$0xff]
  %v2682 = vld [vmem:[#allocation3 + $0x58] sm:$0xff]
  %v2683 = vld [vmem:[#allocation3 + $0x60] sm:$0xff]
  %v2684 = vld [vmem:[#allocation3 + $0x68] sm:$0xff]
  %v2685 = vld [vmem:[#allocation3 + $0x70] sm:$0xff]
  %v2686 = vld [vmem:[#allocation3 + $0x78] sm:$0xff]
  %v2687 = vld [vmem:[%s6] sm:$0xf]
  %v2688 = vld [vmem:[%s6 + $0x4] sm:$0xf]
  %v2689 = vld [vmem:[%s6 + $0x8] sm:$0xf]
  %v2690 = vld [vmem:[%s6 + $0xc] sm:$0xf]
  %v2691 = vld [vmem:[%s6 + $0x10] sm:$0xf]
  %v2692 = vld [vmem:[%s6 + $0x14] sm:$0xf]
  %v2693 = vld [vmem:[%s6 + $0x18] sm:$0xf]
  %v2694 = vld [vmem:[%s6 + $0x1c] sm:$0xf]
  %v2695 = vld [vmem:[%s6 + $0x20] sm:$0xf]
  %v2696 = vld [vmem:[%s6 + $0x24] sm:$0xf]
  %v2697 = vld [vmem:[%s6 + $0x28] sm:$0xf]
  %v2698 = vld [vmem:[%s6 + $0x2c] sm:$0xf]
  %v2699 = vld [vmem:[%s6 + $0x30] sm:$0xf]
  %v2700 = vld [vmem:[%s6 + $0x34] sm:$0xf]
  %v2701 = vld [vmem:[%s6 + $0x38] sm:$0xf]
  %v2702 = vld [vmem:[%s6 + $0x3c] sm:$0xf]
  %v2703 = vld [vmem:[%s7] sm:$0x1]
  %v2705 = vlaneseq
  %v2706 = vshrl.u32 %v2705, 7
  %v2707 = vsub.s32 0, %v2706
  %v2708 = vrot.slane %v2703, %v2707
  %v2726 = vunpack.c.l.b16 %v2687
  %v2727 = vunpack.c.l.b16 %v2688
  %v2728 = vunpack.c.l.b16 %v2689
  %v2729 = vunpack.c.l.b16 %v2690
  %v2730 = vunpack.c.l.b16 %v2691
  %v2731 = vunpack.c.l.b16 %v2692
  %v2732 = vunpack.c.l.b16 %v2693
  %v2733 = vunpack.c.l.b16 %v2694
  %v2734 = vunpack.c.l.b16 %v2695
  %v2735 = vunpack.c.l.b16 %v2696
  %v2736 = vunpack.c.l.b16 %v2697
  %v2737 = vunpack.c.l.b16 %v2698
  %v2738 = vunpack.c.l.b16 %v2699
  %v2739 = vunpack.c.l.b16 %v2700
  %v2740 = vunpack.c.l.b16 %v2701
  %v2741 = vunpack.c.l.b16 %v2702
  %v2742 = vpack.c.b16 %v2727, %v2726
  %v2743 = vpack.c.b16 %v2729, %v2728
  %v2744 = vpack.c.b16 %v2731, %v2730
  %v2745 = vpack.c.b16 %v2733, %v2732
  %v2746 = vpack.c.b16 %v2735, %v2734
  %v2747 = vpack.c.b16 %v2737, %v2736
  %v2748 = vpack.c.b16 %v2739, %v2738
  %v2749 = vpack.c.b16 %v2741, %v2740
  %2758 = vmatprep.subr.bf16.mxu0 0
  %2759 = vmatpush1.bf16.msra.mxu0 %v2742
  %2760 = vmatprep.subr.bf16.mxu0 0
  %2761 = vmatpush1.bf16.msra.mxu0 %v2743
  %2762 = vmatprep.subr.bf16.mxu0 0
  %2763 = vmatpush1.bf16.msra.mxu0 %v2744
  %2764 = vmatprep.subr.bf16.mxu0 0
  %2765 = vmatpush1.bf16.msra.mxu0 %v2745
  %2766 = vmatprep.subr.bf16.mxu0 0
  %2767 = vmatpush1.bf16.msra.mxu0 %v2746
  %2768 = vmatprep.subr.bf16.mxu0 0
  %2769 = vmatpush1.bf16.msra.mxu0 %v2747
  %2770 = vmatprep.subr.bf16.mxu0 0
  %2771 = vmatpush1.bf16.msra.mxu0 %v2748
  %2772 = vmatprep.subr.bf16.mxu0 0
  %2773 = vmatpush1.bf16.msra.mxu0 %v2749
  %2774 = vmatprep.subr.bf16.mxu0 0
  %2775 = vmatpush1.bf16.msra.mxu0 0
  %2776 = vmatprep.subr.bf16.mxu0 0
  %2777 = vmatpush1.bf16.msra.mxu0 0
  %2778 = vmatprep.subr.bf16.mxu0 0
  %2779 = vmatpush1.bf16.msra.mxu0 0
  %2780 = vmatprep.subr.bf16.mxu0 0
  %2781 = vmatpush1.bf16.msra.mxu0 0
  %2782 = vmatprep.subr.bf16.mxu0 0
  %2783 = vmatpush1.bf16.msra.mxu0 0
  %2784 = vmatprep.subr.bf16.mxu0 0
  %2785 = vmatpush1.bf16.msra.mxu0 0
  %2786 = vmatprep.subr.bf16.mxu0 0
  %2787 = vmatpush1.bf16.msra.mxu0 0
  %2788 = vmatprep.subr.bf16.mxu0 0
  %2789 = vmatpush1.bf16.msra.mxu0 0
  %2790 = vmatprep.mubr.bf16.mxu0 0
  %2791 = vmatmul.mubr.bf16.gmra.mrb[0].mxu0 %v2671
  %v2792 = vpop.f32.mrb[0].mxu0
  %v2793 = vadd.f32 %v2708, %v2792
  %v2794 = vpop.f32.mrb[0].mxu0
  %v2795 = vpop.f32.mrb[0].mxu0
  %v2796 = vadd.f32 %v2708, %v2795
  %v2797 = vpop.f32.mrb[0].mxu0
  %2798 = vmatprep.mubr.bf16.mxu0 0
  %2799 = vmatmul.mubr.bf16.gmra.mrb[0].mxu0 %v2672
  %v2800 = vpop.f32.mrb[0].mxu0
  %v2801 = vadd.f32 %v2708, %v2800
  %v2802 = vpop.f32.mrb[0].mxu0
  %v2803 = vpop.f32.mrb[0].mxu0
  %v2804 = vadd.f32 %v2708, %v2803
  %v2805 = vpop.f32.mrb[0].mxu0
  %2806 = vmatprep.mubr.bf16.mxu0 0
  %2807 = vmatmul.mubr.bf16.gmra.mrb[0].mxu0 %v2673
  %v2808 = vpop.f32.mrb[0].mxu0
  %v2809 = vadd.f32 %v2708, %v2808
  %v2810 = vpop.f32.mrb[0].mxu0
  %v2811 = vpop.f32.mrb[0].mxu0
  %v2812 = vadd.f32 %v2708, %v2811
  %v2813 = vpop.f32.mrb[0].mxu0
  %2814 = vmatprep.mubr.bf16.mxu0 0
  %2815 = vmatmul.mubr.bf16.gmra.mrb[0].mxu0 %v2674
  %v2816 = vpop.f32.mrb[0].mxu0
  %v2817 = vadd.f32 %v2708, %v2816
  %v2818 = vpop.f32.mrb[0].mxu0
  %v2819 = vpop.f32.mrb[0].mxu0
  %v2820 = vadd.f32 %v2708, %v2819
  %v2821 = vpop.f32.mrb[0].mxu0
  %2822 = vmatprep.mubr.bf16.mxu0 0
  %2823 = vmatmul.mubr.bf16.gmra.mrb[0].mxu0 %v2675
  %v2824 = vpop.f32.mrb[0].mxu0
  %v2825 = vadd.f32 %v2708, %v2824
  %v2826 = vpop.f32.mrb[0].mxu0
  %v2827 = vpop.f32.mrb[0].mxu0
  %v2828 = vadd.f32 %v2708, %v2827
  %v2829 = vpop.f32.mrb[0].mxu0
  %2830 = vmatprep.mubr.bf16.mxu0 0
  %2831 = vmatmul.mubr.bf16.gmra.mrb[0].mxu0 %v2676
  %v2832 = vpop.f32.mrb[0].mxu0
  %v2833 = vadd.f32 %v2708, %v2832
  %v2834 = vpop.f32.mrb[0].mxu0
  %v2835 = vpop.f32.mrb[0].mxu0
  %v2836 = vadd.f32 %v2708, %v2835
  %v2837 = vpop.f32.mrb[0].mxu0
  %2838 = vmatprep.mubr.bf16.mxu0 0
  %2839 = vmatmul.mubr.bf16.gmra.mrb[0].mxu0 %v2677
  %v2840 = vpop.f32.mrb[0].mxu0
  %v2841 = vadd.f32 %v2708, %v2840
  %v2842 = vpop.f32.mrb[0].mxu0
  %v2843 = vpop.f32.mrb[0].mxu0
  %v2844 = vadd.f32 %v2708, %v2843
  %v2845 = vpop.f32.mrb[0].mxu0
  %2846 = vmatprep.mubr.bf16.mxu0 0
  %2847 = vmatmul.mubr.bf16.gmra.mrb[0].mxu0 %v2678
  %v2848 = vpop.f32.mrb[0].mxu0
  %v2849 = vadd.f32 %v2708, %v2848
  %v2850 = vpop.f32.mrb[0].mxu0
  %v2851 = vpop.f32.mrb[0].mxu0
  %v2852 = vadd.f32 %v2708, %v2851
  %v2853 = vpop.f32.mrb[0].mxu0
  %2854 = vmatprep.mubr.bf16.mxu0 0
  %2855 = vmatmul.mubr.bf16.gmra.mrb[0].mxu0 %v2679
  %v2856 = vpop.f32.mrb[0].mxu0
  %v2857 = vadd.f32 %v2708, %v2856
  %v2858 = vpop.f32.mrb[0].mxu0
  %v2859 = vpop.f32.mrb[0].mxu0
  %v2860 = vadd.f32 %v2708, %v2859
  %v2861 = vpop.f32.mrb[0].mxu0
  %2862 = vmatprep.mubr.bf16.mxu0 0
  %2863 = vmatmul.mubr.bf16.gmra.mrb[0].mxu0 %v2680
  %v2864 = vpop.f32.mrb[0].mxu0
  %v2865 = vadd.f32 %v2708, %v2864
  %v2866 = vpop.f32.mrb[0].mxu0
  %v2867 = vpop.f32.mrb[0].mxu0
  %v2868 = vadd.f32 %v2708, %v2867
  %v2869 = vpop.f32.mrb[0].mxu0
  %2870 = vmatprep.mubr.bf16.mxu0 0
  %2871 = vmatmul.mubr.bf16.gmra.mrb[0].mxu0 %v2681
  %v2872 = vpop.f32.mrb[0].mxu0
  %v2873 = vadd.f32 %v2708, %v2872
  %v2874 = vpop.f32.mrb[0].mxu0
  %v2875 = vpop.f32.mrb[0].mxu0
  %v2876 = vadd.f32 %v2708, %v2875
  %v2877 = vpop.f32.mrb[0].mxu0
  %2878 = vmatprep.mubr.bf16.mxu0 0
  %2879 = vmatmul.mubr.bf16.gmra.mrb[0].mxu0 %v2682
  %v2880 = vpop.f32.mrb[0].mxu0
  %v2881 = vadd.f32 %v2708, %v2880
  %v2882 = vpop.f32.mrb[0].mxu0
  %v2883 = vpop.f32.mrb[0].mxu0
  %v2884 = vadd.f32 %v2708, %v2883
  %v2885 = vpop.f32.mrb[0].mxu0
  %2886 = vmatprep.mubr.bf16.mxu0 0
  %2887 = vmatmul.mubr.bf16.gmra.mrb[0].mxu0 %v2683
  %v2888 = vpop.f32.mrb[0].mxu0
  %v2889 = vadd.f32 %v2708, %v2888
  %v2890 = vpop.f32.mrb[0].mxu0
  %v2891 = vpop.f32.mrb[0].mxu0
  %v2892 = vadd.f32 %v2708, %v2891
  %v2893 = vpop.f32.mrb[0].mxu0
  %2894 = vmatprep.mubr.bf16.mxu0 0
  %2895 = vmatmul.mubr.bf16.gmra.mrb[0].mxu0 %v2684
  %v2896 = vpop.f32.mrb[0].mxu0
  %v2897 = vadd.f32 %v2708, %v2896
  %v2898 = vpop.f32.mrb[0].mxu0
  %v2899 = vpop.f32.mrb[0].mxu0
  %v2900 = vadd.f32 %v2708, %v2899
  %v2901 = vpop.f32.mrb[0].mxu0
  %2902 = vmatprep.mubr.bf16.mxu0 0
  %2903 = vmatmul.mubr.bf16.gmra.mrb[0].mxu0 %v2685
  %v2904 = vpop.f32.mrb[0].mxu0
  %v2905 = vadd.f32 %v2708, %v2904
  %v2906 = vpop.f32.mrb[0].mxu0
  %v2907 = vpop.f32.mrb[0].mxu0
  %v2908 = vadd.f32 %v2708, %v2907
  %v2909 = vpop.f32.mrb[0].mxu0
  %2910 = vmatprep.mubr.bf16.mxu0 0
  %2911 = vmatmul.mubr.bf16.gmra.mrb[0].mxu0 %v2686
  %v2912 = vpop.f32.mrb[0].mxu0
  %v2913 = vadd.f32 %v2708, %v2912
  %v2914 = vpop.f32.mrb[0].mxu0
  %v2915 = vpop.f32.mrb[0].mxu0
  %v2916 = vadd.f32 %v2708, %v2915
  %v2917 = vpop.f32.mrb[0].mxu0
  %2918 = vdwg.mxu0
  %2919 = vst [vmem:[%s8] sm:$0xff] %v2793
  %2920 = vst [vmem:[%s8 + $0x8] sm:$0xff] %v2796
  %2921 = vst [vmem:[%s8 + $0x10] sm:$0xff] %v2801
  %2922 = vst [vmem:[%s8 + $0x18] sm:$0xff] %v2804
  %2923 = vst [vmem:[%s8 + $0x20] sm:$0xff] %v2809
  %2924 = vst [vmem:[%s8 + $0x28] sm:$0xff] %v2812
  %2925 = vst [vmem:[%s8 + $0x30] sm:$0xff] %v2817
  %2926 = vst [vmem:[%s8 + $0x38] sm:$0xff] %v2820
  %2927 = vst [vmem:[%s8 + $0x40] sm:$0xff] %v2825
  %2928 = vst [vmem:[%s8 + $0x48] sm:$0xff] %v2828
  %2929 = vst [vmem:[%s8 + $0x50] sm:$0xff] %v2833
  %2930 = vst [vmem:[%s8 + $0x58] sm:$0xff] %v2836
  %2931 = vst [vmem:[%s8 + $0x60] sm:$0xff] %v2841
  %2932 = vst [vmem:[%s8 + $0x68] sm:$0xff] %v2844
  %2933 = vst [vmem:[%s8 + $0x70] sm:$0xff] %v2849
  %2934 = vst [vmem:[%s8 + $0x78] sm:$0xff] %v2852
  %2935 = vst [vmem:[%s8 + $0x80] sm:$0xff] %v2857
  %2936 = vst [vmem:[%s8 + $0x88] sm:$0xff] %v2860
  %2937 = vst [vmem:[%s8 + $0x90] sm:$0xff] %v2865
  %2938 = vst [vmem:[%s8 + $0x98] sm:$0xff] %v2868
  %2939 = vst [vmem:[%s8 + $0xa0] sm:$0xff] %v2873
  %2940 = vst [vmem:[%s8 + $0xa8] sm:$0xff] %v2876
  %2941 = vst [vmem:[%s8 + $0xb0] sm:$0xff] %v2881
  %2942 = vst [vmem:[%s8 + $0xb8] sm:$0xff] %v2884
  %2943 = vst [vmem:[%s8 + $0xc0] sm:$0xff] %v2889
  %2944 = vst [vmem:[%s8 + $0xc8] sm:$0xff] %v2892
  %2945 = vst [vmem:[%s8 + $0xd0] sm:$0xff] %v2897
  %2946 = vst [vmem:[%s8 + $0xd8] sm:$0xff] %v2900
  %2947 = vst [vmem:[%s8 + $0xe0] sm:$0xff] %v2905
  %2948 = vst [vmem:[%s8 + $0xe8] sm:$0xff] %v2908
  %2949 = vst [vmem:[%s8 + $0xf0] sm:$0xff] %v2913
  %2950 = vst [vmem:[%s8 + $0xf8] sm:$0xff] %v2916
  %2951 = vst [vmem:[%s9] sm:$0xff] %v2662
  %2952 = vst [vmem:[%s9 + $0x8] sm:$0xff] %v2663
  %2953 = vst [vmem:[%s9 + $0x10] sm:$0xff] %v2664
  %2954 = vst [vmem:[%s9 + $0x18] sm:$0xff] %v2665
  %2955 = vst [vmem:[%s10] sm:$0xff] %v2654
  %2956 = vst [vmem:[%s10 + $0x8] sm:$0xff] %v2655
  %2957 = vst [vmem:[%s10 + $0x10] sm:$0xff] %v2656
  %2958 = vst [vmem:[%s10 + $0x18] sm:$0xff] %v2657
  // Predicated region
  $region34: #{simple_lstm_forward.1} parent=0 // pred_check
    _
  $region35: #{simple_lstm_forward.1} parent=0 // pred_check_branch
    %2960 = sbr.rel (0) target = $region37
  $region36: #{simple_lstm_forward.1} parent=0 // pred_region
    _
  $region37: #{simple_lstm_forward.1} parent=0 // pred_fallthru
    _
  // Predicated region
  $region38: #{simple_lstm_forward.1} parent=0 // pred_check
    _
  $region39: #{simple_lstm_forward.1} parent=0 // pred_check_branch
    %2962 = sbr.rel (0) target = $region41
  $region40: #{simple_lstm_forward.1} parent=0 // pred_region
    _
  $region41: #{simple_lstm_forward.1} parent=0 // pred_fallthru
    _
  // Predicated region
  $region42: #{simple_lstm_forward.1} parent=0 // pred_check
    _
  $region43: #{simple_lstm_forward.1} parent=0 // pred_check_branch
    %2964 = sbr.rel (0) target = $region45
  $region44: #{simple_lstm_forward.1} parent=0 // pred_region
    _
  $region45: #{simple_lstm_forward.1} parent=0 // pred_fallthru
    _
  // Predicated region
  $region46: #{simple_lstm_forward.1} parent=0 // pred_check
    _
  $region47: #{simple_lstm_forward.1} parent=0 // pred_check_branch
    %2966 = sbr.rel (0) target = $region49
  $region48: #{simple_lstm_forward.1} parent=0 // pred_region
    _
  $region49: #{simple_lstm_forward.1} parent=0 // pred_fallthru
    _
  // Predicated region
  $region50: #{simple_lstm_forward.1} parent=0 // pred_check
    _
  $region51: #{simple_lstm_forward.1} parent=0 // pred_check_branch
    %2968 = sbr.rel (0) target = $region53
  $region52: #{simple_lstm_forward.1} parent=0 // pred_region
    _
  $region53: #{simple_lstm_forward.1} parent=0 // pred_fallthru
    _
  // Predicated region
  $region54: #{simple_lstm_forward.1} parent=0 // pred_check
    _
  $region55: #{simple_lstm_forward.1} parent=0 // pred_check_branch
    %2970 = sbr.rel (0) target = $region57
  $region56: #{simple_lstm_forward.1} parent=0 // pred_region
    _
  $region57: #{simple_lstm_forward.1} parent=0 // pred_fallthru
    _

</llo_original>
